<compile_context>
chip_gen: v6e
topology: v6e:2x2x1
jax: 0.10.0
libtpu: 0.0.40
codegen_flags: <defaults>
</compile_context>

<pallas_src>
import math
import jax
import jax.numpy as jnp
from jax.experimental import pallas as pl
from jax.experimental.pallas import tpu as pltpu

D_MODEL = 32
N_HEADS = 4
D_FF = 64
N_LAYERS = 2
EPS = 1e-6            # annotated-transformer LayerNorm eps (added to std, not var)
NEG_INF = -1e9
VEC_W = max(D_MODEL, D_FF)                       # row width of the bias/LN slab
MEM_BLK = ((N_HEADS * D_MODEL + D_MODEL + 127) // 128) * 128   # 256: per-layer, lane-aligned


def _layer_norm(x, a, b):
    # Annotated-transformer LayerNorm: mean over last dim, *unbiased* std (ddof=1),
    # eps added to std (NOT torch.nn.LayerNorm semantics).
    # One-pass: mean and sum-of-squares are independent reduces.
    n = x.shape[-1]
    mean = jnp.sum(x, axis=-1, keepdims=True) * (1.0 / n)
    sumsq = jnp.sum(x * x, axis=-1, keepdims=True)
    var = jnp.maximum((sumsq - n * mean * mean) * (1.0 / (n - 1)), 0.0)
    inv = 1.0 / (jnp.sqrt(var) + EPS)            # exact: scales the residual stream
    return a * (x - mean) * inv + b


def srcatt_fused_kernel(x_ref, m_ref, mask_ref,
                        wq_ref, w1_ref, w2_ref, wmem_ref, vec_ref, fnorm_ref,
                        out_ref):
    B, T, D = x_ref.shape
    S = m_ref.shape[1]
    L = wq_ref.shape[0]
    H = N_HEADS
    dk = D // H
    dff = w1_ref.shape[2]
    mem_blk = wmem_ref.shape[1] // L

    # Flatten batch into rows for all per-token ops (free relayout: last dim kept).
    x = x_ref[...].astype(jnp.float32).reshape(B * T, D)
    mem = m_ref[...].astype(jnp.float32).reshape(B * S, D)

    # Hoisted, layer-fused memory-side projections: per layer [Wvo_l | Wk_l | pad],
    # each slice starting on a 128-lane boundary.
    memproj = jnp.dot(mem, wmem_ref[...], preferred_element_type=jnp.float32)  # (B*S, L*256)

    # Additive mask bias, computed + broadcast ONCE for the fused all-head softmax.
    mask = mask_ref[...]                                               # (B, 1, S)
    bias = jnp.where(mask == 0.0, NEG_INF, 0.0).astype(jnp.float32)    # (B, 1, S)
    bias_full = jnp.broadcast_to(bias, (B, H * T, S))                  # (B, H*T, S)

    for l in range(L):
        wq = wq_ref[l]                          # (D, D), 1/sqrt(dk) pre-folded
        w1 = w1_ref[l]                          # (D, dff)
        w2 = w2_ref[l]                          # (dff, D)
        vec = vec_ref[l]                        # (16, VEC_W) bias / LN slab
        ln0a, ln0b = vec[0:1, :D], vec[1:2, :D]
        bq, bk, bo = vec[2:3, :D], vec[3:4, :D], vec[4:5, :D]   # bo has bv@Wo folded in
        ln1a, ln1b = vec[5:6, :D], vec[6:7, :D]
        b2, b1 = vec[7:8, :D], vec[8:9, :dff]

        vo = memproj[:, l * mem_blk:l * mem_blk + H * D]                 # (B*S, H*D)
        k = memproj[:, l * mem_blk + H * D:l * mem_blk + H * D + D] + bk  # (B*S, D)

        # ---- sublayer 0: x + src_attn(norm0(x), mem, mem, src_mask) ----
        xn = _layer_norm(x, ln0a, ln0b)
        q = jnp.dot(xn, wq, preferred_element_type=jnp.float32) + bq     # (B*T, D)

        # Per-head scores, then ONE fused softmax over all heads (sublane-stacked).
        s_heads = []
        for h in range(H):
            sl = slice(h * dk, (h + 1) * dk)
            qh = q[:, sl].reshape(B, T, dk)
            kh = k[:, sl].reshape(B, S, dk)
            s_heads.append(jnp.einsum('bqd,bkd->bqk', qh, kh,
                                      preferred_element_type=jnp.float32))
        s_all = jnp.concatenate(s_heads, axis=1) + bias_full             # (B, H*T, S)
        s_all = s_all - jnp.max(s_all, axis=-1, keepdims=True)
        e = jnp.exp(s_all)
        p_all = e * pl.reciprocal(jnp.sum(e, axis=-1, keepdims=True), approx=True)

        # attn = sum_h p_h @ (mem Wv_h Wo_h)   (Wo already folded into vo)
        attn = None
        for h in range(H):
            ph = p_all[:, h * T:(h + 1) * T, :]                          # (B, T, S)
            voh = vo[:, h * D:(h + 1) * D].reshape(B, S, D)              # (B, S, D)
            d = jnp.einsum('bqk,bkd->bqd', ph, voh,
                           preferred_element_type=jnp.float32).reshape(B * T, D)
            attn = d if attn is None else attn + d
        x = x + attn + bo            # dropout = identity at eval

        # ---- sublayer 1: x + FFN(norm1(x)) ----
        xn = _layer_norm(x, ln1a, ln1b)
        h1 = jnp.maximum(
            jnp.dot(xn, w1, preferred_element_type=jnp.float32) + b1, 0.0)
        x = x + jnp.dot(h1, w2, preferred_element_type=jnp.float32) + b2

    # Final LayerNorm fused into the same kernel.
    y = _layer_norm(x, fnorm_ref[0:1, :], fnorm_ref[1:2, :])
    out_ref[...] = y.reshape(B, T, D).astype(out_ref.dtype)


def pack_srcatt_params(layers_params, final_norm_params):
    """Offline parameter transform:
       * fold 1/sqrt(d_k) into Wq/bq,
       * fold Wv@Wo per head into a lane-dense (D, H*D) Wvo slab, bv@Wo into bo,
       * fuse all memory-side weights across layers into one (D, L*256) slab
         with 128-lane-aligned per-layer blocks [Wvo_l | Wk_l | pad]."""
    d_k = D_MODEL // N_HEADS
    scale = 1.0 / math.sqrt(d_k)

    def row(v, width=VEC_W):
        v = jnp.asarray(v, jnp.float32).reshape(1, -1)
        return jnp.pad(v, ((0, 0), (0, width - v.shape[1])))

    wq_l, w1_l, w2_l, wmem_l, vec_l = [], [], [], [], []
    for (wq, bq, wk, bk, wv, bv, wo, bo,
         ln0a, ln0b, ln1a, ln1b, w1, b1, w2, b2) in layers_params:
        wq = jnp.asarray(wq, jnp.float32); wk = jnp.asarray(wk, jnp.float32)
        wv = jnp.asarray(wv, jnp.float32); wo = jnp.asarray(wo, jnp.float32)
        bq = jnp.asarray(bq, jnp.float32); bk = jnp.asarray(bk, jnp.float32)
        bv = jnp.asarray(bv, jnp.float32); bo = jnp.asarray(bo, jnp.float32)

        wvo = jnp.concatenate(
            [wv[:, h * d_k:(h + 1) * d_k] @ wo[h * d_k:(h + 1) * d_k, :]
             for h in range(N_HEADS)], axis=1)                      # (D, H*D)
        bo_new = bo + bv @ wo                                       # bv@Wo folded
        pad = jnp.zeros((D_MODEL, MEM_BLK - wvo.shape[1] - D_MODEL), jnp.float32)
        wmem_l.append(jnp.concatenate([wvo, wk, pad], axis=1))      # (D, 256)

        wq_l.append(wq * scale)
        w1_l.append(jnp.asarray(w1, jnp.float32))
        w2_l.append(jnp.asarray(w2, jnp.float32))

        rows = [row(ln0a), row(ln0b), row(bq * scale), row(bk), row(bo_new),
                row(ln1a), row(ln1b), row(b2), row(b1)]
        rows += [jnp.zeros((1, VEC_W), jnp.float32)] * (16 - len(rows))
        vec_l.append(jnp.concatenate(rows, axis=0))                 # (16, VEC_W)

    a, b = final_norm_params
    fnorm = jnp.concatenate([jnp.asarray(a, jnp.float32).reshape(1, -1),
                             jnp.asarray(b, jnp.float32).reshape(1, -1)], axis=0)
    return (jnp.stack(wq_l), jnp.stack(w1_l), jnp.stack(w2_l),
            jnp.concatenate(wmem_l, axis=1), jnp.stack(vec_l), fnorm)


def _rep_spec(shape):
    nd = len(shape)
    return pl.BlockSpec(shape, lambda b, _nd=nd: (0,) * _nd)


def _batch_spec(shape):
    nd = len(shape)
    return pl.BlockSpec((1,) + tuple(shape[1:]),
                        lambda b, _nd=nd: (b,) + (0,) * (_nd - 1))


def _num_tensorcores_per_chip():
    # Only v7x exposes 2 TensorCores per chip device; fall back to 1 on any doubt.
    try:
        dev = jax.devices()[0]
        if dev.platform != "tpu":
            return 1
        kind = dev.device_kind.lower()
        return 2 if ("v7" in kind or "7x" in kind) else 1
    except Exception:
        return 1


def srcatt_forward(x, memory, src_mask, tgt_mask, packed_params, *, split_batch=None):
    """SrcAtt forward: N cross-attention layers + final LayerNorm, one fused kernel."""
    del tgt_mask   # SrcAtt layers only perform source (cross) attention.
    B, T, D = x.shape
    S = memory.shape[1]
    wq_all, w1_all, w2_all, w_mem, vecs, fnorm = packed_params
    weights = (wq_all, w1_all, w2_all, w_mem, vecs, fnorm)

    if split_batch is None:
        split_batch = (_num_tensorcores_per_chip() >= 2) and (B > 1)

    if split_batch:
        grid = (B,)
        data_in = [_batch_spec(x.shape), _batch_spec(memory.shape),
                   _batch_spec(src_mask.shape)]
        out_spec = _batch_spec((B, T, D))
        semantics = ("parallel",)
    else:
        grid = (1,)
        data_in = [_rep_spec(x.shape), _rep_spec(memory.shape),
                   _rep_spec(src_mask.shape)]
        out_spec = _rep_spec((B, T, D))
        semantics = ("arbitrary",)

    in_specs = data_in + [_rep_spec(w.shape) for w in weights]
    return pl.pallas_call(
        srcatt_fused_kernel,
        out_shape=jax.ShapeDtypeStruct((B, T, D), x.dtype),
        grid=grid,
        in_specs=in_specs,
        out_specs=out_spec,
        compiler_params=pltpu.CompilerParams(dimension_semantics=semantics),
    )(x, memory, src_mask, *weights)


def srcatt_reference(x, memory, src_mask, layers_params, final_norm_params):
    """Plain-JAX reference (annotated-transformer semantics) for validation."""
    d_k = D_MODEL // N_HEADS

    def ln(v, a, b):
        m = jnp.mean(v, -1, keepdims=True)
        s = jnp.sqrt(jnp.sum((v - m) ** 2, -1, keepdims=True) / (v.shape[-1] - 1))
        return a * (v - m) / (s + EPS) + b

    def mha(q_in, kv_in, mask, wq, bq, wk, bk, wv, bv, wo, bo):
        B, T, D = q_in.shape
        S = kv_in.shape[1]
        q = (q_in @ wq + bq).reshape(B, T, N_HEADS, d_k).transpose(0, 2, 1, 3)
        k = (kv_in @ wk + bk).reshape(B, S, N_HEADS, d_k).transpose(0, 2, 1, 3)
        v = (kv_in @ wv + bv).reshape(B, S, N_HEADS, d_k).transpose(0, 2, 1, 3)
        s = jnp.einsum('bhqd,bhkd->bhqk', q, k) / math.sqrt(d_k)
        s = jnp.where(mask[:, None, :, :] == 0, NEG_INF, s)
        p = jax.nn.softmax(s, axis=-1)
        ctx = jnp.einsum('bhqk,bhkd->bhqd', p, v).transpose(0, 2, 1, 3).reshape(B, T, D)
        return ctx @ wo + bo

    out = x
    for (wq, bq, wk, bk, wv, bv, wo, bo,
         ln0a, ln0b, ln1a, ln1b, w1, b1, w2, b2) in layers_params:
        out = out + mha(ln(out, ln0a, ln0b), memory, src_mask,
                        wq, bq, wk, bk, wv, bv, wo, bo)
        out = out + jnp.maximum(ln(out, ln1a, ln1b) @ w1 + b1, 0.0) @ w2 + b2
    a, b = final_norm_params
    return ln(out, a, b)


if __name__ == "__main__":
    B, T, S, D, DFF, N = 2, 8, 16, D_MODEL, D_FF, N_LAYERS

    key = jax.random.PRNGKey(0)
    k_x, k_mem = jax.random.split(key, 2)
    x = jax.random.normal(k_x, (B, T, D), jnp.float32)
    memory = jax.random.normal(k_mem, (B, S, D), jnp.float32)

    src_mask = jnp.ones((B, 1, S), jnp.float32)
    src_mask = src_mask.at[1, 0, S // 2:].set(0.0)            # mask half of batch-1 memory
    tgt_mask = jnp.tril(jnp.ones((T, T), jnp.float32))[None].repeat(B, 0)  # unused

    # Deterministic parameter init (synthetic weights; shapes match the PyTorch module,
    # stored (in, out) so x @ W applies directly).
    pkey = jax.random.PRNGKey(42)
    layers_params = []
    for _ in range(N):
        pkey, *sub = jax.random.split(pkey, 7)
        w = lambda k, shape: 0.05 * jax.random.normal(k, shape, jnp.float32)
        layers_params.append((
            w(sub[0], (D, D)), jnp.zeros((D,), jnp.float32),    # Wq, bq
            w(sub[1], (D, D)), jnp.zeros((D,), jnp.float32),    # Wk, bk
            w(sub[2], (D, D)), jnp.zeros((D,), jnp.float32),    # Wv, bv
            w(sub[3], (D, D)), jnp.zeros((D,), jnp.float32),    # Wo, bo
            jnp.ones((D,), jnp.float32), jnp.zeros((D,), jnp.float32),   # ln0 a,b
            jnp.ones((D,), jnp.float32), jnp.zeros((D,), jnp.float32),   # ln1 a,b
            w(sub[4], (D, DFF)), jnp.zeros((DFF,), jnp.float32),  # FFN W1, b1
            w(sub[5], (DFF, D)), jnp.zeros((D,), jnp.float32),    # FFN W2, b2
        ))
    final_norm_params = (jnp.ones((D,), jnp.float32), jnp.zeros((D,), jnp.float32))

    packed = pack_srcatt_params(layers_params, final_norm_params)
    out = srcatt_forward(x, memory, src_mask, tgt_mask, packed)
    out = jax.block_until_ready(out)

    ref = srcatt_reference(x, memory, src_mask, layers_params, final_norm_params)
    assert out.shape == (B, T, D) and bool(jnp.all(jnp.isfinite(out)))
    assert bool(jnp.allclose(out, ref, rtol=5e-2, atol=5e-2))
    print("KERNEL_OK")
</pallas_src>

<mosaic_0001>
module attributes {stable_mosaic.version = 11 : i64} {
  func.func @srcatt_fused_kernel(%arg0: i32, %arg1: memref<2x8x32xf32, #tpu.memory_space<vmem>>, %arg2: memref<2x16x32xf32, #tpu.memory_space<vmem>>, %arg3: memref<2x1x16xf32, #tpu.memory_space<vmem>>, %arg4: memref<2x32x32xf32, #tpu.memory_space<vmem>>, %arg5: memref<2x32x64xf32, #tpu.memory_space<vmem>>, %arg6: memref<2x64x32xf32, #tpu.memory_space<vmem>>, %arg7: memref<32x512xf32, #tpu.memory_space<vmem>>, %arg8: memref<2x16x64xf32, #tpu.memory_space<vmem>>, %arg9: memref<2x32xf32, #tpu.memory_space<vmem>>, %arg10: memref<2x8x32xf32, #tpu.memory_space<vmem>>) attributes {dimension_semantics = [#tpu.dimension_semantics<arbitrary>], iteration_bounds = array<i64: 1>, scalar_prefetch = 0 : i64, scratch_operands = 0 : i64, tpu.core_type = #tpu.core_type<tc>, window_params = [{pipeline_mode = #tpu.pipeline_mode<synchronous>, transform_indices = @transform_0, window_bounds = array<i64: 2, 8, 32>}, {pipeline_mode = #tpu.pipeline_mode<synchronous>, transform_indices = @transform_1, window_bounds = array<i64: 2, 16, 32>}, {pipeline_mode = #tpu.pipeline_mode<synchronous>, transform_indices = @transform_2, window_bounds = array<i64: 2, 1, 16>}, {pipeline_mode = #tpu.pipeline_mode<synchronous>, transform_indices = @transform_3, window_bounds = array<i64: 2, 32, 32>}, {pipeline_mode = #tpu.pipeline_mode<synchronous>, transform_indices = @transform_4, window_bounds = array<i64: 2, 32, 64>}, {pipeline_mode = #tpu.pipeline_mode<synchronous>, transform_indices = @transform_5, window_bounds = array<i64: 2, 64, 32>}, {pipeline_mode = #tpu.pipeline_mode<synchronous>, transform_indices = @transform_6, window_bounds = array<i64: 32, 512>}, {pipeline_mode = #tpu.pipeline_mode<synchronous>, transform_indices = @transform_7, window_bounds = array<i64: 2, 16, 64>}, {pipeline_mode = #tpu.pipeline_mode<synchronous>, transform_indices = @transform_8, window_bounds = array<i64: 2, 32>}, {pipeline_mode = #tpu.pipeline_mode<synchronous>, transform_indices = @transform_9, window_bounds = array<i64: 2, 8, 32>}]} {
    %c0 = arith.constant 0 : index
    %c0_0 = arith.constant 0 : index
    %c0_1 = arith.constant 0 : index
    %0 = vector.load %arg1[%c0, %c0_0, %c0_1] : memref<2x8x32xf32, #tpu.memory_space<vmem>>, vector<2x8x32xf32>
    %1 = vector.shape_cast %0 : vector<2x8x32xf32> to vector<16x32xf32>
    %c0_2 = arith.constant 0 : index
    %c0_3 = arith.constant 0 : index
    %c0_4 = arith.constant 0 : index
    %2 = vector.load %arg2[%c0_2, %c0_3, %c0_4] : memref<2x16x32xf32, #tpu.memory_space<vmem>>, vector<2x16x32xf32>
    %3 = vector.shape_cast %2 : vector<2x16x32xf32> to vector<32x32xf32>
    %c0_5 = arith.constant 0 : index
    %c0_6 = arith.constant 0 : index
    %4 = vector.load %arg7[%c0_5, %c0_6] : memref<32x512xf32, #tpu.memory_space<vmem>>, vector<32x512xf32>
    %cst = arith.constant dense<0.000000e+00> : vector<32x512xf32>
    %5 = tpu.matmul %3, %4, %cst {dimension_numbers = #tpu.dot_dimension_numbers<[1], [0], [0], [1], [0, 0, 1, 1], [], []>} : vector<32x32xf32>, vector<32x512xf32>, vector<32x512xf32> -> vector<32x512xf32>
    %c0_7 = arith.constant 0 : index
    %c0_8 = arith.constant 0 : index
    %c0_9 = arith.constant 0 : index
    %6 = vector.load %arg3[%c0_7, %c0_8, %c0_9] : memref<2x1x16xf32, #tpu.memory_space<vmem>>, vector<2x1x16xf32>
    %cst_10 = arith.constant 0.000000e+00 : f32
    %7 = vector.broadcast %cst_10 : f32 to vector<2x1x16xf32>
    %8 = arith.cmpf oeq, %6, %7 : vector<2x1x16xf32>
    %cst_11 = arith.constant -1.000000e+09 : f32
    %cst_12 = arith.constant 0.000000e+00 : f32
    %9 = vector.broadcast %cst_11 : f32 to vector<2x1x16xf32>
    %10 = vector.broadcast %cst_12 : f32 to vector<2x1x16xf32>
    %11 = arith.select %8, %9, %10 : vector<2x1x16xi1>, vector<2x1x16xf32>
    %12 = vector.shape_cast %11 : vector<2x1x16xf32> to vector<2x1x16xf32>
    %13 = vector.broadcast %12 : vector<2x1x16xf32> to vector<2x32x16xf32>
    %c0_13 = arith.constant 0 : index
    %c0_14 = arith.constant 0 : index
    %c0_15 = arith.constant 0 : index
    %14 = vector.load %arg4[%c0_13, %c0_14, %c0_15] : memref<2x32x32xf32, #tpu.memory_space<vmem>>, vector<1x32x32xf32>
    %15 = vector.shape_cast %14 : vector<1x32x32xf32> to vector<32x32xf32>
    %c0_16 = arith.constant 0 : index
    %c0_17 = arith.constant 0 : index
    %c0_18 = arith.constant 0 : index
    %16 = vector.load %arg5[%c0_16, %c0_17, %c0_18] : memref<2x32x64xf32, #tpu.memory_space<vmem>>, vector<1x32x64xf32>
    %17 = vector.shape_cast %16 : vector<1x32x64xf32> to vector<32x64xf32>
    %c0_19 = arith.constant 0 : index
    %c0_20 = arith.constant 0 : index
    %c0_21 = arith.constant 0 : index
    %18 = vector.load %arg6[%c0_19, %c0_20, %c0_21] : memref<2x64x32xf32, #tpu.memory_space<vmem>>, vector<1x64x32xf32>
    %19 = vector.shape_cast %18 : vector<1x64x32xf32> to vector<64x32xf32>
    %c0_22 = arith.constant 0 : index
    %c0_23 = arith.constant 0 : index
    %c0_24 = arith.constant 0 : index
    %20 = vector.load %arg8[%c0_22, %c0_23, %c0_24] : memref<2x16x64xf32, #tpu.memory_space<vmem>>, vector<1x16x64xf32>
    %21 = vector.shape_cast %20 : vector<1x16x64xf32> to vector<16x64xf32>
    %22 = vector.extract_strided_slice %21 {offsets = [0, 0], sizes = [1, 32], strides = [1, 1]} : vector<16x64xf32> to vector<1x32xf32>
    %23 = vector.extract_strided_slice %21 {offsets = [1, 0], sizes = [1, 32], strides = [1, 1]} : vector<16x64xf32> to vector<1x32xf32>
    %24 = vector.extract_strided_slice %21 {offsets = [2, 0], sizes = [1, 32], strides = [1, 1]} : vector<16x64xf32> to vector<1x32xf32>
    %25 = vector.extract_strided_slice %21 {offsets = [3, 0], sizes = [1, 32], strides = [1, 1]} : vector<16x64xf32> to vector<1x32xf32>
    %26 = vector.extract_strided_slice %21 {offsets = [4, 0], sizes = [1, 32], strides = [1, 1]} : vector<16x64xf32> to vector<1x32xf32>
    %27 = vector.extract_strided_slice %21 {offsets = [5, 0], sizes = [1, 32], strides = [1, 1]} : vector<16x64xf32> to vector<1x32xf32>
    %28 = vector.extract_strided_slice %21 {offsets = [6, 0], sizes = [1, 32], strides = [1, 1]} : vector<16x64xf32> to vector<1x32xf32>
    %29 = vector.extract_strided_slice %21 {offsets = [7, 0], sizes = [1, 32], strides = [1, 1]} : vector<16x64xf32> to vector<1x32xf32>
    %30 = vector.extract_strided_slice %21 {offsets = [8, 0], sizes = [1, 64], strides = [1, 1]} : vector<16x64xf32> to vector<1x64xf32>
    %31 = vector.extract_strided_slice %5 {offsets = [0, 0], sizes = [32, 128], strides = [1, 1]} : vector<32x512xf32> to vector<32x128xf32>
    %32 = vector.extract_strided_slice %5 {offsets = [0, 128], sizes = [32, 32], strides = [1, 1]} : vector<32x512xf32> to vector<32x32xf32>
    %33 = vector.broadcast %25 : vector<1x32xf32> to vector<32x32xf32>
    %34 = arith.addf %32, %33 : vector<32x32xf32>
    %cst_25 = arith.constant dense<0.000000e+00> : vector<16xf32>
    %35 = vector.multi_reduction <add>, %1, %cst_25 [1] : vector<16x32xf32> to vector<16xf32>
    %36 = vector.shape_cast %35 : vector<16xf32> to vector<16x1xf32>
    %cst_26 = arith.constant 3.125000e-02 : f32
    %37 = vector.broadcast %cst_26 : f32 to vector<16x1xf32>
    %38 = arith.mulf %36, %37 : vector<16x1xf32>
    %39 = arith.mulf %1, %1 : vector<16x32xf32>
    %cst_27 = arith.constant dense<0.000000e+00> : vector<16xf32>
    %40 = vector.multi_reduction <add>, %39, %cst_27 [1] : vector<16x32xf32> to vector<16xf32>
    %41 = vector.shape_cast %40 : vector<16xf32> to vector<16x1xf32>
    %cst_28 = arith.constant 3.200000e+01 : f32
    %42 = vector.broadcast %cst_28 : f32 to vector<16x1xf32>
    %43 = arith.mulf %42, %38 : vector<16x1xf32>
    %44 = arith.mulf %43, %38 : vector<16x1xf32>
    %45 = arith.subf %41, %44 : vector<16x1xf32>
    %cst_29 = arith.constant 0.0322580636 : f32
    %46 = vector.broadcast %cst_29 : f32 to vector<16x1xf32>
    %47 = arith.mulf %45, %46 : vector<16x1xf32>
    %cst_30 = arith.constant 0.000000e+00 : f32
    %48 = vector.broadcast %cst_30 : f32 to vector<16x1xf32>
    %49 = arith.maximumf %47, %48 : vector<16x1xf32>
    %50 = math.sqrt %49 : vector<16x1xf32>
    %cst_31 = arith.constant 9.99999997E-7 : f32
    %51 = vector.broadcast %cst_31 : f32 to vector<16x1xf32>
    %52 = arith.addf %50, %51 : vector<16x1xf32>
    %cst_32 = arith.constant 1.000000e+00 : f32
    %53 = vector.broadcast %cst_32 : f32 to vector<16x1xf32>
    %54 = arith.divf %53, %52 : vector<16x1xf32>
    %55 = vector.broadcast %38 : vector<16x1xf32> to vector<16x32xf32>
    %56 = arith.subf %1, %55 : vector<16x32xf32>
    %57 = vector.broadcast %22 : vector<1x32xf32> to vector<16x32xf32>
    %58 = arith.mulf %57, %56 : vector<16x32xf32>
    %59 = vector.broadcast %54 : vector<16x1xf32> to vector<16x32xf32>
    %60 = arith.mulf %58, %59 : vector<16x32xf32>
    %61 = vector.broadcast %23 : vector<1x32xf32> to vector<16x32xf32>
    %62 = arith.addf %60, %61 : vector<16x32xf32>
    %cst_33 = arith.constant dense<0.000000e+00> : vector<16x32xf32>
    %63 = tpu.matmul %62, %15, %cst_33 {dimension_numbers = #tpu.dot_dimension_numbers<[1], [0], [0], [1], [0, 0, 1, 1], [], []>} : vector<16x32xf32>, vector<32x32xf32>, vector<16x32xf32> -> vector<16x32xf32>
    %64 = vector.broadcast %24 : vector<1x32xf32> to vector<16x32xf32>
    %65 = arith.addf %63, %64 : vector<16x32xf32>
    %66 = vector.extract_strided_slice %65 {offsets = [0, 0], sizes = [16, 8], strides = [1, 1]} : vector<16x32xf32> to vector<16x8xf32>
    %67 = vector.shape_cast %66 : vector<16x8xf32> to vector<2x8x8xf32>
    %68 = vector.extract_strided_slice %34 {offsets = [0, 0], sizes = [32, 8], strides = [1, 1]} : vector<32x32xf32> to vector<32x8xf32>
    %69 = vector.shape_cast %68 : vector<32x8xf32> to vector<2x16x8xf32>
    "tpu.trace_start"() <{level = 10 : i32, message = "bqd,bkd->bqk"}> : () -> ()
    %cst_34 = arith.constant dense<0.000000e+00> : vector<2x8x16xf32>
    %70 = tpu.matmul %67, %69, %cst_34 {dimension_numbers = #tpu.dot_dimension_numbers<[2], [2], [1], [1], [0, 0, 0, 1, 1, 1], [0], [0]>} : vector<2x8x8xf32>, vector<2x16x8xf32>, vector<2x8x16xf32> -> vector<2x8x16xf32>
    "tpu.trace_stop"() : () -> ()
    %71 = vector.extract_strided_slice %65 {offsets = [0, 8], sizes = [16, 8], strides = [1, 1]} : vector<16x32xf32> to vector<16x8xf32>
    %72 = vector.shape_cast %71 : vector<16x8xf32> to vector<2x8x8xf32>
    %73 = vector.extract_strided_slice %34 {offsets = [0, 8], sizes = [32, 8], strides = [1, 1]} : vector<32x32xf32> to vector<32x8xf32>
    %74 = vector.shape_cast %73 : vector<32x8xf32> to vector<2x16x8xf32>
    "tpu.trace_start"() <{level = 10 : i32, message = "bqd,bkd->bqk"}> : () -> ()
    %cst_35 = arith.constant dense<0.000000e+00> : vector<2x8x16xf32>
    %75 = tpu.matmul %72, %74, %cst_35 {dimension_numbers = #tpu.dot_dimension_numbers<[2], [2], [1], [1], [0, 0, 0, 1, 1, 1], [0], [0]>} : vector<2x8x8xf32>, vector<2x16x8xf32>, vector<2x8x16xf32> -> vector<2x8x16xf32>
    "tpu.trace_stop"() : () -> ()
    %76 = vector.extract_strided_slice %65 {offsets = [0, 16], sizes = [16, 8], strides = [1, 1]} : vector<16x32xf32> to vector<16x8xf32>
    %77 = vector.shape_cast %76 : vector<16x8xf32> to vector<2x8x8xf32>
    %78 = vector.extract_strided_slice %34 {offsets = [0, 16], sizes = [32, 8], strides = [1, 1]} : vector<32x32xf32> to vector<32x8xf32>
    %79 = vector.shape_cast %78 : vector<32x8xf32> to vector<2x16x8xf32>
    "tpu.trace_start"() <{level = 10 : i32, message = "bqd,bkd->bqk"}> : () -> ()
    %cst_36 = arith.constant dense<0.000000e+00> : vector<2x8x16xf32>
    %80 = tpu.matmul %77, %79, %cst_36 {dimension_numbers = #tpu.dot_dimension_numbers<[2], [2], [1], [1], [0, 0, 0, 1, 1, 1], [0], [0]>} : vector<2x8x8xf32>, vector<2x16x8xf32>, vector<2x8x16xf32> -> vector<2x8x16xf32>
    "tpu.trace_stop"() : () -> ()
    %81 = vector.extract_strided_slice %65 {offsets = [0, 24], sizes = [16, 8], strides = [1, 1]} : vector<16x32xf32> to vector<16x8xf32>
    %82 = vector.shape_cast %81 : vector<16x8xf32> to vector<2x8x8xf32>
    %83 = vector.extract_strided_slice %34 {offsets = [0, 24], sizes = [32, 8], strides = [1, 1]} : vector<32x32xf32> to vector<32x8xf32>
    %84 = vector.shape_cast %83 : vector<32x8xf32> to vector<2x16x8xf32>
    "tpu.trace_start"() <{level = 10 : i32, message = "bqd,bkd->bqk"}> : () -> ()
    %cst_37 = arith.constant dense<0.000000e+00> : vector<2x8x16xf32>
    %85 = tpu.matmul %82, %84, %cst_37 {dimension_numbers = #tpu.dot_dimension_numbers<[2], [2], [1], [1], [0, 0, 0, 1, 1, 1], [0], [0]>} : vector<2x8x8xf32>, vector<2x16x8xf32>, vector<2x8x16xf32> -> vector<2x8x16xf32>
    "tpu.trace_stop"() : () -> ()
    %86 = tpu.concatenate %70, %75, %80, %85 in 1 : vector<2x8x16xf32>, vector<2x8x16xf32>, vector<2x8x16xf32>, vector<2x8x16xf32> -> vector<2x32x16xf32>
    %87 = arith.addf %86, %13 : vector<2x32x16xf32>
    %cst_38 = arith.constant dense<0xFF800000> : vector<2x32xf32>
    %88 = vector.multi_reduction <maximumf>, %87, %cst_38 [2] : vector<2x32x16xf32> to vector<2x32xf32>
    %89 = vector.shape_cast %88 : vector<2x32xf32> to vector<2x32x1xf32>
    %90 = vector.broadcast %89 : vector<2x32x1xf32> to vector<2x32x16xf32>
    %91 = arith.subf %87, %90 : vector<2x32x16xf32>
    %92 = math.exp %91 : vector<2x32x16xf32>
    %cst_39 = arith.constant dense<0.000000e+00> : vector<2x32xf32>
    %93 = vector.multi_reduction <add>, %92, %cst_39 [2] : vector<2x32x16xf32> to vector<2x32xf32>
    %94 = vector.shape_cast %93 : vector<2x32xf32> to vector<2x32x1xf32>
    %95 = tpu.reciprocal %94 {approx = true} : vector<2x32x1xf32> -> vector<2x32x1xf32>
    %96 = vector.broadcast %95 : vector<2x32x1xf32> to vector<2x32x16xf32>
    %97 = arith.mulf %92, %96 : vector<2x32x16xf32>
    %98 = vector.extract_strided_slice %97 {offsets = [0, 0, 0], sizes = [2, 8, 16], strides = [1, 1, 1]} : vector<2x32x16xf32> to vector<2x8x16xf32>
    %99 = vector.extract_strided_slice %31 {offsets = [0, 0], sizes = [32, 32], strides = [1, 1]} : vector<32x128xf32> to vector<32x32xf32>
    %100 = vector.shape_cast %99 : vector<32x32xf32> to vector<2x16x32xf32>
    "tpu.trace_start"() <{level = 10 : i32, message = "bqk,bkd->bqd"}> : () -> ()
    %cst_40 = arith.constant dense<0.000000e+00> : vector<2x8x32xf32>
    %101 = tpu.matmul %98, %100, %cst_40 {dimension_numbers = #tpu.dot_dimension_numbers<[2], [1], [1], [2], [0, 0, 0, 1, 1, 2], [0], [0]>} : vector<2x8x16xf32>, vector<2x16x32xf32>, vector<2x8x32xf32> -> vector<2x8x32xf32>
    "tpu.trace_stop"() : () -> ()
    %102 = vector.shape_cast %101 : vector<2x8x32xf32> to vector<16x32xf32>
    %103 = vector.extract_strided_slice %97 {offsets = [0, 8, 0], sizes = [2, 8, 16], strides = [1, 1, 1]} : vector<2x32x16xf32> to vector<2x8x16xf32>
    %104 = vector.extract_strided_slice %31 {offsets = [0, 32], sizes = [32, 32], strides = [1, 1]} : vector<32x128xf32> to vector<32x32xf32>
    %105 = vector.shape_cast %104 : vector<32x32xf32> to vector<2x16x32xf32>
    "tpu.trace_start"() <{level = 10 : i32, message = "bqk,bkd->bqd"}> : () -> ()
    %cst_41 = arith.constant dense<0.000000e+00> : vector<2x8x32xf32>
    %106 = tpu.matmul %103, %105, %cst_41 {dimension_numbers = #tpu.dot_dimension_numbers<[2], [1], [1], [2], [0, 0, 0, 1, 1, 2], [0], [0]>} : vector<2x8x16xf32>, vector<2x16x32xf32>, vector<2x8x32xf32> -> vector<2x8x32xf32>
    "tpu.trace_stop"() : () -> ()
    %107 = vector.shape_cast %106 : vector<2x8x32xf32> to vector<16x32xf32>
    %108 = arith.addf %102, %107 : vector<16x32xf32>
    %109 = vector.extract_strided_slice %97 {offsets = [0, 16, 0], sizes = [2, 8, 16], strides = [1, 1, 1]} : vector<2x32x16xf32> to vector<2x8x16xf32>
    %110 = vector.extract_strided_slice %31 {offsets = [0, 64], sizes = [32, 32], strides = [1, 1]} : vector<32x128xf32> to vector<32x32xf32>
    %111 = vector.shape_cast %110 : vector<32x32xf32> to vector<2x16x32xf32>
    "tpu.trace_start"() <{level = 10 : i32, message = "bqk,bkd->bqd"}> : () -> ()
    %cst_42 = arith.constant dense<0.000000e+00> : vector<2x8x32xf32>
    %112 = tpu.matmul %109, %111, %cst_42 {dimension_numbers = #tpu.dot_dimension_numbers<[2], [1], [1], [2], [0, 0, 0, 1, 1, 2], [0], [0]>} : vector<2x8x16xf32>, vector<2x16x32xf32>, vector<2x8x32xf32> -> vector<2x8x32xf32>
    "tpu.trace_stop"() : () -> ()
    %113 = vector.shape_cast %112 : vector<2x8x32xf32> to vector<16x32xf32>
    %114 = arith.addf %108, %113 : vector<16x32xf32>
    %115 = vector.extract_strided_slice %97 {offsets = [0, 24, 0], sizes = [2, 8, 16], strides = [1, 1, 1]} : vector<2x32x16xf32> to vector<2x8x16xf32>
    %116 = vector.extract_strided_slice %31 {offsets = [0, 96], sizes = [32, 32], strides = [1, 1]} : vector<32x128xf32> to vector<32x32xf32>
    %117 = vector.shape_cast %116 : vector<32x32xf32> to vector<2x16x32xf32>
    "tpu.trace_start"() <{level = 10 : i32, message = "bqk,bkd->bqd"}> : () -> ()
    %cst_43 = arith.constant dense<0.000000e+00> : vector<2x8x32xf32>
    %118 = tpu.matmul %115, %117, %cst_43 {dimension_numbers = #tpu.dot_dimension_numbers<[2], [1], [1], [2], [0, 0, 0, 1, 1, 2], [0], [0]>} : vector<2x8x16xf32>, vector<2x16x32xf32>, vector<2x8x32xf32> -> vector<2x8x32xf32>
    "tpu.trace_stop"() : () -> ()
    %119 = vector.shape_cast %118 : vector<2x8x32xf32> to vector<16x32xf32>
    %120 = arith.addf %114, %119 : vector<16x32xf32>
    %121 = arith.addf %1, %120 : vector<16x32xf32>
    %122 = vector.broadcast %26 : vector<1x32xf32> to vector<16x32xf32>
    %123 = arith.addf %121, %122 : vector<16x32xf32>
    %cst_44 = arith.constant dense<0.000000e+00> : vector<16xf32>
    %124 = vector.multi_reduction <add>, %123, %cst_44 [1] : vector<16x32xf32> to vector<16xf32>
    %125 = vector.shape_cast %124 : vector<16xf32> to vector<16x1xf32>
    %cst_45 = arith.constant 3.125000e-02 : f32
    %126 = vector.broadcast %cst_45 : f32 to vector<16x1xf32>
    %127 = arith.mulf %125, %126 : vector<16x1xf32>
    %128 = arith.mulf %123, %123 : vector<16x32xf32>
    %cst_46 = arith.constant dense<0.000000e+00> : vector<16xf32>
    %129 = vector.multi_reduction <add>, %128, %cst_46 [1] : vector<16x32xf32> to vector<16xf32>
    %130 = vector.shape_cast %129 : vector<16xf32> to vector<16x1xf32>
    %cst_47 = arith.constant 3.200000e+01 : f32
    %131 = vector.broadcast %cst_47 : f32 to vector<16x1xf32>
    %132 = arith.mulf %131, %127 : vector<16x1xf32>
    %133 = arith.mulf %132, %127 : vector<16x1xf32>
    %134 = arith.subf %130, %133 : vector<16x1xf32>
    %cst_48 = arith.constant 0.0322580636 : f32
    %135 = vector.broadcast %cst_48 : f32 to vector<16x1xf32>
    %136 = arith.mulf %134, %135 : vector<16x1xf32>
    %cst_49 = arith.constant 0.000000e+00 : f32
    %137 = vector.broadcast %cst_49 : f32 to vector<16x1xf32>
    %138 = arith.maximumf %136, %137 : vector<16x1xf32>
    %139 = math.sqrt %138 : vector<16x1xf32>
    %cst_50 = arith.constant 9.99999997E-7 : f32
    %140 = vector.broadcast %cst_50 : f32 to vector<16x1xf32>
    %141 = arith.addf %139, %140 : vector<16x1xf32>
    %cst_51 = arith.constant 1.000000e+00 : f32
    %142 = vector.broadcast %cst_51 : f32 to vector<16x1xf32>
    %143 = arith.divf %142, %141 : vector<16x1xf32>
    %144 = vector.broadcast %127 : vector<16x1xf32> to vector<16x32xf32>
    %145 = arith.subf %123, %144 : vector<16x32xf32>
    %146 = vector.broadcast %27 : vector<1x32xf32> to vector<16x32xf32>
    %147 = arith.mulf %146, %145 : vector<16x32xf32>
    %148 = vector.broadcast %143 : vector<16x1xf32> to vector<16x32xf32>
    %149 = arith.mulf %147, %148 : vector<16x32xf32>
    %150 = vector.broadcast %28 : vector<1x32xf32> to vector<16x32xf32>
    %151 = arith.addf %149, %150 : vector<16x32xf32>
    %cst_52 = arith.constant dense<0.000000e+00> : vector<16x64xf32>
    %152 = tpu.matmul %151, %17, %cst_52 {dimension_numbers = #tpu.dot_dimension_numbers<[1], [0], [0], [1], [0, 0, 1, 1], [], []>} : vector<16x32xf32>, vector<32x64xf32>, vector<16x64xf32> -> vector<16x64xf32>
    %153 = vector.broadcast %30 : vector<1x64xf32> to vector<16x64xf32>
    %154 = arith.addf %152, %153 : vector<16x64xf32>
    %cst_53 = arith.constant 0.000000e+00 : f32
    %155 = vector.broadcast %cst_53 : f32 to vector<16x64xf32>
    %156 = arith.maximumf %154, %155 : vector<16x64xf32>
    %cst_54 = arith.constant dense<0.000000e+00> : vector<16x32xf32>
    %157 = tpu.matmul %156, %19, %cst_54 {dimension_numbers = #tpu.dot_dimension_numbers<[1], [0], [0], [1], [0, 0, 1, 1], [], []>} : vector<16x64xf32>, vector<64x32xf32>, vector<16x32xf32> -> vector<16x32xf32>
    %158 = arith.addf %123, %157 : vector<16x32xf32>
    %159 = vector.broadcast %29 : vector<1x32xf32> to vector<16x32xf32>
    %160 = arith.addf %158, %159 : vector<16x32xf32>
    %c1 = arith.constant 1 : index
    %c0_55 = arith.constant 0 : index
    %c0_56 = arith.constant 0 : index
    %161 = vector.load %arg4[%c1, %c0_55, %c0_56] : memref<2x32x32xf32, #tpu.memory_space<vmem>>, vector<1x32x32xf32>
    %162 = vector.shape_cast %161 : vector<1x32x32xf32> to vector<32x32xf32>
    %c1_57 = arith.constant 1 : index
    %c0_58 = arith.constant 0 : index
    %c0_59 = arith.constant 0 : index
    %163 = vector.load %arg5[%c1_57, %c0_58, %c0_59] : memref<2x32x64xf32, #tpu.memory_space<vmem>>, vector<1x32x64xf32>
    %164 = vector.shape_cast %163 : vector<1x32x64xf32> to vector<32x64xf32>
    %c1_60 = arith.constant 1 : index
    %c0_61 = arith.constant 0 : index
    %c0_62 = arith.constant 0 : index
    %165 = vector.load %arg6[%c1_60, %c0_61, %c0_62] : memref<2x64x32xf32, #tpu.memory_space<vmem>>, vector<1x64x32xf32>
    %166 = vector.shape_cast %165 : vector<1x64x32xf32> to vector<64x32xf32>
    %c1_63 = arith.constant 1 : index
    %c0_64 = arith.constant 0 : index
    %c0_65 = arith.constant 0 : index
    %167 = vector.load %arg8[%c1_63, %c0_64, %c0_65] : memref<2x16x64xf32, #tpu.memory_space<vmem>>, vector<1x16x64xf32>
    %168 = vector.shape_cast %167 : vector<1x16x64xf32> to vector<16x64xf32>
    %169 = vector.extract_strided_slice %168 {offsets = [0, 0], sizes = [1, 32], strides = [1, 1]} : vector<16x64xf32> to vector<1x32xf32>
    %170 = vector.extract_strided_slice %168 {offsets = [1, 0], sizes = [1, 32], strides = [1, 1]} : vector<16x64xf32> to vector<1x32xf32>
    %171 = vector.extract_strided_slice %168 {offsets = [2, 0], sizes = [1, 32], strides = [1, 1]} : vector<16x64xf32> to vector<1x32xf32>
    %172 = vector.extract_strided_slice %168 {offsets = [3, 0], sizes = [1, 32], strides = [1, 1]} : vector<16x64xf32> to vector<1x32xf32>
    %173 = vector.extract_strided_slice %168 {offsets = [4, 0], sizes = [1, 32], strides = [1, 1]} : vector<16x64xf32> to vector<1x32xf32>
    %174 = vector.extract_strided_slice %168 {offsets = [5, 0], sizes = [1, 32], strides = [1, 1]} : vector<16x64xf32> to vector<1x32xf32>
    %175 = vector.extract_strided_slice %168 {offsets = [6, 0], sizes = [1, 32], strides = [1, 1]} : vector<16x64xf32> to vector<1x32xf32>
    %176 = vector.extract_strided_slice %168 {offsets = [7, 0], sizes = [1, 32], strides = [1, 1]} : vector<16x64xf32> to vector<1x32xf32>
    %177 = vector.extract_strided_slice %168 {offsets = [8, 0], sizes = [1, 64], strides = [1, 1]} : vector<16x64xf32> to vector<1x64xf32>
    %178 = vector.extract_strided_slice %5 {offsets = [0, 256], sizes = [32, 128], strides = [1, 1]} : vector<32x512xf32> to vector<32x128xf32>
    %179 = vector.extract_strided_slice %5 {offsets = [0, 384], sizes = [32, 32], strides = [1, 1]} : vector<32x512xf32> to vector<32x32xf32>
    %180 = vector.broadcast %172 : vector<1x32xf32> to vector<32x32xf32>
    %181 = arith.addf %179, %180 : vector<32x32xf32>
    %cst_66 = arith.constant dense<0.000000e+00> : vector<16xf32>
    %182 = vector.multi_reduction <add>, %160, %cst_66 [1] : vector<16x32xf32> to vector<16xf32>
    %183 = vector.shape_cast %182 : vector<16xf32> to vector<16x1xf32>
    %cst_67 = arith.constant 3.125000e-02 : f32
    %184 = vector.broadcast %cst_67 : f32 to vector<16x1xf32>
    %185 = arith.mulf %183, %184 : vector<16x1xf32>
    %186 = arith.mulf %160, %160 : vector<16x32xf32>
    %cst_68 = arith.constant dense<0.000000e+00> : vector<16xf32>
    %187 = vector.multi_reduction <add>, %186, %cst_68 [1] : vector<16x32xf32> to vector<16xf32>
    %188 = vector.shape_cast %187 : vector<16xf32> to vector<16x1xf32>
    %cst_69 = arith.constant 3.200000e+01 : f32
    %189 = vector.broadcast %cst_69 : f32 to vector<16x1xf32>
    %190 = arith.mulf %189, %185 : vector<16x1xf32>
    %191 = arith.mulf %190, %185 : vector<16x1xf32>
    %192 = arith.subf %188, %191 : vector<16x1xf32>
    %cst_70 = arith.constant 0.0322580636 : f32
    %193 = vector.broadcast %cst_70 : f32 to vector<16x1xf32>
    %194 = arith.mulf %192, %193 : vector<16x1xf32>
    %cst_71 = arith.constant 0.000000e+00 : f32
    %195 = vector.broadcast %cst_71 : f32 to vector<16x1xf32>
    %196 = arith.maximumf %194, %195 : vector<16x1xf32>
    %197 = math.sqrt %196 : vector<16x1xf32>
    %cst_72 = arith.constant 9.99999997E-7 : f32
    %198 = vector.broadcast %cst_72 : f32 to vector<16x1xf32>
    %199 = arith.addf %197, %198 : vector<16x1xf32>
    %cst_73 = arith.constant 1.000000e+00 : f32
    %200 = vector.broadcast %cst_73 : f32 to vector<16x1xf32>
    %201 = arith.divf %200, %199 : vector<16x1xf32>
    %202 = vector.broadcast %185 : vector<16x1xf32> to vector<16x32xf32>
    %203 = arith.subf %160, %202 : vector<16x32xf32>
    %204 = vector.broadcast %169 : vector<1x32xf32> to vector<16x32xf32>
    %205 = arith.mulf %204, %203 : vector<16x32xf32>
    %206 = vector.broadcast %201 : vector<16x1xf32> to vector<16x32xf32>
    %207 = arith.mulf %205, %206 : vector<16x32xf32>
    %208 = vector.broadcast %170 : vector<1x32xf32> to vector<16x32xf32>
    %209 = arith.addf %207, %208 : vector<16x32xf32>
    %cst_74 = arith.constant dense<0.000000e+00> : vector<16x32xf32>
    %210 = tpu.matmul %209, %162, %cst_74 {dimension_numbers = #tpu.dot_dimension_numbers<[1], [0], [0], [1], [0, 0, 1, 1], [], []>} : vector<16x32xf32>, vector<32x32xf32>, vector<16x32xf32> -> vector<16x32xf32>
    %211 = vector.broadcast %171 : vector<1x32xf32> to vector<16x32xf32>
    %212 = arith.addf %210, %211 : vector<16x32xf32>
    %213 = vector.extract_strided_slice %212 {offsets = [0, 0], sizes = [16, 8], strides = [1, 1]} : vector<16x32xf32> to vector<16x8xf32>
    %214 = vector.shape_cast %213 : vector<16x8xf32> to vector<2x8x8xf32>
    %215 = vector.extract_strided_slice %181 {offsets = [0, 0], sizes = [32, 8], strides = [1, 1]} : vector<32x32xf32> to vector<32x8xf32>
    %216 = vector.shape_cast %215 : vector<32x8xf32> to vector<2x16x8xf32>
    "tpu.trace_start"() <{level = 10 : i32, message = "bqd,bkd->bqk"}> : () -> ()
    %cst_75 = arith.constant dense<0.000000e+00> : vector<2x8x16xf32>
    %217 = tpu.matmul %214, %216, %cst_75 {dimension_numbers = #tpu.dot_dimension_numbers<[2], [2], [1], [1], [0, 0, 0, 1, 1, 1], [0], [0]>} : vector<2x8x8xf32>, vector<2x16x8xf32>, vector<2x8x16xf32> -> vector<2x8x16xf32>
    "tpu.trace_stop"() : () -> ()
    %218 = vector.extract_strided_slice %212 {offsets = [0, 8], sizes = [16, 8], strides = [1, 1]} : vector<16x32xf32> to vector<16x8xf32>
    %219 = vector.shape_cast %218 : vector<16x8xf32> to vector<2x8x8xf32>
    %220 = vector.extract_strided_slice %181 {offsets = [0, 8], sizes = [32, 8], strides = [1, 1]} : vector<32x32xf32> to vector<32x8xf32>
    %221 = vector.shape_cast %220 : vector<32x8xf32> to vector<2x16x8xf32>
    "tpu.trace_start"() <{level = 10 : i32, message = "bqd,bkd->bqk"}> : () -> ()
    %cst_76 = arith.constant dense<0.000000e+00> : vector<2x8x16xf32>
    %222 = tpu.matmul %219, %221, %cst_76 {dimension_numbers = #tpu.dot_dimension_numbers<[2], [2], [1], [1], [0, 0, 0, 1, 1, 1], [0], [0]>} : vector<2x8x8xf32>, vector<2x16x8xf32>, vector<2x8x16xf32> -> vector<2x8x16xf32>
    "tpu.trace_stop"() : () -> ()
    %223 = vector.extract_strided_slice %212 {offsets = [0, 16], sizes = [16, 8], strides = [1, 1]} : vector<16x32xf32> to vector<16x8xf32>
    %224 = vector.shape_cast %223 : vector<16x8xf32> to vector<2x8x8xf32>
    %225 = vector.extract_strided_slice %181 {offsets = [0, 16], sizes = [32, 8], strides = [1, 1]} : vector<32x32xf32> to vector<32x8xf32>
    %226 = vector.shape_cast %225 : vector<32x8xf32> to vector<2x16x8xf32>
    "tpu.trace_start"() <{level = 10 : i32, message = "bqd,bkd->bqk"}> : () -> ()
    %cst_77 = arith.constant dense<0.000000e+00> : vector<2x8x16xf32>
    %227 = tpu.matmul %224, %226, %cst_77 {dimension_numbers = #tpu.dot_dimension_numbers<[2], [2], [1], [1], [0, 0, 0, 1, 1, 1], [0], [0]>} : vector<2x8x8xf32>, vector<2x16x8xf32>, vector<2x8x16xf32> -> vector<2x8x16xf32>
    "tpu.trace_stop"() : () -> ()
    %228 = vector.extract_strided_slice %212 {offsets = [0, 24], sizes = [16, 8], strides = [1, 1]} : vector<16x32xf32> to vector<16x8xf32>
    %229 = vector.shape_cast %228 : vector<16x8xf32> to vector<2x8x8xf32>
    %230 = vector.extract_strided_slice %181 {offsets = [0, 24], sizes = [32, 8], strides = [1, 1]} : vector<32x32xf32> to vector<32x8xf32>
    %231 = vector.shape_cast %230 : vector<32x8xf32> to vector<2x16x8xf32>
    "tpu.trace_start"() <{level = 10 : i32, message = "bqd,bkd->bqk"}> : () -> ()
    %cst_78 = arith.constant dense<0.000000e+00> : vector<2x8x16xf32>
    %232 = tpu.matmul %229, %231, %cst_78 {dimension_numbers = #tpu.dot_dimension_numbers<[2], [2], [1], [1], [0, 0, 0, 1, 1, 1], [0], [0]>} : vector<2x8x8xf32>, vector<2x16x8xf32>, vector<2x8x16xf32> -> vector<2x8x16xf32>
    "tpu.trace_stop"() : () -> ()
    %233 = tpu.concatenate %217, %222, %227, %232 in 1 : vector<2x8x16xf32>, vector<2x8x16xf32>, vector<2x8x16xf32>, vector<2x8x16xf32> -> vector<2x32x16xf32>
    %234 = arith.addf %233, %13 : vector<2x32x16xf32>
    %cst_79 = arith.constant dense<0xFF800000> : vector<2x32xf32>
    %235 = vector.multi_reduction <maximumf>, %234, %cst_79 [2] : vector<2x32x16xf32> to vector<2x32xf32>
    %236 = vector.shape_cast %235 : vector<2x32xf32> to vector<2x32x1xf32>
    %237 = vector.broadcast %236 : vector<2x32x1xf32> to vector<2x32x16xf32>
    %238 = arith.subf %234, %237 : vector<2x32x16xf32>
    %239 = math.exp %238 : vector<2x32x16xf32>
    %cst_80 = arith.constant dense<0.000000e+00> : vector<2x32xf32>
    %240 = vector.multi_reduction <add>, %239, %cst_80 [2] : vector<2x32x16xf32> to vector<2x32xf32>
    %241 = vector.shape_cast %240 : vector<2x32xf32> to vector<2x32x1xf32>
    %242 = tpu.reciprocal %241 {approx = true} : vector<2x32x1xf32> -> vector<2x32x1xf32>
    %243 = vector.broadcast %242 : vector<2x32x1xf32> to vector<2x32x16xf32>
    %244 = arith.mulf %239, %243 : vector<2x32x16xf32>
    %245 = vector.extract_strided_slice %244 {offsets = [0, 0, 0], sizes = [2, 8, 16], strides = [1, 1, 1]} : vector<2x32x16xf32> to vector<2x8x16xf32>
    %246 = vector.extract_strided_slice %178 {offsets = [0, 0], sizes = [32, 32], strides = [1, 1]} : vector<32x128xf32> to vector<32x32xf32>
    %247 = vector.shape_cast %246 : vector<32x32xf32> to vector<2x16x32xf32>
    "tpu.trace_start"() <{level = 10 : i32, message = "bqk,bkd->bqd"}> : () -> ()
    %cst_81 = arith.constant dense<0.000000e+00> : vector<2x8x32xf32>
    %248 = tpu.matmul %245, %247, %cst_81 {dimension_numbers = #tpu.dot_dimension_numbers<[2], [1], [1], [2], [0, 0, 0, 1, 1, 2], [0], [0]>} : vector<2x8x16xf32>, vector<2x16x32xf32>, vector<2x8x32xf32> -> vector<2x8x32xf32>
    "tpu.trace_stop"() : () -> ()
    %249 = vector.shape_cast %248 : vector<2x8x32xf32> to vector<16x32xf32>
    %250 = vector.extract_strided_slice %244 {offsets = [0, 8, 0], sizes = [2, 8, 16], strides = [1, 1, 1]} : vector<2x32x16xf32> to vector<2x8x16xf32>
    %251 = vector.extract_strided_slice %178 {offsets = [0, 32], sizes = [32, 32], strides = [1, 1]} : vector<32x128xf32> to vector<32x32xf32>
    %252 = vector.shape_cast %251 : vector<32x32xf32> to vector<2x16x32xf32>
    "tpu.trace_start"() <{level = 10 : i32, message = "bqk,bkd->bqd"}> : () -> ()
    %cst_82 = arith.constant dense<0.000000e+00> : vector<2x8x32xf32>
    %253 = tpu.matmul %250, %252, %cst_82 {dimension_numbers = #tpu.dot_dimension_numbers<[2], [1], [1], [2], [0, 0, 0, 1, 1, 2], [0], [0]>} : vector<2x8x16xf32>, vector<2x16x32xf32>, vector<2x8x32xf32> -> vector<2x8x32xf32>
    "tpu.trace_stop"() : () -> ()
    %254 = vector.shape_cast %253 : vector<2x8x32xf32> to vector<16x32xf32>
    %255 = arith.addf %249, %254 : vector<16x32xf32>
    %256 = vector.extract_strided_slice %244 {offsets = [0, 16, 0], sizes = [2, 8, 16], strides = [1, 1, 1]} : vector<2x32x16xf32> to vector<2x8x16xf32>
    %257 = vector.extract_strided_slice %178 {offsets = [0, 64], sizes = [32, 32], strides = [1, 1]} : vector<32x128xf32> to vector<32x32xf32>
    %258 = vector.shape_cast %257 : vector<32x32xf32> to vector<2x16x32xf32>
    "tpu.trace_start"() <{level = 10 : i32, message = "bqk,bkd->bqd"}> : () -> ()
    %cst_83 = arith.constant dense<0.000000e+00> : vector<2x8x32xf32>
    %259 = tpu.matmul %256, %258, %cst_83 {dimension_numbers = #tpu.dot_dimension_numbers<[2], [1], [1], [2], [0, 0, 0, 1, 1, 2], [0], [0]>} : vector<2x8x16xf32>, vector<2x16x32xf32>, vector<2x8x32xf32> -> vector<2x8x32xf32>
    "tpu.trace_stop"() : () -> ()
    %260 = vector.shape_cast %259 : vector<2x8x32xf32> to vector<16x32xf32>
    %261 = arith.addf %255, %260 : vector<16x32xf32>
    %262 = vector.extract_strided_slice %244 {offsets = [0, 24, 0], sizes = [2, 8, 16], strides = [1, 1, 1]} : vector<2x32x16xf32> to vector<2x8x16xf32>
    %263 = vector.extract_strided_slice %178 {offsets = [0, 96], sizes = [32, 32], strides = [1, 1]} : vector<32x128xf32> to vector<32x32xf32>
    %264 = vector.shape_cast %263 : vector<32x32xf32> to vector<2x16x32xf32>
    "tpu.trace_start"() <{level = 10 : i32, message = "bqk,bkd->bqd"}> : () -> ()
    %cst_84 = arith.constant dense<0.000000e+00> : vector<2x8x32xf32>
    %265 = tpu.matmul %262, %264, %cst_84 {dimension_numbers = #tpu.dot_dimension_numbers<[2], [1], [1], [2], [0, 0, 0, 1, 1, 2], [0], [0]>} : vector<2x8x16xf32>, vector<2x16x32xf32>, vector<2x8x32xf32> -> vector<2x8x32xf32>
    "tpu.trace_stop"() : () -> ()
    %266 = vector.shape_cast %265 : vector<2x8x32xf32> to vector<16x32xf32>
    %267 = arith.addf %261, %266 : vector<16x32xf32>
    %268 = arith.addf %160, %267 : vector<16x32xf32>
    %269 = vector.broadcast %173 : vector<1x32xf32> to vector<16x32xf32>
    %270 = arith.addf %268, %269 : vector<16x32xf32>
    %cst_85 = arith.constant dense<0.000000e+00> : vector<16xf32>
    %271 = vector.multi_reduction <add>, %270, %cst_85 [1] : vector<16x32xf32> to vector<16xf32>
    %272 = vector.shape_cast %271 : vector<16xf32> to vector<16x1xf32>
    %cst_86 = arith.constant 3.125000e-02 : f32
    %273 = vector.broadcast %cst_86 : f32 to vector<16x1xf32>
    %274 = arith.mulf %272, %273 : vector<16x1xf32>
    %275 = arith.mulf %270, %270 : vector<16x32xf32>
    %cst_87 = arith.constant dense<0.000000e+00> : vector<16xf32>
    %276 = vector.multi_reduction <add>, %275, %cst_87 [1] : vector<16x32xf32> to vector<16xf32>
    %277 = vector.shape_cast %276 : vector<16xf32> to vector<16x1xf32>
    %cst_88 = arith.constant 3.200000e+01 : f32
    %278 = vector.broadcast %cst_88 : f32 to vector<16x1xf32>
    %279 = arith.mulf %278, %274 : vector<16x1xf32>
    %280 = arith.mulf %279, %274 : vector<16x1xf32>
    %281 = arith.subf %277, %280 : vector<16x1xf32>
    %cst_89 = arith.constant 0.0322580636 : f32
    %282 = vector.broadcast %cst_89 : f32 to vector<16x1xf32>
    %283 = arith.mulf %281, %282 : vector<16x1xf32>
    %cst_90 = arith.constant 0.000000e+00 : f32
    %284 = vector.broadcast %cst_90 : f32 to vector<16x1xf32>
    %285 = arith.maximumf %283, %284 : vector<16x1xf32>
    %286 = math.sqrt %285 : vector<16x1xf32>
    %cst_91 = arith.constant 9.99999997E-7 : f32
    %287 = vector.broadcast %cst_91 : f32 to vector<16x1xf32>
    %288 = arith.addf %286, %287 : vector<16x1xf32>
    %cst_92 = arith.constant 1.000000e+00 : f32
    %289 = vector.broadcast %cst_92 : f32 to vector<16x1xf32>
    %290 = arith.divf %289, %288 : vector<16x1xf32>
    %291 = vector.broadcast %274 : vector<16x1xf32> to vector<16x32xf32>
    %292 = arith.subf %270, %291 : vector<16x32xf32>
    %293 = vector.broadcast %174 : vector<1x32xf32> to vector<16x32xf32>
    %294 = arith.mulf %293, %292 : vector<16x32xf32>
    %295 = vector.broadcast %290 : vector<16x1xf32> to vector<16x32xf32>
    %296 = arith.mulf %294, %295 : vector<16x32xf32>
    %297 = vector.broadcast %175 : vector<1x32xf32> to vector<16x32xf32>
    %298 = arith.addf %296, %297 : vector<16x32xf32>
    %cst_93 = arith.constant dense<0.000000e+00> : vector<16x64xf32>
    %299 = tpu.matmul %298, %164, %cst_93 {dimension_numbers = #tpu.dot_dimension_numbers<[1], [0], [0], [1], [0, 0, 1, 1], [], []>} : vector<16x32xf32>, vector<32x64xf32>, vector<16x64xf32> -> vector<16x64xf32>
    %300 = vector.broadcast %177 : vector<1x64xf32> to vector<16x64xf32>
    %301 = arith.addf %299, %300 : vector<16x64xf32>
    %cst_94 = arith.constant 0.000000e+00 : f32
    %302 = vector.broadcast %cst_94 : f32 to vector<16x64xf32>
    %303 = arith.maximumf %301, %302 : vector<16x64xf32>
    %cst_95 = arith.constant dense<0.000000e+00> : vector<16x32xf32>
    %304 = tpu.matmul %303, %166, %cst_95 {dimension_numbers = #tpu.dot_dimension_numbers<[1], [0], [0], [1], [0, 0, 1, 1], [], []>} : vector<16x64xf32>, vector<64x32xf32>, vector<16x32xf32> -> vector<16x32xf32>
    %305 = arith.addf %270, %304 : vector<16x32xf32>
    %306 = vector.broadcast %176 : vector<1x32xf32> to vector<16x32xf32>
    %307 = arith.addf %305, %306 : vector<16x32xf32>
    %c0_96 = arith.constant 0 : index
    %c0_97 = arith.constant 0 : index
    %308 = vector.load %arg9[%c0_96, %c0_97] : memref<2x32xf32, #tpu.memory_space<vmem>>, vector<1x32xf32>
    %c1_98 = arith.constant 1 : index
    %c0_99 = arith.constant 0 : index
    %309 = vector.load %arg9[%c1_98, %c0_99] : memref<2x32xf32, #tpu.memory_space<vmem>>, vector<1x32xf32>
    %cst_100 = arith.constant dense<0.000000e+00> : vector<16xf32>
    %310 = vector.multi_reduction <add>, %307, %cst_100 [1] : vector<16x32xf32> to vector<16xf32>
    %311 = vector.shape_cast %310 : vector<16xf32> to vector<16x1xf32>
    %cst_101 = arith.constant 3.125000e-02 : f32
    %312 = vector.broadcast %cst_101 : f32 to vector<16x1xf32>
    %313 = arith.mulf %311, %312 : vector<16x1xf32>
    %314 = arith.mulf %307, %307 : vector<16x32xf32>
    %cst_102 = arith.constant dense<0.000000e+00> : vector<16xf32>
    %315 = vector.multi_reduction <add>, %314, %cst_102 [1] : vector<16x32xf32> to vector<16xf32>
    %316 = vector.shape_cast %315 : vector<16xf32> to vector<16x1xf32>
    %cst_103 = arith.constant 3.200000e+01 : f32
    %317 = vector.broadcast %cst_103 : f32 to vector<16x1xf32>
    %318 = arith.mulf %317, %313 : vector<16x1xf32>
    %319 = arith.mulf %318, %313 : vector<16x1xf32>
    %320 = arith.subf %316, %319 : vector<16x1xf32>
    %cst_104 = arith.constant 0.0322580636 : f32
    %321 = vector.broadcast %cst_104 : f32 to vector<16x1xf32>
    %322 = arith.mulf %320, %321 : vector<16x1xf32>
    %cst_105 = arith.constant 0.000000e+00 : f32
    %323 = vector.broadcast %cst_105 : f32 to vector<16x1xf32>
    %324 = arith.maximumf %322, %323 : vector<16x1xf32>
    %325 = math.sqrt %324 : vector<16x1xf32>
    %cst_106 = arith.constant 9.99999997E-7 : f32
    %326 = vector.broadcast %cst_106 : f32 to vector<16x1xf32>
    %327 = arith.addf %325, %326 : vector<16x1xf32>
    %cst_107 = arith.constant 1.000000e+00 : f32
    %328 = vector.broadcast %cst_107 : f32 to vector<16x1xf32>
    %329 = arith.divf %328, %327 : vector<16x1xf32>
    %330 = vector.broadcast %313 : vector<16x1xf32> to vector<16x32xf32>
    %331 = arith.subf %307, %330 : vector<16x32xf32>
    %332 = vector.broadcast %308 : vector<1x32xf32> to vector<16x32xf32>
    %333 = arith.mulf %332, %331 : vector<16x32xf32>
    %334 = vector.broadcast %329 : vector<16x1xf32> to vector<16x32xf32>
    %335 = arith.mulf %333, %334 : vector<16x32xf32>
    %336 = vector.broadcast %309 : vector<1x32xf32> to vector<16x32xf32>
    %337 = arith.addf %335, %336 : vector<16x32xf32>
    %338 = vector.shape_cast %337 : vector<16x32xf32> to vector<2x8x32xf32>
    %c0_108 = arith.constant 0 : index
    %c0_109 = arith.constant 0 : index
    %c0_110 = arith.constant 0 : index
    %339 = vector.load %arg10[%c0_108, %c0_109, %c0_110] : memref<2x8x32xf32, #tpu.memory_space<vmem>>, vector<2x8x32xf32>
    tpu.vector_store %arg10[%c0_108, %c0_109, %c0_110], %338 {strides = array<i32>} : memref<2x8x32xf32, #tpu.memory_space<vmem>>, vector<2x8x32xf32>,
    return
  }
  func.func @transform_0(%arg0: i32) -> (i32, i32, i32) {
    %c0_i32 = arith.constant 0 : i32
    %c0_i32_0 = arith.constant 0 : i32
    %c0_i32_1 = arith.constant 0 : i32
    %c0_i32_2 = arith.constant 0 : i32
    return %c0_i32, %c0_i32_0, %c0_i32_1 : i32, i32, i32
  }
  func.func @transform_1(%arg0: i32) -> (i32, i32, i32) {
    %c0_i32 = arith.constant 0 : i32
    %c0_i32_0 = arith.constant 0 : i32
    %c0_i32_1 = arith.constant 0 : i32
    %c0_i32_2 = arith.constant 0 : i32
    return %c0_i32, %c0_i32_0, %c0_i32_1 : i32, i32, i32
  }
  func.func @transform_2(%arg0: i32) -> (i32, i32, i32) {
    %c0_i32 = arith.constant 0 : i32
    %c0_i32_0 = arith.constant 0 : i32
    %c0_i32_1 = arith.constant 0 : i32
    %c0_i32_2 = arith.constant 0 : i32
    return %c0_i32, %c0_i32_0, %c0_i32_1 : i32, i32, i32
  }
  func.func @transform_3(%arg0: i32) -> (i32, i32, i32) {
    %c0_i32 = arith.constant 0 : i32
    %c0_i32_0 = arith.constant 0 : i32
    %c0_i32_1 = arith.constant 0 : i32
    %c0_i32_2 = arith.constant 0 : i32
    return %c0_i32, %c0_i32_0, %c0_i32_1 : i32, i32, i32
  }
  func.func @transform_4(%arg0: i32) -> (i32, i32, i32) {
    %c0_i32 = arith.constant 0 : i32
    %c0_i32_0 = arith.constant 0 : i32
    %c0_i32_1 = arith.constant 0 : i32
    %c0_i32_2 = arith.constant 0 : i32
    return %c0_i32, %c0_i32_0, %c0_i32_1 : i32, i32, i32
  }
  func.func @transform_5(%arg0: i32) -> (i32, i32, i32) {
    %c0_i32 = arith.constant 0 : i32
    %c0_i32_0 = arith.constant 0 : i32
    %c0_i32_1 = arith.constant 0 : i32
    %c0_i32_2 = arith.constant 0 : i32
    return %c0_i32, %c0_i32_0, %c0_i32_1 : i32, i32, i32
  }
  func.func @transform_6(%arg0: i32) -> (i32, i32) {
    %c0_i32 = arith.constant 0 : i32
    %c0_i32_0 = arith.constant 0 : i32
    %c0_i32_1 = arith.constant 0 : i32
    return %c0_i32, %c0_i32_0 : i32, i32
  }
  func.func @transform_7(%arg0: i32) -> (i32, i32, i32) {
    %c0_i32 = arith.constant 0 : i32
    %c0_i32_0 = arith.constant 0 : i32
    %c0_i32_1 = arith.constant 0 : i32
    %c0_i32_2 = arith.constant 0 : i32
    return %c0_i32, %c0_i32_0, %c0_i32_1 : i32, i32, i32
  }
  func.func @transform_8(%arg0: i32) -> (i32, i32) {
    %c0_i32 = arith.constant 0 : i32
    %c0_i32_0 = arith.constant 0 : i32
    %c0_i32_1 = arith.constant 0 : i32
    return %c0_i32, %c0_i32_0 : i32, i32
  }
  func.func @transform_9(%arg0: i32) -> (i32, i32, i32) {
    %c0_i32 = arith.constant 0 : i32
    %c0_i32_0 = arith.constant 0 : i32
    %c0_i32_1 = arith.constant 0 : i32
    %c0_i32_2 = arith.constant 0 : i32
    return %c0_i32, %c0_i32_0, %c0_i32_1 : i32, i32, i32
  }
}

</mosaic_0001>

<llo_original>
// kernel: tpu_custom_call.1
$region0: #{tpu_custom_call.1}
  #allocation0 [shape = 'u32[]', space=smem, size = 0x4, offset = 0x4, fixed_abs, tag = 'smem constant byte address 0x4 - core index']
  #allocation1 [shape = 'u32[144,128]{1,0:T(1,128)}', space=vmem, size = 0x12000, scoped, tag = 'internal scratch']
  %s0 = inlined_call_operand.hbm [shape: f32[2,8,32], index: 0, kind: input, shape index: {}]
  %s1 = inlined_call_operand.hbm [shape: f32[2,16,32], index: 1, kind: input, shape index: {}]
  %s2 = inlined_call_operand.vmem [shape: f32[2,1,16], index: 2, kind: input, shape index: {}]
  %s3 = inlined_call_operand.vmem [shape: f32[2,32,32], index: 3, kind: input, shape index: {}]
  %s4 = inlined_call_operand.hbm [shape: f32[2,32,64], index: 4, kind: input, shape index: {}]
  %s5 = inlined_call_operand.vmem [shape: f32[2,64,32], index: 5, kind: input, shape index: {}]
  %s6 = inlined_call_operand.vmem [shape: f32[32,512], index: 6, kind: input, shape index: {}]
  %s7 = inlined_call_operand.hbm [shape: f32[2,16,64], index: 7, kind: input, shape index: {}]
  %s8 = inlined_call_operand.vmem [shape: f32[2,32], index: 8, kind: input, shape index: {}]
  %s9 = inlined_call_operand.hbm [shape: f32[2,8,32], index: 9, kind: output, shape index: {}]
  %s10 = sld [smem:[#allocation0]]
  $region62: #{tpu_custom_call.1} parent=0
    _
  %s12 = ssub.s32 1, %s10
  %s13 = scalar_select 0, %s12, %s10
  $region1: #{tpu_custom_call.1} parent=0
    #allocation2 [shape = 'u8[8192]{0}', space=vmem, size = 0x2000, scoped, tag = 'input window, operand 0, single buffered']
    #allocation3 [shape = 's32[1]{0}', space=sflag, size = 0x4, scoped, tag = 'scoped memory for tpu_custom_call.1']
    #allocation4 [shape = 's32[1]{0}', space=sflag, size = 0x4, scoped, tag = 'scoped memory for tpu_custom_call.1']
    #allocation5 [shape = 'u8[16384]{0}', space=vmem, size = 0x4000, scoped, tag = 'input window, operand 1, single buffered']
    #allocation6 [shape = 's32[1]{0}', space=sflag, size = 0x4, scoped, tag = 'scoped memory for tpu_custom_call.1']
    #allocation7 [shape = 'u8[32768]{0}', space=vmem, size = 0x8000, scoped, tag = 'input window, operand 4, single buffered']
    #allocation8 [shape = 'u8[16384]{0}', space=vmem, size = 0x4000, scoped, tag = 'input window, operand 7, single buffered']
    #allocation9 [shape = 's32[1]{0}', space=sflag, size = 0x4, scoped, tag = 'scoped memory for tpu_custom_call.1']
    #allocation10 [shape = 'u8[8192]{0}', space=vmem, size = 0x2000, scoped, tag = 'output window, operand 0, single buffered']
    %14 = vsyncpa [#allocation3], 0
    %15 = vsyncpa [#allocation6], 0
    %16 = vsyncpa [#allocation9], 0
    %17 = vsyncpa [#allocation4], 0
    // Predicated region
    $region2: #{tpu_custom_call.1} parent=1 // pred_check
      _
    $region3: #{tpu_custom_call.1} parent=1 // pred_check_branch
      %19 = sbr.rel (0) target = $region5
    $region4: #{tpu_custom_call.1} parent=1 // pred_region
      %s21 = ssub.s32 256, 256
      %22 = vsyncadd [#allocation3], %s21
      %s23 = sshll.u32 [#allocation2], 4
      %s24 = int_to_ptr.vmem [resolvable:$true] %s23
      %29 = dma.hbm_to_vmem [thread:$0]  %s0, 256, %s24, [#allocation3], 128, 128, 8
    $region5: #{tpu_custom_call.1} parent=1 // pred_fallthru
      _
    // Predicated region
    $region6: #{tpu_custom_call.1} parent=1 // pred_check
      _
    $region7: #{tpu_custom_call.1} parent=1 // pred_check_branch
      %31 = sbr.rel (0) target = $region9
    $region8: #{tpu_custom_call.1} parent=1 // pred_region
      %s33 = ssub.s32 512, 512
      %34 = vsyncadd [#allocation6], %s33
      %s35 = sshll.u32 [#allocation5], 4
      %s36 = int_to_ptr.vmem [resolvable:$true] %s35
      %41 = dma.hbm_to_vmem [thread:$0]  %s1, 512, %s36, [#allocation6], 128, 128, 8
    $region9: #{tpu_custom_call.1} parent=1 // pred_fallthru
      _
    // Predicated region
    $region10: #{tpu_custom_call.1} parent=1 // pred_check
      _
    $region11: #{tpu_custom_call.1} parent=1 // pred_check_branch
      %43 = sbr.rel (0) target = $region13
    $region12: #{tpu_custom_call.1} parent=1 // pred_region
      _
    $region13: #{tpu_custom_call.1} parent=1 // pred_fallthru
      _
    // Predicated region
    $region14: #{tpu_custom_call.1} parent=1 // pred_check
      _
    $region15: #{tpu_custom_call.1} parent=1 // pred_check_branch
      %45 = sbr.rel (0) target = $region17
    $region16: #{tpu_custom_call.1} parent=1 // pred_region
      _
    $region17: #{tpu_custom_call.1} parent=1 // pred_fallthru
      _
    // Predicated region
    $region18: #{tpu_custom_call.1} parent=1 // pred_check
      _
    $region19: #{tpu_custom_call.1} parent=1 // pred_check_branch
      %47 = sbr.rel (0) target = $region21
    $region20: #{tpu_custom_call.1} parent=1 // pred_region
      %s49 = ssub.s32 1024, 1024
      %50 = vsyncadd [#allocation6], %s49
      %s51 = sshll.u32 [#allocation7], 4
      %s52 = int_to_ptr.vmem [resolvable:$true] %s51
      %57 = dma.hbm_to_vmem [thread:$0]  %s4, 1024, %s52, [#allocation6], 128, 128, 8
    $region21: #{tpu_custom_call.1} parent=1 // pred_fallthru
      _
    // Predicated region
    $region22: #{tpu_custom_call.1} parent=1 // pred_check
      _
    $region23: #{tpu_custom_call.1} parent=1 // pred_check_branch
      %59 = sbr.rel (0) target = $region25
    $region24: #{tpu_custom_call.1} parent=1 // pred_region
      _
    $region25: #{tpu_custom_call.1} parent=1 // pred_fallthru
      _
    // Predicated region
    $region26: #{tpu_custom_call.1} parent=1 // pred_check
      _
    $region27: #{tpu_custom_call.1} parent=1 // pred_check_branch
      %61 = sbr.rel (0) target = $region29
    $region28: #{tpu_custom_call.1} parent=1 // pred_region
      _
    $region29: #{tpu_custom_call.1} parent=1 // pred_fallthru
      _
    // Predicated region
    $region30: #{tpu_custom_call.1} parent=1 // pred_check
      _
    $region31: #{tpu_custom_call.1} parent=1 // pred_check_branch
      %63 = sbr.rel (0) target = $region33
    $region32: #{tpu_custom_call.1} parent=1 // pred_region
      %s65 = ssub.s32 512, 512
      %66 = vsyncadd [#allocation9], %s65
      %s67 = sshll.u32 [#allocation8], 4
      %s68 = int_to_ptr.vmem [resolvable:$true] %s67
      %73 = dma.hbm_to_vmem [thread:$0]  %s7, 512, %s68, [#allocation9], 128, 128, 8
    $region33: #{tpu_custom_call.1} parent=1 // pred_fallthru
      _
    // Predicated region
    $region34: #{tpu_custom_call.1} parent=1 // pred_check
      _
    $region35: #{tpu_custom_call.1} parent=1 // pred_check_branch
      %75 = sbr.rel (0) target = $region37
    $region36: #{tpu_custom_call.1} parent=1 // pred_region
      _
    $region37: #{tpu_custom_call.1} parent=1 // pred_fallthru
      _
    // Predicated region
    $region38: #{tpu_custom_call.1} parent=1 // pred_check
      _
    $region39: #{tpu_custom_call.1} parent=1 // pred_check_branch
      %77 = sbr.rel (0) target = $region41
    $region40: #{tpu_custom_call.1} parent=1 // pred_region
      %78 = dma.done [#allocation3], 256
    $region41: #{tpu_custom_call.1} parent=1 // pred_fallthru
      _
    // Predicated region
    $region42: #{tpu_custom_call.1} parent=1 // pred_check
      _
    $region43: #{tpu_custom_call.1} parent=1 // pred_check_branch
      %80 = sbr.rel (0) target = $region45
    $region44: #{tpu_custom_call.1} parent=1 // pred_region
      %81 = dma.done [#allocation6], 512
    $region45: #{tpu_custom_call.1} parent=1 // pred_fallthru
      _
    // Predicated region
    $region46: #{tpu_custom_call.1} parent=1 // pred_check
      _
    $region47: #{tpu_custom_call.1} parent=1 // pred_check_branch
      %83 = sbr.rel (0) target = $region49
    $region48: #{tpu_custom_call.1} parent=1 // pred_region
      %84 = dma.done [#allocation6], 1024
    $region49: #{tpu_custom_call.1} parent=1 // pred_fallthru
      _
    // Predicated region
    $region50: #{tpu_custom_call.1} parent=1 // pred_check
      _
    $region51: #{tpu_custom_call.1} parent=1 // pred_check_branch
      %86 = sbr.rel (0) target = $region53
    $region52: #{tpu_custom_call.1} parent=1 // pred_region
      %87 = dma.done [#allocation9], 512
    $region53: #{tpu_custom_call.1} parent=1 // pred_fallthru
      _
    %v88 = vld [vmem:[#allocation2] sm:$0xff]
    %v89 = vld [vmem:[#allocation2 + $0x8] sm:$0xff]
    %v90 = vld [vmem:[#allocation5] sm:$0xff]
    %v91 = vld [vmem:[#allocation5 + $0x8] sm:$0xff]
    %v92 = vld [vmem:[#allocation5 + $0x10] sm:$0xff]
    %v93 = vld [vmem:[#allocation5 + $0x18] sm:$0xff]
    %v94 = vld [vmem:[%s6] sm:$0xff]
    %v95 = vld [vmem:[%s6 + $0x8] sm:$0xff]
    %v96 = vld [vmem:[%s6 + $0x10] sm:$0xff]
    %v97 = vld [vmem:[%s6 + $0x18] sm:$0xff]
    %v98 = vld [vmem:[%s6 + $0x20] sm:$0xff]
    %v99 = vld [vmem:[%s6 + $0x28] sm:$0xff]
    %v100 = vld [vmem:[%s6 + $0x30] sm:$0xff]
    %v101 = vld [vmem:[%s6 + $0x38] sm:$0xff]
    %v102 = vld [vmem:[%s6 + $0x40] sm:$0xff]
    %v103 = vld [vmem:[%s6 + $0x48] sm:$0xff]
    %v104 = vld [vmem:[%s6 + $0x50] sm:$0xff]
    %v105 = vld [vmem:[%s6 + $0x58] sm:$0xff]
    %v106 = vld [vmem:[%s6 + $0x60] sm:$0xff]
    %v107 = vld [vmem:[%s6 + $0x68] sm:$0xff]
    %v108 = vld [vmem:[%s6 + $0x70] sm:$0xff]
    %v109 = vld [vmem:[%s6 + $0x78] sm:$0xff]
    %vm110 = vcmask 261120
    %v112 = vsel %vm110, %v90, 0
    %v115 = vsel %vm110, %v91, 0
    %v118 = vsel %vm110, %v92, 0
    %v121 = vsel %vm110, %v93, 0
    %123 = vmatprep.subr.mxu0 0.0
    %124 = vmatpush1.msra.mxu0 0.0
    %125 = vmatprep.subr.mxu0 0.0
    %126 = vmatpush1.msra.mxu0 0.0
    %127 = vmatprep.subr.mxu0 0.0
    %128 = vmatpush1.msra.mxu0 0.0
    %129 = vmatprep.subr.mxu0 0.0
    %130 = vmatpush1.msra.mxu0 0.0
    %131 = vmatprep.subr.mxu0 0.0
    %132 = vmatpush1.msra.mxu0 0.0
    %133 = vmatprep.subr.mxu0 0.0
    %134 = vmatpush1.msra.mxu0 0.0
    %135 = vmatprep.subr.mxu0 0.0
    %136 = vmatpush1.msra.mxu0 0.0
    %137 = vmatprep.subr.mxu0 0.0
    %138 = vmatpush1.msra.mxu0 0.0
    %139 = vmatprep.subr.mxu0 0.0
    %140 = vmatpush1.msra.mxu0 0.0
    %141 = vmatprep.subr.mxu0 0.0
    %142 = vmatpush1.msra.mxu0 0.0
    %143 = vmatprep.subr.mxu0 0.0
    %144 = vmatpush1.msra.mxu0 0.0
    %145 = vmatprep.subr.mxu0 0.0
    %146 = vmatpush1.msra.mxu0 0.0
    %147 = vmatprep.subr.mxu0 %v107
    %148 = vmatpush1.msra.mxu0 %v106
    %149 = vmatprep.subr.mxu0 %v103
    %150 = vmatpush1.msra.mxu0 %v102
    %151 = vmatprep.subr.mxu0 %v99
    %152 = vmatpush1.msra.mxu0 %v98
    %153 = vmatprep.subr.mxu0 %v95
    %154 = vmatpush1.msra.mxu0 %v94
    %155 = vmatprep.subr.mxu0 0.0
    %156 = vmatpush2.msra.mxu0 0.0
    %157 = vmatprep.subr.mxu0 0.0
    %158 = vmatpush2.msra.mxu0 0.0
    %159 = vmatprep.subr.mxu0 0.0
    %160 = vmatpush2.msra.mxu0 0.0
    %161 = vmatprep.subr.mxu0 0.0
    %162 = vmatpush2.msra.mxu0 0.0
    %163 = vmatprep.subr.mxu0 0.0
    %164 = vmatpush2.msra.mxu0 0.0
    %165 = vmatprep.subr.mxu0 0.0
    %166 = vmatpush2.msra.mxu0 0.0
    %167 = vmatprep.subr.mxu0 0.0
    %168 = vmatpush2.msra.mxu0 0.0
    %169 = vmatprep.subr.mxu0 0.0
    %170 = vmatpush2.msra.mxu0 0.0
    %171 = vmatprep.subr.mxu0 0.0
    %172 = vmatpush2.msra.mxu0 0.0
    %173 = vmatprep.subr.mxu0 0.0
    %174 = vmatpush2.msra.mxu0 0.0
    %175 = vmatprep.subr.mxu0 0.0
    %176 = vmatpush2.msra.mxu0 0.0
    %177 = vmatprep.subr.mxu0 0.0
    %178 = vmatpush2.msra.mxu0 0.0
    %179 = vmatprep.subr.mxu0 0.0
    %180 = vmatpush2.msra.mxu0 0.0
    %181 = vmatprep.subr.mxu0 0.0
    %182 = vmatpush2.msra.mxu0 0.0
    %183 = vmatprep.subr.mxu0 0.0
    %184 = vmatpush2.msra.mxu0 0.0
    %185 = vmatprep.subr.mxu0 0.0
    %186 = vmatpush2.msra.mxu0 0.0
    %187 = vmatprep.mubr.f32.mxu0 0.0
    %188 = vmatmul.mubr.f32.gmra.mxu0 %v112
    %v189 = vpop.f32.mrf.mxu0
    %v190 = vadd.f32 0.0, %v189
    %v191 = vpop.f32.mrf.mxu0
    %v192 = vadd.f32 0.0, %v191
    %193 = vmatprep.mubr.f32.mxu0 0.0
    %194 = vmatmul.mubr.f32.gmra.mxu0 %v115
    %v195 = vpop.f32.mrf.mxu0
    %v196 = vadd.f32 0.0, %v195
    %v197 = vpop.f32.mrf.mxu0
    %v198 = vadd.f32 0.0, %v197
    %199 = vmatprep.mubr.f32.mxu0 0.0
    %200 = vmatmul.mubr.f32.gmra.mxu0 %v118
    %v201 = vpop.f32.mrf.mxu0
    %v202 = vadd.f32 0.0, %v201
    %v203 = vpop.f32.mrf.mxu0
    %v204 = vadd.f32 0.0, %v203
    %205 = vmatprep.mubr.f32.mxu0 0.0
    %206 = vmatmul.mubr.f32.gmra.mxu0 %v121
    %v207 = vpop.f32.mrf.mxu0
    %v208 = vadd.f32 0.0, %v207
    %v209 = vpop.f32.mrf.mxu0
    %v210 = vadd.f32 0.0, %v209
    %211 = vdwg.mxu0
    %212 = vmatprep.subr.mxu0 0.0
    %213 = vmatpush1.msra.mxu0 0.0
    %214 = vmatprep.subr.mxu0 0.0
    %215 = vmatpush1.msra.mxu0 0.0
    %216 = vmatprep.subr.mxu0 0.0
    %217 = vmatpush1.msra.mxu0 0.0
    %218 = vmatprep.subr.mxu0 0.0
    %219 = vmatpush1.msra.mxu0 0.0
    %220 = vmatprep.subr.mxu0 0.0
    %221 = vmatpush1.msra.mxu0 0.0
    %222 = vmatprep.subr.mxu0 0.0
    %223 = vmatpush1.msra.mxu0 0.0
    %224 = vmatprep.subr.mxu0 0.0
    %225 = vmatpush1.msra.mxu0 0.0
    %226 = vmatprep.subr.mxu0 0.0
    %227 = vmatpush1.msra.mxu0 0.0
    %228 = vmatprep.subr.mxu0 0.0
    %229 = vmatpush1.msra.mxu0 0.0
    %230 = vmatprep.subr.mxu0 0.0
    %231 = vmatpush1.msra.mxu0 0.0
    %232 = vmatprep.subr.mxu0 0.0
    %233 = vmatpush1.msra.mxu0 0.0
    %234 = vmatprep.subr.mxu0 0.0
    %235 = vmatpush1.msra.mxu0 0.0
    %236 = vmatprep.subr.mxu0 %v109
    %237 = vmatpush1.msra.mxu0 %v108
    %238 = vmatprep.subr.mxu0 %v105
    %239 = vmatpush1.msra.mxu0 %v104
    %240 = vmatprep.subr.mxu0 %v101
    %241 = vmatpush1.msra.mxu0 %v100
    %242 = vmatprep.subr.mxu0 %v97
    %243 = vmatpush1.msra.mxu0 %v96
    %244 = vmatprep.subr.mxu0 0.0
    %245 = vmatpush2.msra.mxu0 0.0
    %246 = vmatprep.subr.mxu0 0.0
    %247 = vmatpush2.msra.mxu0 0.0
    %248 = vmatprep.subr.mxu0 0.0
    %249 = vmatpush2.msra.mxu0 0.0
    %250 = vmatprep.subr.mxu0 0.0
    %251 = vmatpush2.msra.mxu0 0.0
    %252 = vmatprep.subr.mxu0 0.0
    %253 = vmatpush2.msra.mxu0 0.0
    %254 = vmatprep.subr.mxu0 0.0
    %255 = vmatpush2.msra.mxu0 0.0
    %256 = vmatprep.subr.mxu0 0.0
    %257 = vmatpush2.msra.mxu0 0.0
    %258 = vmatprep.subr.mxu0 0.0
    %259 = vmatpush2.msra.mxu0 0.0
    %260 = vmatprep.subr.mxu0 0.0
    %261 = vmatpush2.msra.mxu0 0.0
    %262 = vmatprep.subr.mxu0 0.0
    %263 = vmatpush2.msra.mxu0 0.0
    %264 = vmatprep.subr.mxu0 0.0
    %265 = vmatpush2.msra.mxu0 0.0
    %266 = vmatprep.subr.mxu0 0.0
    %267 = vmatpush2.msra.mxu0 0.0
    %268 = vmatprep.subr.mxu0 0.0
    %269 = vmatpush2.msra.mxu0 0.0
    %270 = vmatprep.subr.mxu0 0.0
    %271 = vmatpush2.msra.mxu0 0.0
    %272 = vmatprep.subr.mxu0 0.0
    %273 = vmatpush2.msra.mxu0 0.0
    %274 = vmatprep.subr.mxu0 0.0
    %275 = vmatpush2.msra.mxu0 0.0
    %276 = vmatprep.mubr.f32.mxu0 0.0
    %277 = vmatmul.mubr.f32.gmra.mxu0 %v112
    %v278 = vpop.f32.mrf.mxu0
    %v279 = vadd.f32 0.0, %v278
    %v280 = vpop.f32.mrf.mxu0
    %v281 = vadd.f32 0.0, %v280
    %282 = vmatprep.mubr.f32.mxu0 0.0
    %283 = vmatmul.mubr.f32.gmra.mxu0 %v115
    %v284 = vpop.f32.mrf.mxu0
    %v285 = vadd.f32 0.0, %v284
    %v286 = vpop.f32.mrf.mxu0
    %v287 = vadd.f32 0.0, %v286
    %288 = vmatprep.mubr.f32.mxu0 0.0
    %289 = vmatmul.mubr.f32.gmra.mxu0 %v118
    %v290 = vpop.f32.mrf.mxu0
    %v291 = vadd.f32 0.0, %v290
    %v292 = vpop.f32.mrf.mxu0
    %v293 = vadd.f32 0.0, %v292
    %294 = vmatprep.mubr.f32.mxu0 0.0
    %295 = vmatmul.mubr.f32.gmra.mxu0 %v121
    %v296 = vpop.f32.mrf.mxu0
    %v297 = vadd.f32 0.0, %v296
    %v298 = vpop.f32.mrf.mxu0
    %v299 = vadd.f32 0.0, %v298
    %300 = vdwg.mxu0
    %v301 = vld [vmem:[%s2] sm:$0x1]
    %v302 = vld [vmem:[%s2 + $0x1] sm:$0x1]
    %vm303 = vcmp.eq.f32.partialorder %v301, 0.0
    %vm304 = vcmp.eq.f32.partialorder %v302, 0.0
    %v305 = vsel %vm303, -1e+09, 0.0
    %v306 = vsel %vm304, -1e+09, 0.0
    %v309 = vlaneseq
    %v310 = vshrl.u32 %v309, 7
    %v311 = vsub.s32 0, %v310
    %v312 = vrot.slane %v305, %v311
    %v313 = vlaneseq
    %v314 = vshrl.u32 %v313, 7
    %v315 = vsub.s32 0, %v314
    %v316 = vrot.slane %v306, %v315
    %v319 = vld [vmem:[%s3] sm:$0xff]
    %v320 = vld [vmem:[%s3 + $0x8] sm:$0xff]
    %v321 = vld [vmem:[%s3 + $0x10] sm:$0xff]
    %v322 = vld [vmem:[%s3 + $0x18] sm:$0xff]
    %v323 = vld [vmem:[#allocation7] sm:$0xff]
    %v324 = vld [vmem:[#allocation7 + $0x8] sm:$0xff]
    %v325 = vld [vmem:[#allocation7 + $0x10] sm:$0xff]
    %v326 = vld [vmem:[#allocation7 + $0x18] sm:$0xff]
    %v327 = vld [vmem:[%s5] sm:$0xff]
    %v328 = vld [vmem:[%s5 + $0x8] sm:$0xff]
    %v329 = vld [vmem:[%s5 + $0x10] sm:$0xff]
    %v330 = vld [vmem:[%s5 + $0x18] sm:$0xff]
    %v331 = vld [vmem:[%s5 + $0x20] sm:$0xff]
    %v332 = vld [vmem:[%s5 + $0x28] sm:$0xff]
    %v333 = vld [vmem:[%s5 + $0x30] sm:$0xff]
    %v334 = vld [vmem:[%s5 + $0x38] sm:$0xff]
    %v335 = vld [vmem:[#allocation8] sm:$0xff]
    %v336 = vld [vmem:[#allocation8 + $0x8] sm:$0xff]
    %v337 = vlaneseq
    %v338 = vshrl.u32 %v337, 7
    %v339 = vsub.s32 3, %v338
    %v340 = vrot.slane %v335, %v339
    %v341 = vadd.f32 %v192, %v340
    %v342 = vadd.f32 %v198, %v340
    %v343 = vadd.f32 %v204, %v340
    %v344 = vadd.f32 %v210, %v340
    %v345 = vsel %vm110, %v88, 0.0
    %346 = vadd.xlane.f32.xlu0 %v345
    %v347 = vpop.xlane.xlu0 %346
    %v348 = vsel %vm110, %v89, 0.0
    %349 = vadd.xlane.f32.xlu0 %v348
    %v350 = vpop.xlane.xlu0 %349
    %v351 = vmul.f32 %v347, 0.03125
    %v352 = vmul.f32 %v350, 0.03125
    %v353 = vmul.f32 %v88, %v88
    %v354 = vmul.f32 %v89, %v89
    %v355 = vsel %vm110, %v353, 0.0
    %356 = vadd.xlane.f32.xlu0 %v355
    %v357 = vpop.xlane.xlu0 %356
    %v358 = vsel %vm110, %v354, 0.0
    %359 = vadd.xlane.f32.xlu0 %v358
    %v360 = vpop.xlane.xlu0 %359
    %v361 = vmul.f32 %v351, 32.0
    %v362 = vmul.f32 %v352, 32.0
    %v363 = vmul.f32 %v361, %v351
    %v364 = vmul.f32 %v362, %v352
    %v365 = vsub.f32 %v357, %v363
    %v366 = vsub.f32 %v360, %v364
    %v367 = vmul.f32 %v365, 0.032258064
    %v368 = vmul.f32 %v366, 0.032258064
    %v369 = vmax.f32 %v367, 0.0
    %v370 = vmax.f32 %v368, 0.0
    %v371 = vrsqrt.pop %v369
    %v372 = vmul.f32 %v369, %v371
    %vm373 = vcmp.eq.f32.partialorder %v369, inf
    %v374 = vsel %vm373, %v369, %v372
    %vm375 = vcmp.eq.f32.partialorder %v369, 0.0
    %v376 = vand.u32 %v369, 2147483648
    %v377 = vsel %vm375, %v376, %v374
    %v378 = vrsqrt.pop %v370
    %v379 = vmul.f32 %v370, %v378
    %vm380 = vcmp.eq.f32.partialorder %v370, inf
    %v381 = vsel %vm380, %v370, %v379
    %vm382 = vcmp.eq.f32.partialorder %v370, 0.0
    %v383 = vand.u32 %v370, 2147483648
    %v384 = vsel %vm382, %v383, %v381
    %v385 = vadd.f32 %v377, 1e-06
    %v386 = vadd.f32 %v384, 1e-06
    %v387 = vrcp.pop %v385
    %v388 = vmul.f32 1.0, %v387
    %v389 = vrcp.pop %v386
    %v390 = vmul.f32 1.0, %v389
    %v391 = vsub.f32 %v88, %v351
    %v392 = vsub.f32 %v89, %v352
    %v393 = vlaneseq
    %v394 = vshrl.u32 %v393, 7
    %v395 = vsub.s32 0, %v394
    %v396 = vrot.slane %v335, %v395
    %v397 = vmul.f32 %v396, %v391
    %v398 = vmul.f32 %v396, %v392
    %v399 = vmul.f32 %v397, %v388
    %v400 = vmul.f32 %v398, %v390
    %v401 = vlaneseq
    %v402 = vshrl.u32 %v401, 7
    %v403 = vsub.s32 1, %v402
    %v404 = vrot.slane %v335, %v403
    %v405 = vadd.f32 %v399, %v404
    %v406 = vadd.f32 %v400, %v404
    %v407 = vlaneseq
    %v408 = vshrl.u32 %v407, 7
    %v409 = vsub.s32 2, %v408
    %v410 = vrot.slane %v335, %v409
    %v412 = vsel %vm110, %v405, 0
    %v415 = vsel %vm110, %v406, 0
    %417 = vmatprep.subr.mxu0 0.0
    %418 = vmatpush1.msra.mxu0 0.0
    %419 = vmatprep.subr.mxu0 0.0
    %420 = vmatpush1.msra.mxu0 0.0
    %421 = vmatprep.subr.mxu0 0.0
    %422 = vmatpush1.msra.mxu0 0.0
    %423 = vmatprep.subr.mxu0 0.0
    %424 = vmatpush1.msra.mxu0 0.0
    %425 = vmatprep.subr.mxu0 0.0
    %426 = vmatpush1.msra.mxu0 0.0
    %427 = vmatprep.subr.mxu0 0.0
    %428 = vmatpush1.msra.mxu0 0.0
    %429 = vmatprep.subr.mxu0 0.0
    %430 = vmatpush1.msra.mxu0 0.0
    %431 = vmatprep.subr.mxu0 0.0
    %432 = vmatpush1.msra.mxu0 0.0
    %433 = vmatprep.subr.mxu0 0.0
    %434 = vmatpush1.msra.mxu0 0.0
    %435 = vmatprep.subr.mxu0 0.0
    %436 = vmatpush1.msra.mxu0 0.0
    %437 = vmatprep.subr.mxu0 0.0
    %438 = vmatpush1.msra.mxu0 0.0
    %439 = vmatprep.subr.mxu0 0.0
    %440 = vmatpush1.msra.mxu0 0.0
    %441 = vmatprep.subr.mxu0 0.0
    %442 = vmatpush1.msra.mxu0 %v322
    %443 = vmatprep.subr.mxu0 0.0
    %444 = vmatpush1.msra.mxu0 %v321
    %445 = vmatprep.subr.mxu0 0.0
    %446 = vmatpush1.msra.mxu0 %v320
    %447 = vmatprep.subr.mxu0 0.0
    %448 = vmatpush1.msra.mxu0 %v319
    %449 = vmatprep.subr.mxu0 0.0
    %450 = vmatpush2.msra.mxu0 0.0
    %451 = vmatprep.subr.mxu0 0.0
    %452 = vmatpush2.msra.mxu0 0.0
    %453 = vmatprep.subr.mxu0 0.0
    %454 = vmatpush2.msra.mxu0 0.0
    %455 = vmatprep.subr.mxu0 0.0
    %456 = vmatpush2.msra.mxu0 0.0
    %457 = vmatprep.subr.mxu0 0.0
    %458 = vmatpush2.msra.mxu0 0.0
    %459 = vmatprep.subr.mxu0 0.0
    %460 = vmatpush2.msra.mxu0 0.0
    %461 = vmatprep.subr.mxu0 0.0
    %462 = vmatpush2.msra.mxu0 0.0
    %463 = vmatprep.subr.mxu0 0.0
    %464 = vmatpush2.msra.mxu0 0.0
    %465 = vmatprep.subr.mxu0 0.0
    %466 = vmatpush2.msra.mxu0 0.0
    %467 = vmatprep.subr.mxu0 0.0
    %468 = vmatpush2.msra.mxu0 0.0
    %469 = vmatprep.subr.mxu0 0.0
    %470 = vmatpush2.msra.mxu0 0.0
    %471 = vmatprep.subr.mxu0 0.0
    %472 = vmatpush2.msra.mxu0 0.0
    %473 = vmatprep.subr.mxu0 0.0
    %474 = vmatpush2.msra.mxu0 0.0
    %475 = vmatprep.subr.mxu0 0.0
    %476 = vmatpush2.msra.mxu0 0.0
    %477 = vmatprep.subr.mxu0 0.0
    %478 = vmatpush2.msra.mxu0 0.0
    %479 = vmatprep.subr.mxu0 0.0
    %480 = vmatpush2.msra.mxu0 0.0
    %481 = vmatprep.mubr.f32.mxu0 0.0
    %482 = vmatmul.mubr.f32.gmra.mxu0 %v412
    %v483 = vpop.f32.mrf.mxu0
    %v484 = vadd.f32 %v410, %v483
    %v485 = vpop.f32.mrf.mxu0
    %486 = vmatprep.mubr.f32.mxu0 0.0
    %487 = vmatmul.mubr.f32.gmra.mxu0 %v415
    %v488 = vpop.f32.mrf.mxu0
    %v489 = vadd.f32 %v410, %v488
    %v490 = vpop.f32.mrf.mxu0
    %491 = vdwg.mxu0
    %vm492 = vcmask 64512
    %v494 = vsel %vm492, %v484, 0
    %v497 = vsel %vm492, %v341, 0
    %v500 = vsel %vm492, %v342, 0
    %502 = vmatprep.subr.mxu0 0.0
    %503 = vmatpush1.xpose.msra.mxu0 0.0
    %504 = vmatprep.subr.mxu0 0.0
    %505 = vmatpush1.xpose.msra.mxu0 0.0
    %506 = vmatprep.subr.mxu0 0.0
    %507 = vmatpush1.xpose.msra.mxu0 0.0
    %508 = vmatprep.subr.mxu0 0.0
    %509 = vmatpush1.xpose.msra.mxu0 0.0
    %510 = vmatprep.subr.mxu0 0.0
    %511 = vmatpush1.xpose.msra.mxu0 0.0
    %512 = vmatprep.subr.mxu0 0.0
    %513 = vmatpush1.xpose.msra.mxu0 0.0
    %514 = vmatprep.subr.mxu0 0.0
    %515 = vmatpush1.xpose.msra.mxu0 0.0
    %516 = vmatprep.subr.mxu0 0.0
    %517 = vmatpush1.xpose.msra.mxu0 0.0
    %518 = vmatprep.subr.mxu0 0.0
    %519 = vmatpush1.xpose.msra.mxu0 0.0
    %520 = vmatprep.subr.mxu0 0.0
    %521 = vmatpush1.xpose.msra.mxu0 0.0
    %522 = vmatprep.subr.mxu0 0.0
    %523 = vmatpush1.xpose.msra.mxu0 0.0
    %524 = vmatprep.subr.mxu0 0.0
    %525 = vmatpush1.xpose.msra.mxu0 0.0
    %526 = vmatprep.subr.mxu0 0.0
    %527 = vmatpush1.xpose.msra.mxu0 0.0
    %528 = vmatprep.subr.mxu0 0.0
    %529 = vmatpush1.xpose.msra.mxu0 0.0
    %530 = vmatprep.subr.mxu0 0.0
    %531 = vmatpush1.xpose.msra.mxu0 %v500
    %532 = vmatprep.subr.mxu0 0.0
    %533 = vmatpush1.xpose.msra.mxu0 %v497
    %534 = vmatprep.subr.mxu0 0.0
    %535 = vmatpush2.xpose.msra.mxu0 0.0
    %536 = vmatprep.subr.mxu0 0.0
    %537 = vmatpush2.xpose.msra.mxu0 0.0
    %538 = vmatprep.subr.mxu0 0.0
    %539 = vmatpush2.xpose.msra.mxu0 0.0
    %540 = vmatprep.subr.mxu0 0.0
    %541 = vmatpush2.xpose.msra.mxu0 0.0
    %542 = vmatprep.subr.mxu0 0.0
    %543 = vmatpush2.xpose.msra.mxu0 0.0
    %544 = vmatprep.subr.mxu0 0.0
    %545 = vmatpush2.xpose.msra.mxu0 0.0
    %546 = vmatprep.subr.mxu0 0.0
    %547 = vmatpush2.xpose.msra.mxu0 0.0
    %548 = vmatprep.subr.mxu0 0.0
    %549 = vmatpush2.xpose.msra.mxu0 0.0
    %550 = vmatprep.subr.mxu0 0.0
    %551 = vmatpush2.xpose.msra.mxu0 0.0
    %552 = vmatprep.subr.mxu0 0.0
    %553 = vmatpush2.xpose.msra.mxu0 0.0
    %554 = vmatprep.subr.mxu0 0.0
    %555 = vmatpush2.xpose.msra.mxu0 0.0
    %556 = vmatprep.subr.mxu0 0.0
    %557 = vmatpush2.xpose.msra.mxu0 0.0
    %558 = vmatprep.subr.mxu0 0.0
    %559 = vmatpush2.xpose.msra.mxu0 0.0
    %560 = vmatprep.subr.mxu0 0.0
    %561 = vmatpush2.xpose.msra.mxu0 0.0
    %562 = vmatprep.subr.mxu0 0.0
    %563 = vmatpush2.xpose.msra.mxu0 0.0
    %564 = vmatprep.subr.mxu0 0.0
    %565 = vmatpush2.xpose.msra.mxu0 0.0
    %566 = vmatprep.mubr.f32.mxu0 0.0
    %567 = vmatmul.mubr.f32.gmra.mxu0 %v494
    %v568 = vpop.f32.mrf.mxu0
    %v569 = vadd.f32 0.0, %v568
    %v570 = vpop.f32.mrf.mxu0
    %571 = vdwg.mxu0
    %v573 = vsel %vm492, %v489, 0
    %v576 = vsel %vm492, %v343, 0
    %v579 = vsel %vm492, %v344, 0
    %581 = vmatprep.subr.mxu0 0.0
    %582 = vmatpush1.xpose.msra.mxu0 0.0
    %583 = vmatprep.subr.mxu0 0.0
    %584 = vmatpush1.xpose.msra.mxu0 0.0
    %585 = vmatprep.subr.mxu0 0.0
    %586 = vmatpush1.xpose.msra.mxu0 0.0
    %587 = vmatprep.subr.mxu0 0.0
    %588 = vmatpush1.xpose.msra.mxu0 0.0
    %589 = vmatprep.subr.mxu0 0.0
    %590 = vmatpush1.xpose.msra.mxu0 0.0
    %591 = vmatprep.subr.mxu0 0.0
    %592 = vmatpush1.xpose.msra.mxu0 0.0
    %593 = vmatprep.subr.mxu0 0.0
    %594 = vmatpush1.xpose.msra.mxu0 0.0
    %595 = vmatprep.subr.mxu0 0.0
    %596 = vmatpush1.xpose.msra.mxu0 0.0
    %597 = vmatprep.subr.mxu0 0.0
    %598 = vmatpush1.xpose.msra.mxu0 0.0
    %599 = vmatprep.subr.mxu0 0.0
    %600 = vmatpush1.xpose.msra.mxu0 0.0
    %601 = vmatprep.subr.mxu0 0.0
    %602 = vmatpush1.xpose.msra.mxu0 0.0
    %603 = vmatprep.subr.mxu0 0.0
    %604 = vmatpush1.xpose.msra.mxu0 0.0
    %605 = vmatprep.subr.mxu0 0.0
    %606 = vmatpush1.xpose.msra.mxu0 0.0
    %607 = vmatprep.subr.mxu0 0.0
    %608 = vmatpush1.xpose.msra.mxu0 0.0
    %609 = vmatprep.subr.mxu0 0.0
    %610 = vmatpush1.xpose.msra.mxu0 %v579
    %611 = vmatprep.subr.mxu0 0.0
    %612 = vmatpush1.xpose.msra.mxu0 %v576
    %613 = vmatprep.subr.mxu0 0.0
    %614 = vmatpush2.xpose.msra.mxu0 0.0
    %615 = vmatprep.subr.mxu0 0.0
    %616 = vmatpush2.xpose.msra.mxu0 0.0
    %617 = vmatprep.subr.mxu0 0.0
    %618 = vmatpush2.xpose.msra.mxu0 0.0
    %619 = vmatprep.subr.mxu0 0.0
    %620 = vmatpush2.xpose.msra.mxu0 0.0
    %621 = vmatprep.subr.mxu0 0.0
    %622 = vmatpush2.xpose.msra.mxu0 0.0
    %623 = vmatprep.subr.mxu0 0.0
    %624 = vmatpush2.xpose.msra.mxu0 0.0
    %625 = vmatprep.subr.mxu0 0.0
    %626 = vmatpush2.xpose.msra.mxu0 0.0
    %627 = vmatprep.subr.mxu0 0.0
    %628 = vmatpush2.xpose.msra.mxu0 0.0
    %629 = vmatprep.subr.mxu0 0.0
    %630 = vmatpush2.xpose.msra.mxu0 0.0
    %631 = vmatprep.subr.mxu0 0.0
    %632 = vmatpush2.xpose.msra.mxu0 0.0
    %633 = vmatprep.subr.mxu0 0.0
    %634 = vmatpush2.xpose.msra.mxu0 0.0
    %635 = vmatprep.subr.mxu0 0.0
    %636 = vmatpush2.xpose.msra.mxu0 0.0
    %637 = vmatprep.subr.mxu0 0.0
    %638 = vmatpush2.xpose.msra.mxu0 0.0
    %639 = vmatprep.subr.mxu0 0.0
    %640 = vmatpush2.xpose.msra.mxu0 0.0
    %641 = vmatprep.subr.mxu0 0.0
    %642 = vmatpush2.xpose.msra.mxu0 0.0
    %643 = vmatprep.subr.mxu0 0.0
    %644 = vmatpush2.xpose.msra.mxu0 0.0
    %645 = vmatprep.mubr.f32.mxu0 0.0
    %646 = vmatmul.mubr.f32.gmra.mxu0 %v573
    %v647 = vpop.f32.mrf.mxu0
    %v648 = vadd.f32 0.0, %v647
    %v649 = vpop.f32.mrf.mxu0
    %650 = vdwg.mxu0
    %651 = vrot.lane.b32.xlu0 %v484, 120
    %v652 = vpop.permute.xlu0 %651
    %653 = vrot.lane.b32.xlu0 %v341, 120
    %v654 = vpop.permute.xlu0 %653
    %655 = vrot.lane.b32.xlu0 %v342, 120
    %v656 = vpop.permute.xlu0 %655
    %v657 = vsel %vm492, %v652, 0
    %v659 = vsel %vm492, %v654, 0
    %v661 = vsel %vm492, %v656, 0
    %663 = vmatprep.subr.mxu0 0.0
    %664 = vmatpush1.xpose.msra.mxu0 0.0
    %665 = vmatprep.subr.mxu0 0.0
    %666 = vmatpush1.xpose.msra.mxu0 0.0
    %667 = vmatprep.subr.mxu0 0.0
    %668 = vmatpush1.xpose.msra.mxu0 0.0
    %669 = vmatprep.subr.mxu0 0.0
    %670 = vmatpush1.xpose.msra.mxu0 0.0
    %671 = vmatprep.subr.mxu0 0.0
    %672 = vmatpush1.xpose.msra.mxu0 0.0
    %673 = vmatprep.subr.mxu0 0.0
    %674 = vmatpush1.xpose.msra.mxu0 0.0
    %675 = vmatprep.subr.mxu0 0.0
    %676 = vmatpush1.xpose.msra.mxu0 0.0
    %677 = vmatprep.subr.mxu0 0.0
    %678 = vmatpush1.xpose.msra.mxu0 0.0
    %679 = vmatprep.subr.mxu0 0.0
    %680 = vmatpush1.xpose.msra.mxu0 0.0
    %681 = vmatprep.subr.mxu0 0.0
    %682 = vmatpush1.xpose.msra.mxu0 0.0
    %683 = vmatprep.subr.mxu0 0.0
    %684 = vmatpush1.xpose.msra.mxu0 0.0
    %685 = vmatprep.subr.mxu0 0.0
    %686 = vmatpush1.xpose.msra.mxu0 0.0
    %687 = vmatprep.subr.mxu0 0.0
    %688 = vmatpush1.xpose.msra.mxu0 0.0
    %689 = vmatprep.subr.mxu0 0.0
    %690 = vmatpush1.xpose.msra.mxu0 0.0
    %691 = vmatprep.subr.mxu0 0.0
    %692 = vmatpush1.xpose.msra.mxu0 %v661
    %693 = vmatprep.subr.mxu0 0.0
    %694 = vmatpush1.xpose.msra.mxu0 %v659
    %695 = vmatprep.subr.mxu0 0.0
    %696 = vmatpush2.xpose.msra.mxu0 0.0
    %697 = vmatprep.subr.mxu0 0.0
    %698 = vmatpush2.xpose.msra.mxu0 0.0
    %699 = vmatprep.subr.mxu0 0.0
    %700 = vmatpush2.xpose.msra.mxu0 0.0
    %701 = vmatprep.subr.mxu0 0.0
    %702 = vmatpush2.xpose.msra.mxu0 0.0
    %703 = vmatprep.subr.mxu0 0.0
    %704 = vmatpush2.xpose.msra.mxu0 0.0
    %705 = vmatprep.subr.mxu0 0.0
    %706 = vmatpush2.xpose.msra.mxu0 0.0
    %707 = vmatprep.subr.mxu0 0.0
    %708 = vmatpush2.xpose.msra.mxu0 0.0
    %709 = vmatprep.subr.mxu0 0.0
    %710 = vmatpush2.xpose.msra.mxu0 0.0
    %711 = vmatprep.subr.mxu0 0.0
    %712 = vmatpush2.xpose.msra.mxu0 0.0
    %713 = vmatprep.subr.mxu0 0.0
    %714 = vmatpush2.xpose.msra.mxu0 0.0
    %715 = vmatprep.subr.mxu0 0.0
    %716 = vmatpush2.xpose.msra.mxu0 0.0
    %717 = vmatprep.subr.mxu0 0.0
    %718 = vmatpush2.xpose.msra.mxu0 0.0
    %719 = vmatprep.subr.mxu0 0.0
    %720 = vmatpush2.xpose.msra.mxu0 0.0
    %721 = vmatprep.subr.mxu0 0.0
    %722 = vmatpush2.xpose.msra.mxu0 0.0
    %723 = vmatprep.subr.mxu0 0.0
    %724 = vmatpush2.xpose.msra.mxu0 0.0
    %725 = vmatprep.subr.mxu0 0.0
    %726 = vmatpush2.xpose.msra.mxu0 0.0
    %727 = vmatprep.mubr.f32.mxu0 0.0
    %728 = vmatmul.mubr.f32.gmra.mxu0 %v657
    %v729 = vpop.f32.mrf.mxu0
    %v730 = vadd.f32 0.0, %v729
    %v731 = vpop.f32.mrf.mxu0
    %732 = vdwg.mxu0
    %733 = vrot.lane.b32.xlu0 %v489, 120
    %v734 = vpop.permute.xlu0 %733
    %735 = vrot.lane.b32.xlu0 %v343, 120
    %v736 = vpop.permute.xlu0 %735
    %737 = vrot.lane.b32.xlu0 %v344, 120
    %v738 = vpop.permute.xlu0 %737
    %v739 = vsel %vm492, %v734, 0
    %v741 = vsel %vm492, %v736, 0
    %v743 = vsel %vm492, %v738, 0
    %745 = vmatprep.subr.mxu0 0.0
    %746 = vmatpush1.xpose.msra.mxu0 0.0
    %747 = vmatprep.subr.mxu0 0.0
    %748 = vmatpush1.xpose.msra.mxu0 0.0
    %749 = vmatprep.subr.mxu0 0.0
    %750 = vmatpush1.xpose.msra.mxu0 0.0
    %751 = vmatprep.subr.mxu0 0.0
    %752 = vmatpush1.xpose.msra.mxu0 0.0
    %753 = vmatprep.subr.mxu0 0.0
    %754 = vmatpush1.xpose.msra.mxu0 0.0
    %755 = vmatprep.subr.mxu0 0.0
    %756 = vmatpush1.xpose.msra.mxu0 0.0
    %757 = vmatprep.subr.mxu0 0.0
    %758 = vmatpush1.xpose.msra.mxu0 0.0
    %759 = vmatprep.subr.mxu0 0.0
    %760 = vmatpush1.xpose.msra.mxu0 0.0
    %761 = vmatprep.subr.mxu0 0.0
    %762 = vmatpush1.xpose.msra.mxu0 0.0
    %763 = vmatprep.subr.mxu0 0.0
    %764 = vmatpush1.xpose.msra.mxu0 0.0
    %765 = vmatprep.subr.mxu0 0.0
    %766 = vmatpush1.xpose.msra.mxu0 0.0
    %767 = vmatprep.subr.mxu0 0.0
    %768 = vmatpush1.xpose.msra.mxu0 0.0
    %769 = vmatprep.subr.mxu0 0.0
    %770 = vmatpush1.xpose.msra.mxu0 0.0
    %771 = vmatprep.subr.mxu0 0.0
    %772 = vmatpush1.xpose.msra.mxu0 0.0
    %773 = vmatprep.subr.mxu0 0.0
    %774 = vmatpush1.xpose.msra.mxu0 %v743
    %775 = vmatprep.subr.mxu0 0.0
    %776 = vmatpush1.xpose.msra.mxu0 %v741
    %777 = vmatprep.subr.mxu0 0.0
    %778 = vmatpush2.xpose.msra.mxu0 0.0
    %779 = vmatprep.subr.mxu0 0.0
    %780 = vmatpush2.xpose.msra.mxu0 0.0
    %781 = vmatprep.subr.mxu0 0.0
    %782 = vmatpush2.xpose.msra.mxu0 0.0
    %783 = vmatprep.subr.mxu0 0.0
    %784 = vmatpush2.xpose.msra.mxu0 0.0
    %785 = vmatprep.subr.mxu0 0.0
    %786 = vmatpush2.xpose.msra.mxu0 0.0
    %787 = vmatprep.subr.mxu0 0.0
    %788 = vmatpush2.xpose.msra.mxu0 0.0
    %789 = vmatprep.subr.mxu0 0.0
    %790 = vmatpush2.xpose.msra.mxu0 0.0
    %791 = vmatprep.subr.mxu0 0.0
    %792 = vmatpush2.xpose.msra.mxu0 0.0
    %793 = vmatprep.subr.mxu0 0.0
    %794 = vmatpush2.xpose.msra.mxu0 0.0
    %795 = vmatprep.subr.mxu0 0.0
    %796 = vmatpush2.xpose.msra.mxu0 0.0
    %797 = vmatprep.subr.mxu0 0.0
    %798 = vmatpush2.xpose.msra.mxu0 0.0
    %799 = vmatprep.subr.mxu0 0.0
    %800 = vmatpush2.xpose.msra.mxu0 0.0
    %801 = vmatprep.subr.mxu0 0.0
    %802 = vmatpush2.xpose.msra.mxu0 0.0
    %803 = vmatprep.subr.mxu0 0.0
    %804 = vmatpush2.xpose.msra.mxu0 0.0
    %805 = vmatprep.subr.mxu0 0.0
    %806 = vmatpush2.xpose.msra.mxu0 0.0
    %807 = vmatprep.subr.mxu0 0.0
    %808 = vmatpush2.xpose.msra.mxu0 0.0
    %809 = vmatprep.mubr.f32.mxu0 0.0
    %810 = vmatmul.mubr.f32.gmra.mxu0 %v739
    %v811 = vpop.f32.mrf.mxu0
    %v812 = vadd.f32 0.0, %v811
    %v813 = vpop.f32.mrf.mxu0
    %814 = vdwg.mxu0
    %815 = vrot.lane.b32.xlu0 %v484, 112
    %v816 = vpop.permute.xlu0 %815
    %817 = vrot.lane.b32.xlu0 %v341, 112
    %v818 = vpop.permute.xlu0 %817
    %819 = vrot.lane.b32.xlu0 %v342, 112
    %v820 = vpop.permute.xlu0 %819
    %v821 = vsel %vm492, %v816, 0
    %v823 = vsel %vm492, %v818, 0
    %v825 = vsel %vm492, %v820, 0
    %827 = vmatprep.subr.mxu0 0.0
    %828 = vmatpush1.xpose.msra.mxu0 0.0
    %829 = vmatprep.subr.mxu0 0.0
    %830 = vmatpush1.xpose.msra.mxu0 0.0
    %831 = vmatprep.subr.mxu0 0.0
    %832 = vmatpush1.xpose.msra.mxu0 0.0
    %833 = vmatprep.subr.mxu0 0.0
    %834 = vmatpush1.xpose.msra.mxu0 0.0
    %835 = vmatprep.subr.mxu0 0.0
    %836 = vmatpush1.xpose.msra.mxu0 0.0
    %837 = vmatprep.subr.mxu0 0.0
    %838 = vmatpush1.xpose.msra.mxu0 0.0
    %839 = vmatprep.subr.mxu0 0.0
    %840 = vmatpush1.xpose.msra.mxu0 0.0
    %841 = vmatprep.subr.mxu0 0.0
    %842 = vmatpush1.xpose.msra.mxu0 0.0
    %843 = vmatprep.subr.mxu0 0.0
    %844 = vmatpush1.xpose.msra.mxu0 0.0
    %845 = vmatprep.subr.mxu0 0.0
    %846 = vmatpush1.xpose.msra.mxu0 0.0
    %847 = vmatprep.subr.mxu0 0.0
    %848 = vmatpush1.xpose.msra.mxu0 0.0
    %849 = vmatprep.subr.mxu0 0.0
    %850 = vmatpush1.xpose.msra.mxu0 0.0
    %851 = vmatprep.subr.mxu0 0.0
    %852 = vmatpush1.xpose.msra.mxu0 0.0
    %853 = vmatprep.subr.mxu0 0.0
    %854 = vmatpush1.xpose.msra.mxu0 0.0
    %855 = vmatprep.subr.mxu0 0.0
    %856 = vmatpush1.xpose.msra.mxu0 %v825
    %857 = vmatprep.subr.mxu0 0.0
    %858 = vmatpush1.xpose.msra.mxu0 %v823
    %859 = vmatprep.subr.mxu0 0.0
    %860 = vmatpush2.xpose.msra.mxu0 0.0
    %861 = vmatprep.subr.mxu0 0.0
    %862 = vmatpush2.xpose.msra.mxu0 0.0
    %863 = vmatprep.subr.mxu0 0.0
    %864 = vmatpush2.xpose.msra.mxu0 0.0
    %865 = vmatprep.subr.mxu0 0.0
    %866 = vmatpush2.xpose.msra.mxu0 0.0
    %867 = vmatprep.subr.mxu0 0.0
    %868 = vmatpush2.xpose.msra.mxu0 0.0
    %869 = vmatprep.subr.mxu0 0.0
    %870 = vmatpush2.xpose.msra.mxu0 0.0
    %871 = vmatprep.subr.mxu0 0.0
    %872 = vmatpush2.xpose.msra.mxu0 0.0
    %873 = vmatprep.subr.mxu0 0.0
    %874 = vmatpush2.xpose.msra.mxu0 0.0
    %875 = vmatprep.subr.mxu0 0.0
    %876 = vmatpush2.xpose.msra.mxu0 0.0
    %877 = vmatprep.subr.mxu0 0.0
    %878 = vmatpush2.xpose.msra.mxu0 0.0
    %879 = vmatprep.subr.mxu0 0.0
    %880 = vmatpush2.xpose.msra.mxu0 0.0
    %881 = vmatprep.subr.mxu0 0.0
    %882 = vmatpush2.xpose.msra.mxu0 0.0
    %883 = vmatprep.subr.mxu0 0.0
    %884 = vmatpush2.xpose.msra.mxu0 0.0
    %885 = vmatprep.subr.mxu0 0.0
    %886 = vmatpush2.xpose.msra.mxu0 0.0
    %887 = vmatprep.subr.mxu0 0.0
    %888 = vmatpush2.xpose.msra.mxu0 0.0
    %889 = vmatprep.subr.mxu0 0.0
    %890 = vmatpush2.xpose.msra.mxu0 0.0
    %891 = vmatprep.mubr.f32.mxu0 0.0
    %892 = vmatmul.mubr.f32.gmra.mxu0 %v821
    %v893 = vpop.f32.mrf.mxu0
    %v894 = vadd.f32 0.0, %v893
    %v895 = vpop.f32.mrf.mxu0
    %896 = vdwg.mxu0
    %897 = vrot.lane.b32.xlu0 %v489, 112
    %v898 = vpop.permute.xlu0 %897
    %899 = vrot.lane.b32.xlu0 %v343, 112
    %v900 = vpop.permute.xlu0 %899
    %901 = vrot.lane.b32.xlu0 %v344, 112
    %v902 = vpop.permute.xlu0 %901
    %v903 = vsel %vm492, %v898, 0
    %v905 = vsel %vm492, %v900, 0
    %v907 = vsel %vm492, %v902, 0
    %909 = vmatprep.subr.mxu0 0.0
    %910 = vmatpush1.xpose.msra.mxu0 0.0
    %911 = vmatprep.subr.mxu0 0.0
    %912 = vmatpush1.xpose.msra.mxu0 0.0
    %913 = vmatprep.subr.mxu0 0.0
    %914 = vmatpush1.xpose.msra.mxu0 0.0
    %915 = vmatprep.subr.mxu0 0.0
    %916 = vmatpush1.xpose.msra.mxu0 0.0
    %917 = vmatprep.subr.mxu0 0.0
    %918 = vmatpush1.xpose.msra.mxu0 0.0
    %919 = vmatprep.subr.mxu0 0.0
    %920 = vmatpush1.xpose.msra.mxu0 0.0
    %921 = vmatprep.subr.mxu0 0.0
    %922 = vmatpush1.xpose.msra.mxu0 0.0
    %923 = vmatprep.subr.mxu0 0.0
    %924 = vmatpush1.xpose.msra.mxu0 0.0
    %925 = vmatprep.subr.mxu0 0.0
    %926 = vmatpush1.xpose.msra.mxu0 0.0
    %927 = vmatprep.subr.mxu0 0.0
    %928 = vmatpush1.xpose.msra.mxu0 0.0
    %929 = vmatprep.subr.mxu0 0.0
    %930 = vmatpush1.xpose.msra.mxu0 0.0
    %931 = vmatprep.subr.mxu0 0.0
    %932 = vmatpush1.xpose.msra.mxu0 0.0
    %933 = vmatprep.subr.mxu0 0.0
    %934 = vmatpush1.xpose.msra.mxu0 0.0
    %935 = vmatprep.subr.mxu0 0.0
    %936 = vmatpush1.xpose.msra.mxu0 0.0
    %937 = vmatprep.subr.mxu0 0.0
    %938 = vmatpush1.xpose.msra.mxu0 %v907
    %939 = vmatprep.subr.mxu0 0.0
    %940 = vmatpush1.xpose.msra.mxu0 %v905
    %941 = vmatprep.subr.mxu0 0.0
    %942 = vmatpush2.xpose.msra.mxu0 0.0
    %943 = vmatprep.subr.mxu0 0.0
    %944 = vmatpush2.xpose.msra.mxu0 0.0
    %945 = vmatprep.subr.mxu0 0.0
    %946 = vmatpush2.xpose.msra.mxu0 0.0
    %947 = vmatprep.subr.mxu0 0.0
    %948 = vmatpush2.xpose.msra.mxu0 0.0
    %949 = vmatprep.subr.mxu0 0.0
    %950 = vmatpush2.xpose.msra.mxu0 0.0
    %951 = vmatprep.subr.mxu0 0.0
    %952 = vmatpush2.xpose.msra.mxu0 0.0
    %953 = vmatprep.subr.mxu0 0.0
    %954 = vmatpush2.xpose.msra.mxu0 0.0
    %955 = vmatprep.subr.mxu0 0.0
    %956 = vmatpush2.xpose.msra.mxu0 0.0
    %957 = vmatprep.subr.mxu0 0.0
    %958 = vmatpush2.xpose.msra.mxu0 0.0
    %959 = vmatprep.subr.mxu0 0.0
    %960 = vmatpush2.xpose.msra.mxu0 0.0
    %961 = vmatprep.subr.mxu0 0.0
    %962 = vmatpush2.xpose.msra.mxu0 0.0
    %963 = vmatprep.subr.mxu0 0.0
    %964 = vmatpush2.xpose.msra.mxu0 0.0
    %965 = vmatprep.subr.mxu0 0.0
    %966 = vmatpush2.xpose.msra.mxu0 0.0
    %967 = vmatprep.subr.mxu0 0.0
    %968 = vmatpush2.xpose.msra.mxu0 0.0
    %969 = vmatprep.subr.mxu0 0.0
    %970 = vmatpush2.xpose.msra.mxu0 0.0
    %971 = vmatprep.subr.mxu0 0.0
    %972 = vmatpush2.xpose.msra.mxu0 0.0
    %973 = vmatprep.mubr.f32.mxu0 0.0
    %974 = vmatmul.mubr.f32.gmra.mxu0 %v903
    %v975 = vpop.f32.mrf.mxu0
    %v976 = vadd.f32 0.0, %v975
    %v977 = vpop.f32.mrf.mxu0
    %978 = vdwg.mxu0
    %979 = vrot.lane.b32.xlu0 %v484, 104
    %v980 = vpop.permute.xlu0 %979
    %981 = vrot.lane.b32.xlu0 %v341, 104
    %v982 = vpop.permute.xlu0 %981
    %983 = vrot.lane.b32.xlu0 %v342, 104
    %v984 = vpop.permute.xlu0 %983
    %v985 = vsel %vm492, %v980, 0
    %v987 = vsel %vm492, %v982, 0
    %v989 = vsel %vm492, %v984, 0
    %991 = vmatprep.subr.mxu0 0.0
    %992 = vmatpush1.xpose.msra.mxu0 0.0
    %993 = vmatprep.subr.mxu0 0.0
    %994 = vmatpush1.xpose.msra.mxu0 0.0
    %995 = vmatprep.subr.mxu0 0.0
    %996 = vmatpush1.xpose.msra.mxu0 0.0
    %997 = vmatprep.subr.mxu0 0.0
    %998 = vmatpush1.xpose.msra.mxu0 0.0
    %999 = vmatprep.subr.mxu0 0.0
    %1000 = vmatpush1.xpose.msra.mxu0 0.0
    %1001 = vmatprep.subr.mxu0 0.0
    %1002 = vmatpush1.xpose.msra.mxu0 0.0
    %1003 = vmatprep.subr.mxu0 0.0
    %1004 = vmatpush1.xpose.msra.mxu0 0.0
    %1005 = vmatprep.subr.mxu0 0.0
    %1006 = vmatpush1.xpose.msra.mxu0 0.0
    %1007 = vmatprep.subr.mxu0 0.0
    %1008 = vmatpush1.xpose.msra.mxu0 0.0
    %1009 = vmatprep.subr.mxu0 0.0
    %1010 = vmatpush1.xpose.msra.mxu0 0.0
    %1011 = vmatprep.subr.mxu0 0.0
    %1012 = vmatpush1.xpose.msra.mxu0 0.0
    %1013 = vmatprep.subr.mxu0 0.0
    %1014 = vmatpush1.xpose.msra.mxu0 0.0
    %1015 = vmatprep.subr.mxu0 0.0
    %1016 = vmatpush1.xpose.msra.mxu0 0.0
    %1017 = vmatprep.subr.mxu0 0.0
    %1018 = vmatpush1.xpose.msra.mxu0 0.0
    %1019 = vmatprep.subr.mxu0 0.0
    %1020 = vmatpush1.xpose.msra.mxu0 %v989
    %1021 = vmatprep.subr.mxu0 0.0
    %1022 = vmatpush1.xpose.msra.mxu0 %v987
    %1023 = vmatprep.subr.mxu0 0.0
    %1024 = vmatpush2.xpose.msra.mxu0 0.0
    %1025 = vmatprep.subr.mxu0 0.0
    %1026 = vmatpush2.xpose.msra.mxu0 0.0
    %1027 = vmatprep.subr.mxu0 0.0
    %1028 = vmatpush2.xpose.msra.mxu0 0.0
    %1029 = vmatprep.subr.mxu0 0.0
    %1030 = vmatpush2.xpose.msra.mxu0 0.0
    %1031 = vmatprep.subr.mxu0 0.0
    %1032 = vmatpush2.xpose.msra.mxu0 0.0
    %1033 = vmatprep.subr.mxu0 0.0
    %1034 = vmatpush2.xpose.msra.mxu0 0.0
    %1035 = vmatprep.subr.mxu0 0.0
    %1036 = vmatpush2.xpose.msra.mxu0 0.0
    %1037 = vmatprep.subr.mxu0 0.0
    %1038 = vmatpush2.xpose.msra.mxu0 0.0
    %1039 = vmatprep.subr.mxu0 0.0
    %1040 = vmatpush2.xpose.msra.mxu0 0.0
    %1041 = vmatprep.subr.mxu0 0.0
    %1042 = vmatpush2.xpose.msra.mxu0 0.0
    %1043 = vmatprep.subr.mxu0 0.0
    %1044 = vmatpush2.xpose.msra.mxu0 0.0
    %1045 = vmatprep.subr.mxu0 0.0
    %1046 = vmatpush2.xpose.msra.mxu0 0.0
    %1047 = vmatprep.subr.mxu0 0.0
    %1048 = vmatpush2.xpose.msra.mxu0 0.0
    %1049 = vmatprep.subr.mxu0 0.0
    %1050 = vmatpush2.xpose.msra.mxu0 0.0
    %1051 = vmatprep.subr.mxu0 0.0
    %1052 = vmatpush2.xpose.msra.mxu0 0.0
    %1053 = vmatprep.subr.mxu0 0.0
    %1054 = vmatpush2.xpose.msra.mxu0 0.0
    %1055 = vmatprep.mubr.f32.mxu0 0.0
    %1056 = vmatmul.mubr.f32.gmra.mxu0 %v985
    %v1057 = vpop.f32.mrf.mxu0
    %v1058 = vadd.f32 0.0, %v1057
    %v1059 = vpop.f32.mrf.mxu0
    %1060 = vdwg.mxu0
    %1061 = vrot.lane.b32.xlu0 %v489, 104
    %v1062 = vpop.permute.xlu0 %1061
    %1063 = vrot.lane.b32.xlu0 %v343, 104
    %v1064 = vpop.permute.xlu0 %1063
    %1065 = vrot.lane.b32.xlu0 %v344, 104
    %v1066 = vpop.permute.xlu0 %1065
    %v1067 = vsel %vm492, %v1062, 0
    %v1069 = vsel %vm492, %v1064, 0
    %v1071 = vsel %vm492, %v1066, 0
    %1073 = vmatprep.subr.mxu0 0.0
    %1074 = vmatpush1.xpose.msra.mxu0 0.0
    %1075 = vmatprep.subr.mxu0 0.0
    %1076 = vmatpush1.xpose.msra.mxu0 0.0
    %1077 = vmatprep.subr.mxu0 0.0
    %1078 = vmatpush1.xpose.msra.mxu0 0.0
    %1079 = vmatprep.subr.mxu0 0.0
    %1080 = vmatpush1.xpose.msra.mxu0 0.0
    %1081 = vmatprep.subr.mxu0 0.0
    %1082 = vmatpush1.xpose.msra.mxu0 0.0
    %1083 = vmatprep.subr.mxu0 0.0
    %1084 = vmatpush1.xpose.msra.mxu0 0.0
    %1085 = vmatprep.subr.mxu0 0.0
    %1086 = vmatpush1.xpose.msra.mxu0 0.0
    %1087 = vmatprep.subr.mxu0 0.0
    %1088 = vmatpush1.xpose.msra.mxu0 0.0
    %1089 = vmatprep.subr.mxu0 0.0
    %1090 = vmatpush1.xpose.msra.mxu0 0.0
    %1091 = vmatprep.subr.mxu0 0.0
    %1092 = vmatpush1.xpose.msra.mxu0 0.0
    %1093 = vmatprep.subr.mxu0 0.0
    %1094 = vmatpush1.xpose.msra.mxu0 0.0
    %1095 = vmatprep.subr.mxu0 0.0
    %1096 = vmatpush1.xpose.msra.mxu0 0.0
    %1097 = vmatprep.subr.mxu0 0.0
    %1098 = vmatpush1.xpose.msra.mxu0 0.0
    %1099 = vmatprep.subr.mxu0 0.0
    %1100 = vmatpush1.xpose.msra.mxu0 0.0
    %1101 = vmatprep.subr.mxu0 0.0
    %1102 = vmatpush1.xpose.msra.mxu0 %v1071
    %1103 = vmatprep.subr.mxu0 0.0
    %1104 = vmatpush1.xpose.msra.mxu0 %v1069
    %1105 = vmatprep.subr.mxu0 0.0
    %1106 = vmatpush2.xpose.msra.mxu0 0.0
    %1107 = vmatprep.subr.mxu0 0.0
    %1108 = vmatpush2.xpose.msra.mxu0 0.0
    %1109 = vmatprep.subr.mxu0 0.0
    %1110 = vmatpush2.xpose.msra.mxu0 0.0
    %1111 = vmatprep.subr.mxu0 0.0
    %1112 = vmatpush2.xpose.msra.mxu0 0.0
    %1113 = vmatprep.subr.mxu0 0.0
    %1114 = vmatpush2.xpose.msra.mxu0 0.0
    %1115 = vmatprep.subr.mxu0 0.0
    %1116 = vmatpush2.xpose.msra.mxu0 0.0
    %1117 = vmatprep.subr.mxu0 0.0
    %1118 = vmatpush2.xpose.msra.mxu0 0.0
    %1119 = vmatprep.subr.mxu0 0.0
    %1120 = vmatpush2.xpose.msra.mxu0 0.0
    %1121 = vmatprep.subr.mxu0 0.0
    %1122 = vmatpush2.xpose.msra.mxu0 0.0
    %1123 = vmatprep.subr.mxu0 0.0
    %1124 = vmatpush2.xpose.msra.mxu0 0.0
    %1125 = vmatprep.subr.mxu0 0.0
    %1126 = vmatpush2.xpose.msra.mxu0 0.0
    %1127 = vmatprep.subr.mxu0 0.0
    %1128 = vmatpush2.xpose.msra.mxu0 0.0
    %1129 = vmatprep.subr.mxu0 0.0
    %1130 = vmatpush2.xpose.msra.mxu0 0.0
    %1131 = vmatprep.subr.mxu0 0.0
    %1132 = vmatpush2.xpose.msra.mxu0 0.0
    %1133 = vmatprep.subr.mxu0 0.0
    %1134 = vmatpush2.xpose.msra.mxu0 0.0
    %1135 = vmatprep.subr.mxu0 0.0
    %1136 = vmatpush2.xpose.msra.mxu0 0.0
    %1137 = vmatprep.mubr.f32.mxu0 0.0
    %1138 = vmatmul.mubr.f32.gmra.mxu0 %v1067
    %v1139 = vpop.f32.mrf.mxu0
    %v1140 = vadd.f32 0.0, %v1139
    %v1141 = vpop.f32.mrf.mxu0
    %1142 = vdwg.mxu0
    %v1143 = vadd.f32 %v569, %v312
    %v1144 = vadd.f32 %v730, %v312
    %v1145 = vadd.f32 %v894, %v312
    %v1146 = vadd.f32 %v1058, %v312
    %v1147 = vadd.f32 %v648, %v316
    %v1148 = vadd.f32 %v812, %v316
    %v1149 = vadd.f32 %v976, %v316
    %v1150 = vadd.f32 %v1140, %v316
    %vm1151 = vcmask 130048
    %v1152 = vsel %vm1151, %v1143, -inf
    %1153 = vmax.xlane.f32.xlu0 %v1152
    %v1154 = vpop.xlane.xlu0 %1153
    %v1155 = vsel %vm1151, %v1144, -inf
    %1156 = vmax.xlane.f32.xlu0 %v1155
    %v1157 = vpop.xlane.xlu0 %1156
    %v1158 = vsel %vm1151, %v1145, -inf
    %1159 = vmax.xlane.f32.xlu0 %v1158
    %v1160 = vpop.xlane.xlu0 %1159
    %v1161 = vsel %vm1151, %v1146, -inf
    %1162 = vmax.xlane.f32.xlu0 %v1161
    %v1163 = vpop.xlane.xlu0 %1162
    %v1164 = vsel %vm1151, %v1147, -inf
    %1165 = vmax.xlane.f32.xlu0 %v1164
    %v1166 = vpop.xlane.xlu0 %1165
    %v1167 = vsel %vm1151, %v1148, -inf
    %1168 = vmax.xlane.f32.xlu0 %v1167
    %v1169 = vpop.xlane.xlu0 %1168
    %v1170 = vsel %vm1151, %v1149, -inf
    %1171 = vmax.xlane.f32.xlu0 %v1170
    %v1172 = vpop.xlane.xlu0 %1171
    %v1173 = vsel %vm1151, %v1150, -inf
    %1174 = vmax.xlane.f32.xlu0 %v1173
    %v1175 = vpop.xlane.xlu0 %1174
    %v1176 = vsub.f32 %v1143, %v1154
    %v1177 = vsub.f32 %v1144, %v1157
    %v1178 = vsub.f32 %v1145, %v1160
    %v1179 = vsub.f32 %v1146, %v1163
    %v1180 = vsub.f32 %v1147, %v1166
    %v1181 = vsub.f32 %v1148, %v1169
    %v1182 = vsub.f32 %v1149, %v1172
    %v1183 = vsub.f32 %v1150, %v1175
    %v1184 = vmul.f32 %v1176, 1.442695
    %v1185 = vpow.pop %v1184
    %v1186 = vmul.f32 %v1177, 1.442695
    %v1187 = vpow.pop %v1186
    %v1188 = vmul.f32 %v1178, 1.442695
    %v1189 = vpow.pop %v1188
    %v1190 = vmul.f32 %v1179, 1.442695
    %v1191 = vpow.pop %v1190
    %v1192 = vmul.f32 %v1180, 1.442695
    %v1193 = vpow.pop %v1192
    %v1194 = vmul.f32 %v1181, 1.442695
    %v1195 = vpow.pop %v1194
    %v1196 = vmul.f32 %v1182, 1.442695
    %v1197 = vpow.pop %v1196
    %v1198 = vmul.f32 %v1183, 1.442695
    %v1199 = vpow.pop %v1198
    %v1200 = vsel %vm1151, %v1185, 0.0
    %1201 = vadd.xlane.f32.xlu0 %v1200
    %v1202 = vpop.xlane.xlu0 %1201
    %v1203 = vsel %vm1151, %v1187, 0.0
    %1204 = vadd.xlane.f32.xlu0 %v1203
    %v1205 = vpop.xlane.xlu0 %1204
    %v1206 = vsel %vm1151, %v1189, 0.0
    %1207 = vadd.xlane.f32.xlu0 %v1206
    %v1208 = vpop.xlane.xlu0 %1207
    %v1209 = vsel %vm1151, %v1191, 0.0
    %1210 = vadd.xlane.f32.xlu0 %v1209
    %v1211 = vpop.xlane.xlu0 %1210
    %v1212 = vsel %vm1151, %v1193, 0.0
    %1213 = vadd.xlane.f32.xlu0 %v1212
    %v1214 = vpop.xlane.xlu0 %1213
    %v1215 = vsel %vm1151, %v1195, 0.0
    %1216 = vadd.xlane.f32.xlu0 %v1215
    %v1217 = vpop.xlane.xlu0 %1216
    %v1218 = vsel %vm1151, %v1197, 0.0
    %1219 = vadd.xlane.f32.xlu0 %v1218
    %v1220 = vpop.xlane.xlu0 %1219
    %v1221 = vsel %vm1151, %v1199, 0.0
    %1222 = vadd.xlane.f32.xlu0 %v1221
    %v1223 = vpop.xlane.xlu0 %1222
    %v1224 = vrcp.pop %v1202
    %v1225 = vrcp.pop %v1205
    %v1226 = vrcp.pop %v1208
    %v1227 = vrcp.pop %v1211
    %v1228 = vrcp.pop %v1214
    %v1229 = vrcp.pop %v1217
    %v1230 = vrcp.pop %v1220
    %v1231 = vrcp.pop %v1223
    %v1232 = vmul.f32 %v1185, %v1224
    %v1233 = vmul.f32 %v1187, %v1225
    %v1234 = vmul.f32 %v1189, %v1226
    %v1235 = vmul.f32 %v1191, %v1227
    %v1236 = vmul.f32 %v1193, %v1228
    %v1237 = vmul.f32 %v1195, %v1229
    %v1238 = vmul.f32 %v1197, %v1230
    %v1239 = vmul.f32 %v1199, %v1231
    %v1241 = vsel %vm1151, %v1232, 0
    %1243 = vmatprep.subr.mxu0 0.0
    %1244 = vmatpush1.msra.mxu0 0.0
    %1245 = vmatprep.subr.mxu0 0.0
    %1246 = vmatpush1.msra.mxu0 0.0
    %1247 = vmatprep.subr.mxu0 0.0
    %1248 = vmatpush1.msra.mxu0 0.0
    %1249 = vmatprep.subr.mxu0 0.0
    %1250 = vmatpush1.msra.mxu0 0.0
    %1251 = vmatprep.subr.mxu0 0.0
    %1252 = vmatpush1.msra.mxu0 0.0
    %1253 = vmatprep.subr.mxu0 0.0
    %1254 = vmatpush1.msra.mxu0 0.0
    %1255 = vmatprep.subr.mxu0 0.0
    %1256 = vmatpush1.msra.mxu0 0.0
    %1257 = vmatprep.subr.mxu0 0.0
    %1258 = vmatpush1.msra.mxu0 0.0
    %1259 = vmatprep.subr.mxu0 0.0
    %1260 = vmatpush1.msra.mxu0 0.0
    %1261 = vmatprep.subr.mxu0 0.0
    %1262 = vmatpush1.msra.mxu0 0.0
    %1263 = vmatprep.subr.mxu0 0.0
    %1264 = vmatpush1.msra.mxu0 0.0
    %1265 = vmatprep.subr.mxu0 0.0
    %1266 = vmatpush1.msra.mxu0 0.0
    %1267 = vmatprep.subr.mxu0 0.0
    %1268 = vmatpush1.msra.mxu0 0.0
    %1269 = vmatprep.subr.mxu0 0.0
    %1270 = vmatpush1.msra.mxu0 0.0
    %1271 = vmatprep.subr.mxu0 0.0
    %1272 = vmatpush1.msra.mxu0 %v196
    %1273 = vmatprep.subr.mxu0 0.0
    %1274 = vmatpush1.msra.mxu0 %v190
    %1275 = vmatprep.subr.mxu0 0.0
    %1276 = vmatpush2.msra.mxu0 0.0
    %1277 = vmatprep.subr.mxu0 0.0
    %1278 = vmatpush2.msra.mxu0 0.0
    %1279 = vmatprep.subr.mxu0 0.0
    %1280 = vmatpush2.msra.mxu0 0.0
    %1281 = vmatprep.subr.mxu0 0.0
    %1282 = vmatpush2.msra.mxu0 0.0
    %1283 = vmatprep.subr.mxu0 0.0
    %1284 = vmatpush2.msra.mxu0 0.0
    %1285 = vmatprep.subr.mxu0 0.0
    %1286 = vmatpush2.msra.mxu0 0.0
    %1287 = vmatprep.subr.mxu0 0.0
    %1288 = vmatpush2.msra.mxu0 0.0
    %1289 = vmatprep.subr.mxu0 0.0
    %1290 = vmatpush2.msra.mxu0 0.0
    %1291 = vmatprep.subr.mxu0 0.0
    %1292 = vmatpush2.msra.mxu0 0.0
    %1293 = vmatprep.subr.mxu0 0.0
    %1294 = vmatpush2.msra.mxu0 0.0
    %1295 = vmatprep.subr.mxu0 0.0
    %1296 = vmatpush2.msra.mxu0 0.0
    %1297 = vmatprep.subr.mxu0 0.0
    %1298 = vmatpush2.msra.mxu0 0.0
    %1299 = vmatprep.subr.mxu0 0.0
    %1300 = vmatpush2.msra.mxu0 0.0
    %1301 = vmatprep.subr.mxu0 0.0
    %1302 = vmatpush2.msra.mxu0 0.0
    %1303 = vmatprep.subr.mxu0 0.0
    %1304 = vmatpush2.msra.mxu0 0.0
    %1305 = vmatprep.subr.mxu0 0.0
    %1306 = vmatpush2.msra.mxu0 0.0
    %1307 = vmatprep.mubr.f32.mxu0 0.0
    %1308 = vmatmul.mubr.f32.gmra.mxu0 %v1241
    %v1309 = vpop.f32.mrf.mxu0
    %v1310 = vadd.f32 0.0, %v1309
    %v1311 = vpop.f32.mrf.mxu0
    %1312 = vdwg.mxu0
    %v1314 = vsel %vm1151, %v1236, 0
    %1316 = vmatprep.subr.mxu0 0.0
    %1317 = vmatpush1.msra.mxu0 0.0
    %1318 = vmatprep.subr.mxu0 0.0
    %1319 = vmatpush1.msra.mxu0 0.0
    %1320 = vmatprep.subr.mxu0 0.0
    %1321 = vmatpush1.msra.mxu0 0.0
    %1322 = vmatprep.subr.mxu0 0.0
    %1323 = vmatpush1.msra.mxu0 0.0
    %1324 = vmatprep.subr.mxu0 0.0
    %1325 = vmatpush1.msra.mxu0 0.0
    %1326 = vmatprep.subr.mxu0 0.0
    %1327 = vmatpush1.msra.mxu0 0.0
    %1328 = vmatprep.subr.mxu0 0.0
    %1329 = vmatpush1.msra.mxu0 0.0
    %1330 = vmatprep.subr.mxu0 0.0
    %1331 = vmatpush1.msra.mxu0 0.0
    %1332 = vmatprep.subr.mxu0 0.0
    %1333 = vmatpush1.msra.mxu0 0.0
    %1334 = vmatprep.subr.mxu0 0.0
    %1335 = vmatpush1.msra.mxu0 0.0
    %1336 = vmatprep.subr.mxu0 0.0
    %1337 = vmatpush1.msra.mxu0 0.0
    %1338 = vmatprep.subr.mxu0 0.0
    %1339 = vmatpush1.msra.mxu0 0.0
    %1340 = vmatprep.subr.mxu0 0.0
    %1341 = vmatpush1.msra.mxu0 0.0
    %1342 = vmatprep.subr.mxu0 0.0
    %1343 = vmatpush1.msra.mxu0 0.0
    %1344 = vmatprep.subr.mxu0 0.0
    %1345 = vmatpush1.msra.mxu0 %v208
    %1346 = vmatprep.subr.mxu0 0.0
    %1347 = vmatpush1.msra.mxu0 %v202
    %1348 = vmatprep.subr.mxu0 0.0
    %1349 = vmatpush2.msra.mxu0 0.0
    %1350 = vmatprep.subr.mxu0 0.0
    %1351 = vmatpush2.msra.mxu0 0.0
    %1352 = vmatprep.subr.mxu0 0.0
    %1353 = vmatpush2.msra.mxu0 0.0
    %1354 = vmatprep.subr.mxu0 0.0
    %1355 = vmatpush2.msra.mxu0 0.0
    %1356 = vmatprep.subr.mxu0 0.0
    %1357 = vmatpush2.msra.mxu0 0.0
    %1358 = vmatprep.subr.mxu0 0.0
    %1359 = vmatpush2.msra.mxu0 0.0
    %1360 = vmatprep.subr.mxu0 0.0
    %1361 = vmatpush2.msra.mxu0 0.0
    %1362 = vmatprep.subr.mxu0 0.0
    %1363 = vmatpush2.msra.mxu0 0.0
    %1364 = vmatprep.subr.mxu0 0.0
    %1365 = vmatpush2.msra.mxu0 0.0
    %1366 = vmatprep.subr.mxu0 0.0
    %1367 = vmatpush2.msra.mxu0 0.0
    %1368 = vmatprep.subr.mxu0 0.0
    %1369 = vmatpush2.msra.mxu0 0.0
    %1370 = vmatprep.subr.mxu0 0.0
    %1371 = vmatpush2.msra.mxu0 0.0
    %1372 = vmatprep.subr.mxu0 0.0
    %1373 = vmatpush2.msra.mxu0 0.0
    %1374 = vmatprep.subr.mxu0 0.0
    %1375 = vmatpush2.msra.mxu0 0.0
    %1376 = vmatprep.subr.mxu0 0.0
    %1377 = vmatpush2.msra.mxu0 0.0
    %1378 = vmatprep.subr.mxu0 0.0
    %1379 = vmatpush2.msra.mxu0 0.0
    %1380 = vmatprep.mubr.f32.mxu0 0.0
    %1381 = vmatmul.mubr.f32.gmra.mxu0 %v1314
    %v1382 = vpop.f32.mrf.mxu0
    %v1383 = vadd.f32 0.0, %v1382
    %v1384 = vpop.f32.mrf.mxu0
    %1385 = vdwg.mxu0
    %1388 = vrot.lane.b32.xlu0 %v190, 96
    %v1389 = vpop.permute.xlu0 %1388
    %1390 = vrot.lane.b32.xlu0 %v196, 96
    %v1391 = vpop.permute.xlu0 %1390
    %v1395 = vsel %vm1151, %v1233, 0
    %1397 = vmatprep.subr.mxu0 0.0
    %1398 = vmatpush1.msra.mxu0 0.0
    %1399 = vmatprep.subr.mxu0 0.0
    %1400 = vmatpush1.msra.mxu0 0.0
    %1401 = vmatprep.subr.mxu0 0.0
    %1402 = vmatpush1.msra.mxu0 0.0
    %1403 = vmatprep.subr.mxu0 0.0
    %1404 = vmatpush1.msra.mxu0 0.0
    %1405 = vmatprep.subr.mxu0 0.0
    %1406 = vmatpush1.msra.mxu0 0.0
    %1407 = vmatprep.subr.mxu0 0.0
    %1408 = vmatpush1.msra.mxu0 0.0
    %1409 = vmatprep.subr.mxu0 0.0
    %1410 = vmatpush1.msra.mxu0 0.0
    %1411 = vmatprep.subr.mxu0 0.0
    %1412 = vmatpush1.msra.mxu0 0.0
    %1413 = vmatprep.subr.mxu0 0.0
    %1414 = vmatpush1.msra.mxu0 0.0
    %1415 = vmatprep.subr.mxu0 0.0
    %1416 = vmatpush1.msra.mxu0 0.0
    %1417 = vmatprep.subr.mxu0 0.0
    %1418 = vmatpush1.msra.mxu0 0.0
    %1419 = vmatprep.subr.mxu0 0.0
    %1420 = vmatpush1.msra.mxu0 0.0
    %1421 = vmatprep.subr.mxu0 0.0
    %1422 = vmatpush1.msra.mxu0 0.0
    %1423 = vmatprep.subr.mxu0 0.0
    %1424 = vmatpush1.msra.mxu0 0.0
    %1425 = vmatprep.subr.mxu0 0.0
    %1426 = vmatpush1.msra.mxu0 %v1391
    %1427 = vmatprep.subr.mxu0 0.0
    %1428 = vmatpush1.msra.mxu0 %v1389
    %1429 = vmatprep.subr.mxu0 0.0
    %1430 = vmatpush2.msra.mxu0 0.0
    %1431 = vmatprep.subr.mxu0 0.0
    %1432 = vmatpush2.msra.mxu0 0.0
    %1433 = vmatprep.subr.mxu0 0.0
    %1434 = vmatpush2.msra.mxu0 0.0
    %1435 = vmatprep.subr.mxu0 0.0
    %1436 = vmatpush2.msra.mxu0 0.0
    %1437 = vmatprep.subr.mxu0 0.0
    %1438 = vmatpush2.msra.mxu0 0.0
    %1439 = vmatprep.subr.mxu0 0.0
    %1440 = vmatpush2.msra.mxu0 0.0
    %1441 = vmatprep.subr.mxu0 0.0
    %1442 = vmatpush2.msra.mxu0 0.0
    %1443 = vmatprep.subr.mxu0 0.0
    %1444 = vmatpush2.msra.mxu0 0.0
    %1445 = vmatprep.subr.mxu0 0.0
    %1446 = vmatpush2.msra.mxu0 0.0
    %1447 = vmatprep.subr.mxu0 0.0
    %1448 = vmatpush2.msra.mxu0 0.0
    %1449 = vmatprep.subr.mxu0 0.0
    %1450 = vmatpush2.msra.mxu0 0.0
    %1451 = vmatprep.subr.mxu0 0.0
    %1452 = vmatpush2.msra.mxu0 0.0
    %1453 = vmatprep.subr.mxu0 0.0
    %1454 = vmatpush2.msra.mxu0 0.0
    %1455 = vmatprep.subr.mxu0 0.0
    %1456 = vmatpush2.msra.mxu0 0.0
    %1457 = vmatprep.subr.mxu0 0.0
    %1458 = vmatpush2.msra.mxu0 0.0
    %1459 = vmatprep.subr.mxu0 0.0
    %1460 = vmatpush2.msra.mxu0 0.0
    %1461 = vmatprep.mubr.f32.mxu0 0.0
    %1462 = vmatmul.mubr.f32.gmra.mxu0 %v1395
    %v1463 = vpop.f32.mrf.mxu0
    %v1464 = vadd.f32 0.0, %v1463
    %v1465 = vpop.f32.mrf.mxu0
    %1466 = vdwg.mxu0
    %1469 = vrot.lane.b32.xlu0 %v202, 96
    %v1470 = vpop.permute.xlu0 %1469
    %1471 = vrot.lane.b32.xlu0 %v208, 96
    %v1472 = vpop.permute.xlu0 %1471
    %v1476 = vsel %vm1151, %v1237, 0
    %1478 = vmatprep.subr.mxu0 0.0
    %1479 = vmatpush1.msra.mxu0 0.0
    %1480 = vmatprep.subr.mxu0 0.0
    %1481 = vmatpush1.msra.mxu0 0.0
    %1482 = vmatprep.subr.mxu0 0.0
    %1483 = vmatpush1.msra.mxu0 0.0
    %1484 = vmatprep.subr.mxu0 0.0
    %1485 = vmatpush1.msra.mxu0 0.0
    %1486 = vmatprep.subr.mxu0 0.0
    %1487 = vmatpush1.msra.mxu0 0.0
    %1488 = vmatprep.subr.mxu0 0.0
    %1489 = vmatpush1.msra.mxu0 0.0
    %1490 = vmatprep.subr.mxu0 0.0
    %1491 = vmatpush1.msra.mxu0 0.0
    %1492 = vmatprep.subr.mxu0 0.0
    %1493 = vmatpush1.msra.mxu0 0.0
    %1494 = vmatprep.subr.mxu0 0.0
    %1495 = vmatpush1.msra.mxu0 0.0
    %1496 = vmatprep.subr.mxu0 0.0
    %1497 = vmatpush1.msra.mxu0 0.0
    %1498 = vmatprep.subr.mxu0 0.0
    %1499 = vmatpush1.msra.mxu0 0.0
    %1500 = vmatprep.subr.mxu0 0.0
    %1501 = vmatpush1.msra.mxu0 0.0
    %1502 = vmatprep.subr.mxu0 0.0
    %1503 = vmatpush1.msra.mxu0 0.0
    %1504 = vmatprep.subr.mxu0 0.0
    %1505 = vmatpush1.msra.mxu0 0.0
    %1506 = vmatprep.subr.mxu0 0.0
    %1507 = vmatpush1.msra.mxu0 %v1472
    %1508 = vmatprep.subr.mxu0 0.0
    %1509 = vmatpush1.msra.mxu0 %v1470
    %1510 = vmatprep.subr.mxu0 0.0
    %1511 = vmatpush2.msra.mxu0 0.0
    %1512 = vmatprep.subr.mxu0 0.0
    %1513 = vmatpush2.msra.mxu0 0.0
    %1514 = vmatprep.subr.mxu0 0.0
    %1515 = vmatpush2.msra.mxu0 0.0
    %1516 = vmatprep.subr.mxu0 0.0
    %1517 = vmatpush2.msra.mxu0 0.0
    %1518 = vmatprep.subr.mxu0 0.0
    %1519 = vmatpush2.msra.mxu0 0.0
    %1520 = vmatprep.subr.mxu0 0.0
    %1521 = vmatpush2.msra.mxu0 0.0
    %1522 = vmatprep.subr.mxu0 0.0
    %1523 = vmatpush2.msra.mxu0 0.0
    %1524 = vmatprep.subr.mxu0 0.0
    %1525 = vmatpush2.msra.mxu0 0.0
    %1526 = vmatprep.subr.mxu0 0.0
    %1527 = vmatpush2.msra.mxu0 0.0
    %1528 = vmatprep.subr.mxu0 0.0
    %1529 = vmatpush2.msra.mxu0 0.0
    %1530 = vmatprep.subr.mxu0 0.0
    %1531 = vmatpush2.msra.mxu0 0.0
    %1532 = vmatprep.subr.mxu0 0.0
    %1533 = vmatpush2.msra.mxu0 0.0
    %1534 = vmatprep.subr.mxu0 0.0
    %1535 = vmatpush2.msra.mxu0 0.0
    %1536 = vmatprep.subr.mxu0 0.0
    %1537 = vmatpush2.msra.mxu0 0.0
    %1538 = vmatprep.subr.mxu0 0.0
    %1539 = vmatpush2.msra.mxu0 0.0
    %1540 = vmatprep.subr.mxu0 0.0
    %1541 = vmatpush2.msra.mxu0 0.0
    %1542 = vmatprep.mubr.f32.mxu0 0.0
    %1543 = vmatmul.mubr.f32.gmra.mxu0 %v1476
    %v1544 = vpop.f32.mrf.mxu0
    %v1545 = vadd.f32 0.0, %v1544
    %v1546 = vpop.f32.mrf.mxu0
    %1547 = vdwg.mxu0
    %v1548 = vadd.f32 %v1310, %v1464
    %v1549 = vadd.f32 %v1383, %v1545
    %1550 = vrot.lane.b32.xlu0 %v190, 64
    %v1551 = vpop.permute.xlu0 %1550
    %1552 = vrot.lane.b32.xlu0 %v196, 64
    %v1553 = vpop.permute.xlu0 %1552
    %v1557 = vsel %vm1151, %v1234, 0
    %1559 = vmatprep.subr.mxu0 0.0
    %1560 = vmatpush1.msra.mxu0 0.0
    %1561 = vmatprep.subr.mxu0 0.0
    %1562 = vmatpush1.msra.mxu0 0.0
    %1563 = vmatprep.subr.mxu0 0.0
    %1564 = vmatpush1.msra.mxu0 0.0
    %1565 = vmatprep.subr.mxu0 0.0
    %1566 = vmatpush1.msra.mxu0 0.0
    %1567 = vmatprep.subr.mxu0 0.0
    %1568 = vmatpush1.msra.mxu0 0.0
    %1569 = vmatprep.subr.mxu0 0.0
    %1570 = vmatpush1.msra.mxu0 0.0
    %1571 = vmatprep.subr.mxu0 0.0
    %1572 = vmatpush1.msra.mxu0 0.0
    %1573 = vmatprep.subr.mxu0 0.0
    %1574 = vmatpush1.msra.mxu0 0.0
    %1575 = vmatprep.subr.mxu0 0.0
    %1576 = vmatpush1.msra.mxu0 0.0
    %1577 = vmatprep.subr.mxu0 0.0
    %1578 = vmatpush1.msra.mxu0 0.0
    %1579 = vmatprep.subr.mxu0 0.0
    %1580 = vmatpush1.msra.mxu0 0.0
    %1581 = vmatprep.subr.mxu0 0.0
    %1582 = vmatpush1.msra.mxu0 0.0
    %1583 = vmatprep.subr.mxu0 0.0
    %1584 = vmatpush1.msra.mxu0 0.0
    %1585 = vmatprep.subr.mxu0 0.0
    %1586 = vmatpush1.msra.mxu0 0.0
    %1587 = vmatprep.subr.mxu0 0.0
    %1588 = vmatpush1.msra.mxu0 %v1553
    %1589 = vmatprep.subr.mxu0 0.0
    %1590 = vmatpush1.msra.mxu0 %v1551
    %1591 = vmatprep.subr.mxu0 0.0
    %1592 = vmatpush2.msra.mxu0 0.0
    %1593 = vmatprep.subr.mxu0 0.0
    %1594 = vmatpush2.msra.mxu0 0.0
    %1595 = vmatprep.subr.mxu0 0.0
    %1596 = vmatpush2.msra.mxu0 0.0
    %1597 = vmatprep.subr.mxu0 0.0
    %1598 = vmatpush2.msra.mxu0 0.0
    %1599 = vmatprep.subr.mxu0 0.0
    %1600 = vmatpush2.msra.mxu0 0.0
    %1601 = vmatprep.subr.mxu0 0.0
    %1602 = vmatpush2.msra.mxu0 0.0
    %1603 = vmatprep.subr.mxu0 0.0
    %1604 = vmatpush2.msra.mxu0 0.0
    %1605 = vmatprep.subr.mxu0 0.0
    %1606 = vmatpush2.msra.mxu0 0.0
    %1607 = vmatprep.subr.mxu0 0.0
    %1608 = vmatpush2.msra.mxu0 0.0
    %1609 = vmatprep.subr.mxu0 0.0
    %1610 = vmatpush2.msra.mxu0 0.0
    %1611 = vmatprep.subr.mxu0 0.0
    %1612 = vmatpush2.msra.mxu0 0.0
    %1613 = vmatprep.subr.mxu0 0.0
    %1614 = vmatpush2.msra.mxu0 0.0
    %1615 = vmatprep.subr.mxu0 0.0
    %1616 = vmatpush2.msra.mxu0 0.0
    %1617 = vmatprep.subr.mxu0 0.0
    %1618 = vmatpush2.msra.mxu0 0.0
    %1619 = vmatprep.subr.mxu0 0.0
    %1620 = vmatpush2.msra.mxu0 0.0
    %1621 = vmatprep.subr.mxu0 0.0
    %1622 = vmatpush2.msra.mxu0 0.0
    %1623 = vmatprep.mubr.f32.mxu0 0.0
    %1624 = vmatmul.mubr.f32.gmra.mxu0 %v1557
    %v1625 = vpop.f32.mrf.mxu0
    %v1626 = vadd.f32 0.0, %v1625
    %v1627 = vpop.f32.mrf.mxu0
    %1628 = vdwg.mxu0
    %1629 = vrot.lane.b32.xlu0 %v202, 64
    %v1630 = vpop.permute.xlu0 %1629
    %1631 = vrot.lane.b32.xlu0 %v208, 64
    %v1632 = vpop.permute.xlu0 %1631
    %v1636 = vsel %vm1151, %v1238, 0
    %1638 = vmatprep.subr.mxu0 0.0
    %1639 = vmatpush1.msra.mxu0 0.0
    %1640 = vmatprep.subr.mxu0 0.0
    %1641 = vmatpush1.msra.mxu0 0.0
    %1642 = vmatprep.subr.mxu0 0.0
    %1643 = vmatpush1.msra.mxu0 0.0
    %1644 = vmatprep.subr.mxu0 0.0
    %1645 = vmatpush1.msra.mxu0 0.0
    %1646 = vmatprep.subr.mxu0 0.0
    %1647 = vmatpush1.msra.mxu0 0.0
    %1648 = vmatprep.subr.mxu0 0.0
    %1649 = vmatpush1.msra.mxu0 0.0
    %1650 = vmatprep.subr.mxu0 0.0
    %1651 = vmatpush1.msra.mxu0 0.0
    %1652 = vmatprep.subr.mxu0 0.0
    %1653 = vmatpush1.msra.mxu0 0.0
    %1654 = vmatprep.subr.mxu0 0.0
    %1655 = vmatpush1.msra.mxu0 0.0
    %1656 = vmatprep.subr.mxu0 0.0
    %1657 = vmatpush1.msra.mxu0 0.0
    %1658 = vmatprep.subr.mxu0 0.0
    %1659 = vmatpush1.msra.mxu0 0.0
    %1660 = vmatprep.subr.mxu0 0.0
    %1661 = vmatpush1.msra.mxu0 0.0
    %1662 = vmatprep.subr.mxu0 0.0
    %1663 = vmatpush1.msra.mxu0 0.0
    %1664 = vmatprep.subr.mxu0 0.0
    %1665 = vmatpush1.msra.mxu0 0.0
    %1666 = vmatprep.subr.mxu0 0.0
    %1667 = vmatpush1.msra.mxu0 %v1632
    %1668 = vmatprep.subr.mxu0 0.0
    %1669 = vmatpush1.msra.mxu0 %v1630
    %1670 = vmatprep.subr.mxu0 0.0
    %1671 = vmatpush2.msra.mxu0 0.0
    %1672 = vmatprep.subr.mxu0 0.0
    %1673 = vmatpush2.msra.mxu0 0.0
    %1674 = vmatprep.subr.mxu0 0.0
    %1675 = vmatpush2.msra.mxu0 0.0
    %1676 = vmatprep.subr.mxu0 0.0
    %1677 = vmatpush2.msra.mxu0 0.0
    %1678 = vmatprep.subr.mxu0 0.0
    %1679 = vmatpush2.msra.mxu0 0.0
    %1680 = vmatprep.subr.mxu0 0.0
    %1681 = vmatpush2.msra.mxu0 0.0
    %1682 = vmatprep.subr.mxu0 0.0
    %1683 = vmatpush2.msra.mxu0 0.0
    %1684 = vmatprep.subr.mxu0 0.0
    %1685 = vmatpush2.msra.mxu0 0.0
    %1686 = vmatprep.subr.mxu0 0.0
    %1687 = vmatpush2.msra.mxu0 0.0
    %1688 = vmatprep.subr.mxu0 0.0
    %1689 = vmatpush2.msra.mxu0 0.0
    %1690 = vmatprep.subr.mxu0 0.0
    %1691 = vmatpush2.msra.mxu0 0.0
    %1692 = vmatprep.subr.mxu0 0.0
    %1693 = vmatpush2.msra.mxu0 0.0
    %1694 = vmatprep.subr.mxu0 0.0
    %1695 = vmatpush2.msra.mxu0 0.0
    %1696 = vmatprep.subr.mxu0 0.0
    %1697 = vmatpush2.msra.mxu0 0.0
    %1698 = vmatprep.subr.mxu0 0.0
    %1699 = vmatpush2.msra.mxu0 0.0
    %1700 = vmatprep.subr.mxu0 0.0
    %1701 = vmatpush2.msra.mxu0 0.0
    %1702 = vmatprep.mubr.f32.mxu0 0.0
    %1703 = vmatmul.mubr.f32.gmra.mxu0 %v1636
    %v1704 = vpop.f32.mrf.mxu0
    %v1705 = vadd.f32 0.0, %v1704
    %v1706 = vpop.f32.mrf.mxu0
    %1707 = vdwg.mxu0
    %v1708 = vadd.f32 %v1548, %v1626
    %v1709 = vadd.f32 %v1549, %v1705
    %1710 = vrot.lane.b32.xlu0 %v190, 32
    %v1711 = vpop.permute.xlu0 %1710
    %1712 = vrot.lane.b32.xlu0 %v196, 32
    %v1713 = vpop.permute.xlu0 %1712
    %v1717 = vsel %vm1151, %v1235, 0
    %1719 = vmatprep.subr.mxu0 0.0
    %1720 = vmatpush1.msra.mxu0 0.0
    %1721 = vmatprep.subr.mxu0 0.0
    %1722 = vmatpush1.msra.mxu0 0.0
    %1723 = vmatprep.subr.mxu0 0.0
    %1724 = vmatpush1.msra.mxu0 0.0
    %1725 = vmatprep.subr.mxu0 0.0
    %1726 = vmatpush1.msra.mxu0 0.0
    %1727 = vmatprep.subr.mxu0 0.0
    %1728 = vmatpush1.msra.mxu0 0.0
    %1729 = vmatprep.subr.mxu0 0.0
    %1730 = vmatpush1.msra.mxu0 0.0
    %1731 = vmatprep.subr.mxu0 0.0
    %1732 = vmatpush1.msra.mxu0 0.0
    %1733 = vmatprep.subr.mxu0 0.0
    %1734 = vmatpush1.msra.mxu0 0.0
    %1735 = vmatprep.subr.mxu0 0.0
    %1736 = vmatpush1.msra.mxu0 0.0
    %1737 = vmatprep.subr.mxu0 0.0
    %1738 = vmatpush1.msra.mxu0 0.0
    %1739 = vmatprep.subr.mxu0 0.0
    %1740 = vmatpush1.msra.mxu0 0.0
    %1741 = vmatprep.subr.mxu0 0.0
    %1742 = vmatpush1.msra.mxu0 0.0
    %1743 = vmatprep.subr.mxu0 0.0
    %1744 = vmatpush1.msra.mxu0 0.0
    %1745 = vmatprep.subr.mxu0 0.0
    %1746 = vmatpush1.msra.mxu0 0.0
    %1747 = vmatprep.subr.mxu0 0.0
    %1748 = vmatpush1.msra.mxu0 %v1713
    %1749 = vmatprep.subr.mxu0 0.0
    %1750 = vmatpush1.msra.mxu0 %v1711
    %1751 = vmatprep.subr.mxu0 0.0
    %1752 = vmatpush2.msra.mxu0 0.0
    %1753 = vmatprep.subr.mxu0 0.0
    %1754 = vmatpush2.msra.mxu0 0.0
    %1755 = vmatprep.subr.mxu0 0.0
    %1756 = vmatpush2.msra.mxu0 0.0
    %1757 = vmatprep.subr.mxu0 0.0
    %1758 = vmatpush2.msra.mxu0 0.0
    %1759 = vmatprep.subr.mxu0 0.0
    %1760 = vmatpush2.msra.mxu0 0.0
    %1761 = vmatprep.subr.mxu0 0.0
    %1762 = vmatpush2.msra.mxu0 0.0
    %1763 = vmatprep.subr.mxu0 0.0
    %1764 = vmatpush2.msra.mxu0 0.0
    %1765 = vmatprep.subr.mxu0 0.0
    %1766 = vmatpush2.msra.mxu0 0.0
    %1767 = vmatprep.subr.mxu0 0.0
    %1768 = vmatpush2.msra.mxu0 0.0
    %1769 = vmatprep.subr.mxu0 0.0
    %1770 = vmatpush2.msra.mxu0 0.0
    %1771 = vmatprep.subr.mxu0 0.0
    %1772 = vmatpush2.msra.mxu0 0.0
    %1773 = vmatprep.subr.mxu0 0.0
    %1774 = vmatpush2.msra.mxu0 0.0
    %1775 = vmatprep.subr.mxu0 0.0
    %1776 = vmatpush2.msra.mxu0 0.0
    %1777 = vmatprep.subr.mxu0 0.0
    %1778 = vmatpush2.msra.mxu0 0.0
    %1779 = vmatprep.subr.mxu0 0.0
    %1780 = vmatpush2.msra.mxu0 0.0
    %1781 = vmatprep.subr.mxu0 0.0
    %1782 = vmatpush2.msra.mxu0 0.0
    %1783 = vmatprep.mubr.f32.mxu0 0.0
    %1784 = vmatmul.mubr.f32.gmra.mxu0 %v1717
    %v1785 = vpop.f32.mrf.mxu0
    %v1786 = vadd.f32 0.0, %v1785
    %v1787 = vpop.f32.mrf.mxu0
    %1788 = vdwg.mxu0
    %1789 = vrot.lane.b32.xlu0 %v202, 32
    %v1790 = vpop.permute.xlu0 %1789
    %1791 = vrot.lane.b32.xlu0 %v208, 32
    %v1792 = vpop.permute.xlu0 %1791
    %v1796 = vsel %vm1151, %v1239, 0
    %1798 = vmatprep.subr.mxu0 0.0
    %1799 = vmatpush1.msra.mxu0 0.0
    %1800 = vmatprep.subr.mxu0 0.0
    %1801 = vmatpush1.msra.mxu0 0.0
    %1802 = vmatprep.subr.mxu0 0.0
    %1803 = vmatpush1.msra.mxu0 0.0
    %1804 = vmatprep.subr.mxu0 0.0
    %1805 = vmatpush1.msra.mxu0 0.0
    %1806 = vmatprep.subr.mxu0 0.0
    %1807 = vmatpush1.msra.mxu0 0.0
    %1808 = vmatprep.subr.mxu0 0.0
    %1809 = vmatpush1.msra.mxu0 0.0
    %1810 = vmatprep.subr.mxu0 0.0
    %1811 = vmatpush1.msra.mxu0 0.0
    %1812 = vmatprep.subr.mxu0 0.0
    %1813 = vmatpush1.msra.mxu0 0.0
    %1814 = vmatprep.subr.mxu0 0.0
    %1815 = vmatpush1.msra.mxu0 0.0
    %1816 = vmatprep.subr.mxu0 0.0
    %1817 = vmatpush1.msra.mxu0 0.0
    %1818 = vmatprep.subr.mxu0 0.0
    %1819 = vmatpush1.msra.mxu0 0.0
    %1820 = vmatprep.subr.mxu0 0.0
    %1821 = vmatpush1.msra.mxu0 0.0
    %1822 = vmatprep.subr.mxu0 0.0
    %1823 = vmatpush1.msra.mxu0 0.0
    %1824 = vmatprep.subr.mxu0 0.0
    %1825 = vmatpush1.msra.mxu0 0.0
    %1826 = vmatprep.subr.mxu0 0.0
    %1827 = vmatpush1.msra.mxu0 %v1792
    %1828 = vmatprep.subr.mxu0 0.0
    %1829 = vmatpush1.msra.mxu0 %v1790
    %1830 = vmatprep.subr.mxu0 0.0
    %1831 = vmatpush2.msra.mxu0 0.0
    %1832 = vmatprep.subr.mxu0 0.0
    %1833 = vmatpush2.msra.mxu0 0.0
    %1834 = vmatprep.subr.mxu0 0.0
    %1835 = vmatpush2.msra.mxu0 0.0
    %1836 = vmatprep.subr.mxu0 0.0
    %1837 = vmatpush2.msra.mxu0 0.0
    %1838 = vmatprep.subr.mxu0 0.0
    %1839 = vmatpush2.msra.mxu0 0.0
    %1840 = vmatprep.subr.mxu0 0.0
    %1841 = vmatpush2.msra.mxu0 0.0
    %1842 = vmatprep.subr.mxu0 0.0
    %1843 = vmatpush2.msra.mxu0 0.0
    %1844 = vmatprep.subr.mxu0 0.0
    %1845 = vmatpush2.msra.mxu0 0.0
    %1846 = vmatprep.subr.mxu0 0.0
    %1847 = vmatpush2.msra.mxu0 0.0
    %1848 = vmatprep.subr.mxu0 0.0
    %1849 = vmatpush2.msra.mxu0 0.0
    %1850 = vmatprep.subr.mxu0 0.0
    %1851 = vmatpush2.msra.mxu0 0.0
    %1852 = vmatprep.subr.mxu0 0.0
    %1853 = vmatpush2.msra.mxu0 0.0
    %1854 = vmatprep.subr.mxu0 0.0
    %1855 = vmatpush2.msra.mxu0 0.0
    %1856 = vmatprep.subr.mxu0 0.0
    %1857 = vmatpush2.msra.mxu0 0.0
    %1858 = vmatprep.subr.mxu0 0.0
    %1859 = vmatpush2.msra.mxu0 0.0
    %1860 = vmatprep.subr.mxu0 0.0
    %1861 = vmatpush2.msra.mxu0 0.0
    %1862 = vmatprep.mubr.f32.mxu0 0.0
    %1863 = vmatmul.mubr.f32.gmra.mxu0 %v1796
    %v1864 = vpop.f32.mrf.mxu0
    %v1865 = vadd.f32 0.0, %v1864
    %v1866 = vpop.f32.mrf.mxu0
    %1867 = vdwg.mxu0
    %v1868 = vadd.f32 %v1708, %v1786
    %v1869 = vadd.f32 %v1709, %v1865
    %v1870 = vadd.f32 %v88, %v1868
    %v1871 = vadd.f32 %v89, %v1869
    %v1872 = vlaneseq
    %v1873 = vshrl.u32 %v1872, 7
    %v1874 = vsub.s32 4, %v1873
    %v1875 = vrot.slane %v335, %v1874
    %v1876 = vadd.f32 %v1870, %v1875
    %v1877 = vadd.f32 %v1871, %v1875
    %v1878 = vsel %vm110, %v1876, 0.0
    %1879 = vadd.xlane.f32.xlu0 %v1878
    %v1880 = vpop.xlane.xlu0 %1879
    %v1881 = vsel %vm110, %v1877, 0.0
    %1882 = vadd.xlane.f32.xlu0 %v1881
    %v1883 = vpop.xlane.xlu0 %1882
    %v1884 = vmul.f32 %v1880, 0.03125
    %v1885 = vmul.f32 %v1883, 0.03125
    %v1886 = vmul.f32 %v1876, %v1876
    %v1887 = vmul.f32 %v1877, %v1877
    %v1888 = vsel %vm110, %v1886, 0.0
    %1889 = vadd.xlane.f32.xlu0 %v1888
    %v1890 = vpop.xlane.xlu0 %1889
    %v1891 = vsel %vm110, %v1887, 0.0
    %1892 = vadd.xlane.f32.xlu0 %v1891
    %v1893 = vpop.xlane.xlu0 %1892
    %v1894 = vmul.f32 %v1884, 32.0
    %v1895 = vmul.f32 %v1885, 32.0
    %v1896 = vmul.f32 %v1894, %v1884
    %v1897 = vmul.f32 %v1895, %v1885
    %v1898 = vsub.f32 %v1890, %v1896
    %v1899 = vsub.f32 %v1893, %v1897
    %v1900 = vmul.f32 %v1898, 0.032258064
    %v1901 = vmul.f32 %v1899, 0.032258064
    %v1902 = vmax.f32 %v1900, 0.0
    %v1903 = vmax.f32 %v1901, 0.0
    %v1904 = vrsqrt.pop %v1902
    %v1905 = vmul.f32 %v1902, %v1904
    %vm1906 = vcmp.eq.f32.partialorder %v1902, inf
    %v1907 = vsel %vm1906, %v1902, %v1905
    %vm1908 = vcmp.eq.f32.partialorder %v1902, 0.0
    %v1909 = vand.u32 %v1902, 2147483648
    %v1910 = vsel %vm1908, %v1909, %v1907
    %v1911 = vrsqrt.pop %v1903
    %v1912 = vmul.f32 %v1903, %v1911
    %vm1913 = vcmp.eq.f32.partialorder %v1903, inf
    %v1914 = vsel %vm1913, %v1903, %v1912
    %vm1915 = vcmp.eq.f32.partialorder %v1903, 0.0
    %v1916 = vand.u32 %v1903, 2147483648
    %v1917 = vsel %vm1915, %v1916, %v1914
    %v1918 = vadd.f32 %v1910, 1e-06
    %v1919 = vadd.f32 %v1917, 1e-06
    %v1920 = vrcp.pop %v1918
    %v1921 = vmul.f32 1.0, %v1920
    %v1922 = vrcp.pop %v1919
    %v1923 = vmul.f32 1.0, %v1922
    %v1924 = vsub.f32 %v1876, %v1884
    %v1925 = vsub.f32 %v1877, %v1885
    %v1926 = vlaneseq
    %v1927 = vshrl.u32 %v1926, 7
    %v1928 = vsub.s32 5, %v1927
    %v1929 = vrot.slane %v335, %v1928
    %v1930 = vmul.f32 %v1929, %v1924
    %v1931 = vmul.f32 %v1929, %v1925
    %v1932 = vmul.f32 %v1930, %v1921
    %v1933 = vmul.f32 %v1931, %v1923
    %v1934 = vlaneseq
    %v1935 = vshrl.u32 %v1934, 7
    %v1936 = vsub.s32 6, %v1935
    %v1937 = vrot.slane %v335, %v1936
    %v1938 = vadd.f32 %v1932, %v1937
    %v1939 = vadd.f32 %v1933, %v1937
    %v1940 = vlaneseq
    %v1941 = vshrl.u32 %v1940, 7
    %v1942 = vsub.s32 0, %v1941
    %v1943 = vrot.slane %v336, %v1942
    %v1945 = vsel %vm110, %v1938, 0
    %v1948 = vsel %vm110, %v1939, 0
    %1950 = vmatprep.subr.mxu0 0.0
    %1951 = vmatpush1.msra.mxu0 0.0
    %1952 = vmatprep.subr.mxu0 0.0
    %1953 = vmatpush1.msra.mxu0 0.0
    %1954 = vmatprep.subr.mxu0 0.0
    %1955 = vmatpush1.msra.mxu0 0.0
    %1956 = vmatprep.subr.mxu0 0.0
    %1957 = vmatpush1.msra.mxu0 0.0
    %1958 = vmatprep.subr.mxu0 0.0
    %1959 = vmatpush1.msra.mxu0 0.0
    %1960 = vmatprep.subr.mxu0 0.0
    %1961 = vmatpush1.msra.mxu0 0.0
    %1962 = vmatprep.subr.mxu0 0.0
    %1963 = vmatpush1.msra.mxu0 0.0
    %1964 = vmatprep.subr.mxu0 0.0
    %1965 = vmatpush1.msra.mxu0 0.0
    %1966 = vmatprep.subr.mxu0 0.0
    %1967 = vmatpush1.msra.mxu0 0.0
    %1968 = vmatprep.subr.mxu0 0.0
    %1969 = vmatpush1.msra.mxu0 0.0
    %1970 = vmatprep.subr.mxu0 0.0
    %1971 = vmatpush1.msra.mxu0 0.0
    %1972 = vmatprep.subr.mxu0 0.0
    %1973 = vmatpush1.msra.mxu0 0.0
    %1974 = vmatprep.subr.mxu0 0.0
    %1975 = vmatpush1.msra.mxu0 %v326
    %1976 = vmatprep.subr.mxu0 0.0
    %1977 = vmatpush1.msra.mxu0 %v325
    %1978 = vmatprep.subr.mxu0 0.0
    %1979 = vmatpush1.msra.mxu0 %v324
    %1980 = vmatprep.subr.mxu0 0.0
    %1981 = vmatpush1.msra.mxu0 %v323
    %1982 = vmatprep.subr.mxu0 0.0
    %1983 = vmatpush2.msra.mxu0 0.0
    %1984 = vmatprep.subr.mxu0 0.0
    %1985 = vmatpush2.msra.mxu0 0.0
    %1986 = vmatprep.subr.mxu0 0.0
    %1987 = vmatpush2.msra.mxu0 0.0
    %1988 = vmatprep.subr.mxu0 0.0
    %1989 = vmatpush2.msra.mxu0 0.0
    %1990 = vmatprep.subr.mxu0 0.0
    %1991 = vmatpush2.msra.mxu0 0.0
    %1992 = vmatprep.subr.mxu0 0.0
    %1993 = vmatpush2.msra.mxu0 0.0
    %1994 = vmatprep.subr.mxu0 0.0
    %1995 = vmatpush2.msra.mxu0 0.0
    %1996 = vmatprep.subr.mxu0 0.0
    %1997 = vmatpush2.msra.mxu0 0.0
    %1998 = vmatprep.subr.mxu0 0.0
    %1999 = vmatpush2.msra.mxu0 0.0
    %2000 = vmatprep.subr.mxu0 0.0
    %2001 = vmatpush2.msra.mxu0 0.0
    %2002 = vmatprep.subr.mxu0 0.0
    %2003 = vmatpush2.msra.mxu0 0.0
    %2004 = vmatprep.subr.mxu0 0.0
    %2005 = vmatpush2.msra.mxu0 0.0
    %2006 = vmatprep.subr.mxu0 0.0
    %2007 = vmatpush2.msra.mxu0 0.0
    %2008 = vmatprep.subr.mxu0 0.0
    %2009 = vmatpush2.msra.mxu0 0.0
    %2010 = vmatprep.subr.mxu0 0.0
    %2011 = vmatpush2.msra.mxu0 0.0
    %2012 = vmatprep.subr.mxu0 0.0
    %2013 = vmatpush2.msra.mxu0 0.0
    %2014 = vmatprep.mubr.f32.mxu0 0.0
    %2015 = vmatmul.mubr.f32.gmra.mxu0 %v1945
    %v2016 = vpop.f32.mrf.mxu0
    %v2017 = vadd.f32 %v1943, %v2016
    %v2018 = vpop.f32.mrf.mxu0
    %2019 = vmatprep.mubr.f32.mxu0 0.0
    %2020 = vmatmul.mubr.f32.gmra.mxu0 %v1948
    %v2021 = vpop.f32.mrf.mxu0
    %v2022 = vadd.f32 %v1943, %v2021
    %v2023 = vpop.f32.mrf.mxu0
    %2024 = vdwg.mxu0
    %v2025 = vmax.f32 %v2017, 0.0
    %v2026 = vmax.f32 %v2022, 0.0
    %vm2027 = vcmask 523264
    %v2029 = vsel %vm2027, %v2025, 0
    %v2032 = vsel %vm2027, %v2026, 0
    %2034 = vmatprep.subr.mxu0 0.0
    %2035 = vmatpush1.msra.mxu0 0.0
    %2036 = vmatprep.subr.mxu0 0.0
    %2037 = vmatpush1.msra.mxu0 0.0
    %2038 = vmatprep.subr.mxu0 0.0
    %2039 = vmatpush1.msra.mxu0 0.0
    %2040 = vmatprep.subr.mxu0 0.0
    %2041 = vmatpush1.msra.mxu0 0.0
    %2042 = vmatprep.subr.mxu0 0.0
    %2043 = vmatpush1.msra.mxu0 0.0
    %2044 = vmatprep.subr.mxu0 0.0
    %2045 = vmatpush1.msra.mxu0 0.0
    %2046 = vmatprep.subr.mxu0 0.0
    %2047 = vmatpush1.msra.mxu0 0.0
    %2048 = vmatprep.subr.mxu0 0.0
    %2049 = vmatpush1.msra.mxu0 0.0
    %2050 = vmatprep.subr.mxu0 0.0
    %2051 = vmatpush1.msra.mxu0 %v334
    %2052 = vmatprep.subr.mxu0 0.0
    %2053 = vmatpush1.msra.mxu0 %v333
    %2054 = vmatprep.subr.mxu0 0.0
    %2055 = vmatpush1.msra.mxu0 %v332
    %2056 = vmatprep.subr.mxu0 0.0
    %2057 = vmatpush1.msra.mxu0 %v331
    %2058 = vmatprep.subr.mxu0 0.0
    %2059 = vmatpush1.msra.mxu0 %v330
    %2060 = vmatprep.subr.mxu0 0.0
    %2061 = vmatpush1.msra.mxu0 %v329
    %2062 = vmatprep.subr.mxu0 0.0
    %2063 = vmatpush1.msra.mxu0 %v328
    %2064 = vmatprep.subr.mxu0 0.0
    %2065 = vmatpush1.msra.mxu0 %v327
    %2066 = vmatprep.subr.mxu0 0.0
    %2067 = vmatpush2.msra.mxu0 0.0
    %2068 = vmatprep.subr.mxu0 0.0
    %2069 = vmatpush2.msra.mxu0 0.0
    %2070 = vmatprep.subr.mxu0 0.0
    %2071 = vmatpush2.msra.mxu0 0.0
    %2072 = vmatprep.subr.mxu0 0.0
    %2073 = vmatpush2.msra.mxu0 0.0
    %2074 = vmatprep.subr.mxu0 0.0
    %2075 = vmatpush2.msra.mxu0 0.0
    %2076 = vmatprep.subr.mxu0 0.0
    %2077 = vmatpush2.msra.mxu0 0.0
    %2078 = vmatprep.subr.mxu0 0.0
    %2079 = vmatpush2.msra.mxu0 0.0
    %2080 = vmatprep.subr.mxu0 0.0
    %2081 = vmatpush2.msra.mxu0 0.0
    %2082 = vmatprep.subr.mxu0 0.0
    %2083 = vmatpush2.msra.mxu0 0.0
    %2084 = vmatprep.subr.mxu0 0.0
    %2085 = vmatpush2.msra.mxu0 0.0
    %2086 = vmatprep.subr.mxu0 0.0
    %2087 = vmatpush2.msra.mxu0 0.0
    %2088 = vmatprep.subr.mxu0 0.0
    %2089 = vmatpush2.msra.mxu0 0.0
    %2090 = vmatprep.subr.mxu0 0.0
    %2091 = vmatpush2.msra.mxu0 0.0
    %2092 = vmatprep.subr.mxu0 0.0
    %2093 = vmatpush2.msra.mxu0 0.0
    %2094 = vmatprep.subr.mxu0 0.0
    %2095 = vmatpush2.msra.mxu0 0.0
    %2096 = vmatprep.subr.mxu0 0.0
    %2097 = vmatpush2.msra.mxu0 0.0
    %2098 = vmatprep.mubr.f32.mxu0 0.0
    %2099 = vmatmul.mubr.f32.gmra.mxu0 %v2029
    %v2100 = vpop.f32.mrf.mxu0
    %v2101 = vadd.f32 0.0, %v2100
    %v2102 = vpop.f32.mrf.mxu0
    %2103 = vmatprep.mubr.f32.mxu0 0.0
    %2104 = vmatmul.mubr.f32.gmra.mxu0 %v2032
    %v2105 = vpop.f32.mrf.mxu0
    %v2106 = vadd.f32 0.0, %v2105
    %v2107 = vpop.f32.mrf.mxu0
    %2108 = vdwg.mxu0
    %v2109 = vadd.f32 %v1876, %v2101
    %v2110 = vadd.f32 %v1877, %v2106
    %v2111 = vlaneseq
    %v2112 = vshrl.u32 %v2111, 7
    %v2113 = vsub.s32 7, %v2112
    %v2114 = vrot.slane %v335, %v2113
    %v2115 = vadd.f32 %v2109, %v2114
    %v2116 = vadd.f32 %v2110, %v2114
    %s2117 = scalar_lea.vmem %s3, 32
    %v2118 = vld [vmem:[%s2117] sm:$0xff]
    %v2119 = vld [vmem:[%s2117 + $0x8] sm:$0xff]
    %v2120 = vld [vmem:[%s2117 + $0x10] sm:$0xff]
    %v2121 = vld [vmem:[%s2117 + $0x18] sm:$0xff]
    %s2122 = scalar_lea.vmem [#allocation7], 32
    %v2123 = vld [vmem:[%s2122] sm:$0xff]
    %v2124 = vld [vmem:[%s2122 + $0x8] sm:$0xff]
    %v2125 = vld [vmem:[%s2122 + $0x10] sm:$0xff]
    %v2126 = vld [vmem:[%s2122 + $0x18] sm:$0xff]
    %s2127 = scalar_lea.vmem %s5, 64
    %v2128 = vld [vmem:[%s2127] sm:$0xff]
    %v2129 = vld [vmem:[%s2127 + $0x8] sm:$0xff]
    %v2130 = vld [vmem:[%s2127 + $0x10] sm:$0xff]
    %v2131 = vld [vmem:[%s2127 + $0x18] sm:$0xff]
    %v2132 = vld [vmem:[%s2127 + $0x20] sm:$0xff]
    %v2133 = vld [vmem:[%s2127 + $0x28] sm:$0xff]
    %v2134 = vld [vmem:[%s2127 + $0x30] sm:$0xff]
    %v2135 = vld [vmem:[%s2127 + $0x38] sm:$0xff]
    %s2136 = scalar_lea.vmem [#allocation8], 16
    %v2137 = vld [vmem:[%s2136] sm:$0xff]
    %v2138 = vld [vmem:[%s2136 + $0x8] sm:$0xff]
    %v2139 = vlaneseq
    %v2140 = vshrl.u32 %v2139, 7
    %v2141 = vsub.s32 3, %v2140
    %v2142 = vrot.slane %v2137, %v2141
    %v2143 = vadd.f32 %v281, %v2142
    %v2144 = vadd.f32 %v287, %v2142
    %v2145 = vadd.f32 %v293, %v2142
    %v2146 = vadd.f32 %v299, %v2142
    %v2147 = vsel %vm110, %v2115, 0.0
    %2148 = vadd.xlane.f32.xlu0 %v2147
    %v2149 = vpop.xlane.xlu0 %2148
    %v2150 = vsel %vm110, %v2116, 0.0
    %2151 = vadd.xlane.f32.xlu0 %v2150
    %v2152 = vpop.xlane.xlu0 %2151
    %v2153 = vmul.f32 %v2149, 0.03125
    %v2154 = vmul.f32 %v2152, 0.03125
    %v2155 = vmul.f32 %v2115, %v2115
    %v2156 = vmul.f32 %v2116, %v2116
    %v2157 = vsel %vm110, %v2155, 0.0
    %2158 = vadd.xlane.f32.xlu0 %v2157
    %v2159 = vpop.xlane.xlu0 %2158
    %v2160 = vsel %vm110, %v2156, 0.0
    %2161 = vadd.xlane.f32.xlu0 %v2160
    %v2162 = vpop.xlane.xlu0 %2161
    %v2163 = vmul.f32 %v2153, 32.0
    %v2164 = vmul.f32 %v2154, 32.0
    %v2165 = vmul.f32 %v2163, %v2153
    %v2166 = vmul.f32 %v2164, %v2154
    %v2167 = vsub.f32 %v2159, %v2165
    %v2168 = vsub.f32 %v2162, %v2166
    %v2169 = vmul.f32 %v2167, 0.032258064
    %v2170 = vmul.f32 %v2168, 0.032258064
    %v2171 = vmax.f32 %v2169, 0.0
    %v2172 = vmax.f32 %v2170, 0.0
    %v2173 = vrsqrt.pop %v2171
    %v2174 = vmul.f32 %v2171, %v2173
    %vm2175 = vcmp.eq.f32.partialorder %v2171, inf
    %v2176 = vsel %vm2175, %v2171, %v2174
    %vm2177 = vcmp.eq.f32.partialorder %v2171, 0.0
    %v2178 = vand.u32 %v2171, 2147483648
    %v2179 = vsel %vm2177, %v2178, %v2176
    %v2180 = vrsqrt.pop %v2172
    %v2181 = vmul.f32 %v2172, %v2180
    %vm2182 = vcmp.eq.f32.partialorder %v2172, inf
    %v2183 = vsel %vm2182, %v2172, %v2181
    %vm2184 = vcmp.eq.f32.partialorder %v2172, 0.0
    %v2185 = vand.u32 %v2172, 2147483648
    %v2186 = vsel %vm2184, %v2185, %v2183
    %v2187 = vadd.f32 %v2179, 1e-06
    %v2188 = vadd.f32 %v2186, 1e-06
    %v2189 = vrcp.pop %v2187
    %v2190 = vmul.f32 1.0, %v2189
    %v2191 = vrcp.pop %v2188
    %v2192 = vmul.f32 1.0, %v2191
    %v2193 = vsub.f32 %v2115, %v2153
    %v2194 = vsub.f32 %v2116, %v2154
    %v2195 = vlaneseq
    %v2196 = vshrl.u32 %v2195, 7
    %v2197 = vsub.s32 0, %v2196
    %v2198 = vrot.slane %v2137, %v2197
    %v2199 = vmul.f32 %v2198, %v2193
    %v2200 = vmul.f32 %v2198, %v2194
    %v2201 = vmul.f32 %v2199, %v2190
    %v2202 = vmul.f32 %v2200, %v2192
    %v2203 = vlaneseq
    %v2204 = vshrl.u32 %v2203, 7
    %v2205 = vsub.s32 1, %v2204
    %v2206 = vrot.slane %v2137, %v2205
    %v2207 = vadd.f32 %v2201, %v2206
    %v2208 = vadd.f32 %v2202, %v2206
    %v2209 = vlaneseq
    %v2210 = vshrl.u32 %v2209, 7
    %v2211 = vsub.s32 2, %v2210
    %v2212 = vrot.slane %v2137, %v2211
    %v2214 = vsel %vm110, %v2207, 0
    %v2217 = vsel %vm110, %v2208, 0
    %2219 = vmatprep.subr.mxu0 0.0
    %2220 = vmatpush1.msra.mxu0 0.0
    %2221 = vmatprep.subr.mxu0 0.0
    %2222 = vmatpush1.msra.mxu0 0.0
    %2223 = vmatprep.subr.mxu0 0.0
    %2224 = vmatpush1.msra.mxu0 0.0
    %2225 = vmatprep.subr.mxu0 0.0
    %2226 = vmatpush1.msra.mxu0 0.0
    %2227 = vmatprep.subr.mxu0 0.0
    %2228 = vmatpush1.msra.mxu0 0.0
    %2229 = vmatprep.subr.mxu0 0.0
    %2230 = vmatpush1.msra.mxu0 0.0
    %2231 = vmatprep.subr.mxu0 0.0
    %2232 = vmatpush1.msra.mxu0 0.0
    %2233 = vmatprep.subr.mxu0 0.0
    %2234 = vmatpush1.msra.mxu0 0.0
    %2235 = vmatprep.subr.mxu0 0.0
    %2236 = vmatpush1.msra.mxu0 0.0
    %2237 = vmatprep.subr.mxu0 0.0
    %2238 = vmatpush1.msra.mxu0 0.0
    %2239 = vmatprep.subr.mxu0 0.0
    %2240 = vmatpush1.msra.mxu0 0.0
    %2241 = vmatprep.subr.mxu0 0.0
    %2242 = vmatpush1.msra.mxu0 0.0
    %2243 = vmatprep.subr.mxu0 0.0
    %2244 = vmatpush1.msra.mxu0 %v2121
    %2245 = vmatprep.subr.mxu0 0.0
    %2246 = vmatpush1.msra.mxu0 %v2120
    %2247 = vmatprep.subr.mxu0 0.0
    %2248 = vmatpush1.msra.mxu0 %v2119
    %2249 = vmatprep.subr.mxu0 0.0
    %2250 = vmatpush1.msra.mxu0 %v2118
    %2251 = vmatprep.subr.mxu0 0.0
    %2252 = vmatpush2.msra.mxu0 0.0
    %2253 = vmatprep.subr.mxu0 0.0
    %2254 = vmatpush2.msra.mxu0 0.0
    %2255 = vmatprep.subr.mxu0 0.0
    %2256 = vmatpush2.msra.mxu0 0.0
    %2257 = vmatprep.subr.mxu0 0.0
    %2258 = vmatpush2.msra.mxu0 0.0
    %2259 = vmatprep.subr.mxu0 0.0
    %2260 = vmatpush2.msra.mxu0 0.0
    %2261 = vmatprep.subr.mxu0 0.0
    %2262 = vmatpush2.msra.mxu0 0.0
    %2263 = vmatprep.subr.mxu0 0.0
    %2264 = vmatpush2.msra.mxu0 0.0
    %2265 = vmatprep.subr.mxu0 0.0
    %2266 = vmatpush2.msra.mxu0 0.0
    %2267 = vmatprep.subr.mxu0 0.0
    %2268 = vmatpush2.msra.mxu0 0.0
    %2269 = vmatprep.subr.mxu0 0.0
    %2270 = vmatpush2.msra.mxu0 0.0
    %2271 = vmatprep.subr.mxu0 0.0
    %2272 = vmatpush2.msra.mxu0 0.0
    %2273 = vmatprep.subr.mxu0 0.0
    %2274 = vmatpush2.msra.mxu0 0.0
    %2275 = vmatprep.subr.mxu0 0.0
    %2276 = vmatpush2.msra.mxu0 0.0
    %2277 = vmatprep.subr.mxu0 0.0
    %2278 = vmatpush2.msra.mxu0 0.0
    %2279 = vmatprep.subr.mxu0 0.0
    %2280 = vmatpush2.msra.mxu0 0.0
    %2281 = vmatprep.subr.mxu0 0.0
    %2282 = vmatpush2.msra.mxu0 0.0
    %2283 = vmatprep.mubr.f32.mxu0 0.0
    %2284 = vmatmul.mubr.f32.gmra.mxu0 %v2214
    %v2285 = vpop.f32.mrf.mxu0
    %v2286 = vadd.f32 %v2212, %v2285
    %v2287 = vpop.f32.mrf.mxu0
    %2288 = vmatprep.mubr.f32.mxu0 0.0
    %2289 = vmatmul.mubr.f32.gmra.mxu0 %v2217
    %v2290 = vpop.f32.mrf.mxu0
    %v2291 = vadd.f32 %v2212, %v2290
    %v2292 = vpop.f32.mrf.mxu0
    %2293 = vdwg.mxu0
    %v2295 = vsel %vm492, %v2286, 0
    %v2298 = vsel %vm492, %v2143, 0
    %v2301 = vsel %vm492, %v2144, 0
    %2303 = vmatprep.subr.mxu0 0.0
    %2304 = vmatpush1.xpose.msra.mxu0 0.0
    %2305 = vmatprep.subr.mxu0 0.0
    %2306 = vmatpush1.xpose.msra.mxu0 0.0
    %2307 = vmatprep.subr.mxu0 0.0
    %2308 = vmatpush1.xpose.msra.mxu0 0.0
    %2309 = vmatprep.subr.mxu0 0.0
    %2310 = vmatpush1.xpose.msra.mxu0 0.0
    %2311 = vmatprep.subr.mxu0 0.0
    %2312 = vmatpush1.xpose.msra.mxu0 0.0
    %2313 = vmatprep.subr.mxu0 0.0
    %2314 = vmatpush1.xpose.msra.mxu0 0.0
    %2315 = vmatprep.subr.mxu0 0.0
    %2316 = vmatpush1.xpose.msra.mxu0 0.0
    %2317 = vmatprep.subr.mxu0 0.0
    %2318 = vmatpush1.xpose.msra.mxu0 0.0
    %2319 = vmatprep.subr.mxu0 0.0
    %2320 = vmatpush1.xpose.msra.mxu0 0.0
    %2321 = vmatprep.subr.mxu0 0.0
    %2322 = vmatpush1.xpose.msra.mxu0 0.0
    %2323 = vmatprep.subr.mxu0 0.0
    %2324 = vmatpush1.xpose.msra.mxu0 0.0
    %2325 = vmatprep.subr.mxu0 0.0
    %2326 = vmatpush1.xpose.msra.mxu0 0.0
    %2327 = vmatprep.subr.mxu0 0.0
    %2328 = vmatpush1.xpose.msra.mxu0 0.0
    %2329 = vmatprep.subr.mxu0 0.0
    %2330 = vmatpush1.xpose.msra.mxu0 0.0
    %2331 = vmatprep.subr.mxu0 0.0
    %2332 = vmatpush1.xpose.msra.mxu0 %v2301
    %2333 = vmatprep.subr.mxu0 0.0
    %2334 = vmatpush1.xpose.msra.mxu0 %v2298
    %2335 = vmatprep.subr.mxu0 0.0
    %2336 = vmatpush2.xpose.msra.mxu0 0.0
    %2337 = vmatprep.subr.mxu0 0.0
    %2338 = vmatpush2.xpose.msra.mxu0 0.0
    %2339 = vmatprep.subr.mxu0 0.0
    %2340 = vmatpush2.xpose.msra.mxu0 0.0
    %2341 = vmatprep.subr.mxu0 0.0
    %2342 = vmatpush2.xpose.msra.mxu0 0.0
    %2343 = vmatprep.subr.mxu0 0.0
    %2344 = vmatpush2.xpose.msra.mxu0 0.0
    %2345 = vmatprep.subr.mxu0 0.0
    %2346 = vmatpush2.xpose.msra.mxu0 0.0
    %2347 = vmatprep.subr.mxu0 0.0
    %2348 = vmatpush2.xpose.msra.mxu0 0.0
    %2349 = vmatprep.subr.mxu0 0.0
    %2350 = vmatpush2.xpose.msra.mxu0 0.0
    %2351 = vmatprep.subr.mxu0 0.0
    %2352 = vmatpush2.xpose.msra.mxu0 0.0
    %2353 = vmatprep.subr.mxu0 0.0
    %2354 = vmatpush2.xpose.msra.mxu0 0.0
    %2355 = vmatprep.subr.mxu0 0.0
    %2356 = vmatpush2.xpose.msra.mxu0 0.0
    %2357 = vmatprep.subr.mxu0 0.0
    %2358 = vmatpush2.xpose.msra.mxu0 0.0
    %2359 = vmatprep.subr.mxu0 0.0
    %2360 = vmatpush2.xpose.msra.mxu0 0.0
    %2361 = vmatprep.subr.mxu0 0.0
    %2362 = vmatpush2.xpose.msra.mxu0 0.0
    %2363 = vmatprep.subr.mxu0 0.0
    %2364 = vmatpush2.xpose.msra.mxu0 0.0
    %2365 = vmatprep.subr.mxu0 0.0
    %2366 = vmatpush2.xpose.msra.mxu0 0.0
    %2367 = vmatprep.mubr.f32.mxu0 0.0
    %2368 = vmatmul.mubr.f32.gmra.mxu0 %v2295
    %v2369 = vpop.f32.mrf.mxu0
    %v2370 = vadd.f32 0.0, %v2369
    %v2371 = vpop.f32.mrf.mxu0
    %2372 = vdwg.mxu0
    %v2374 = vsel %vm492, %v2291, 0
    %v2377 = vsel %vm492, %v2145, 0
    %v2380 = vsel %vm492, %v2146, 0
    %2382 = vmatprep.subr.mxu0 0.0
    %2383 = vmatpush1.xpose.msra.mxu0 0.0
    %2384 = vmatprep.subr.mxu0 0.0
    %2385 = vmatpush1.xpose.msra.mxu0 0.0
    %2386 = vmatprep.subr.mxu0 0.0
    %2387 = vmatpush1.xpose.msra.mxu0 0.0
    %2388 = vmatprep.subr.mxu0 0.0
    %2389 = vmatpush1.xpose.msra.mxu0 0.0
    %2390 = vmatprep.subr.mxu0 0.0
    %2391 = vmatpush1.xpose.msra.mxu0 0.0
    %2392 = vmatprep.subr.mxu0 0.0
    %2393 = vmatpush1.xpose.msra.mxu0 0.0
    %2394 = vmatprep.subr.mxu0 0.0
    %2395 = vmatpush1.xpose.msra.mxu0 0.0
    %2396 = vmatprep.subr.mxu0 0.0
    %2397 = vmatpush1.xpose.msra.mxu0 0.0
    %2398 = vmatprep.subr.mxu0 0.0
    %2399 = vmatpush1.xpose.msra.mxu0 0.0
    %2400 = vmatprep.subr.mxu0 0.0
    %2401 = vmatpush1.xpose.msra.mxu0 0.0
    %2402 = vmatprep.subr.mxu0 0.0
    %2403 = vmatpush1.xpose.msra.mxu0 0.0
    %2404 = vmatprep.subr.mxu0 0.0
    %2405 = vmatpush1.xpose.msra.mxu0 0.0
    %2406 = vmatprep.subr.mxu0 0.0
    %2407 = vmatpush1.xpose.msra.mxu0 0.0
    %2408 = vmatprep.subr.mxu0 0.0
    %2409 = vmatpush1.xpose.msra.mxu0 0.0
    %2410 = vmatprep.subr.mxu0 0.0
    %2411 = vmatpush1.xpose.msra.mxu0 %v2380
    %2412 = vmatprep.subr.mxu0 0.0
    %2413 = vmatpush1.xpose.msra.mxu0 %v2377
    %2414 = vmatprep.subr.mxu0 0.0
    %2415 = vmatpush2.xpose.msra.mxu0 0.0
    %2416 = vmatprep.subr.mxu0 0.0
    %2417 = vmatpush2.xpose.msra.mxu0 0.0
    %2418 = vmatprep.subr.mxu0 0.0
    %2419 = vmatpush2.xpose.msra.mxu0 0.0
    %2420 = vmatprep.subr.mxu0 0.0
    %2421 = vmatpush2.xpose.msra.mxu0 0.0
    %2422 = vmatprep.subr.mxu0 0.0
    %2423 = vmatpush2.xpose.msra.mxu0 0.0
    %2424 = vmatprep.subr.mxu0 0.0
    %2425 = vmatpush2.xpose.msra.mxu0 0.0
    %2426 = vmatprep.subr.mxu0 0.0
    %2427 = vmatpush2.xpose.msra.mxu0 0.0
    %2428 = vmatprep.subr.mxu0 0.0
    %2429 = vmatpush2.xpose.msra.mxu0 0.0
    %2430 = vmatprep.subr.mxu0 0.0
    %2431 = vmatpush2.xpose.msra.mxu0 0.0
    %2432 = vmatprep.subr.mxu0 0.0
    %2433 = vmatpush2.xpose.msra.mxu0 0.0
    %2434 = vmatprep.subr.mxu0 0.0
    %2435 = vmatpush2.xpose.msra.mxu0 0.0
    %2436 = vmatprep.subr.mxu0 0.0
    %2437 = vmatpush2.xpose.msra.mxu0 0.0
    %2438 = vmatprep.subr.mxu0 0.0
    %2439 = vmatpush2.xpose.msra.mxu0 0.0
    %2440 = vmatprep.subr.mxu0 0.0
    %2441 = vmatpush2.xpose.msra.mxu0 0.0
    %2442 = vmatprep.subr.mxu0 0.0
    %2443 = vmatpush2.xpose.msra.mxu0 0.0
    %2444 = vmatprep.subr.mxu0 0.0
    %2445 = vmatpush2.xpose.msra.mxu0 0.0
    %2446 = vmatprep.mubr.f32.mxu0 0.0
    %2447 = vmatmul.mubr.f32.gmra.mxu0 %v2374
    %v2448 = vpop.f32.mrf.mxu0
    %v2449 = vadd.f32 0.0, %v2448
    %v2450 = vpop.f32.mrf.mxu0
    %2451 = vdwg.mxu0
    %2452 = vrot.lane.b32.xlu0 %v2286, 120
    %v2453 = vpop.permute.xlu0 %2452
    %2454 = vrot.lane.b32.xlu0 %v2143, 120
    %v2455 = vpop.permute.xlu0 %2454
    %2456 = vrot.lane.b32.xlu0 %v2144, 120
    %v2457 = vpop.permute.xlu0 %2456
    %v2458 = vsel %vm492, %v2453, 0
    %v2460 = vsel %vm492, %v2455, 0
    %v2462 = vsel %vm492, %v2457, 0
    %2464 = vmatprep.subr.mxu0 0.0
    %2465 = vmatpush1.xpose.msra.mxu0 0.0
    %2466 = vmatprep.subr.mxu0 0.0
    %2467 = vmatpush1.xpose.msra.mxu0 0.0
    %2468 = vmatprep.subr.mxu0 0.0
    %2469 = vmatpush1.xpose.msra.mxu0 0.0
    %2470 = vmatprep.subr.mxu0 0.0
    %2471 = vmatpush1.xpose.msra.mxu0 0.0
    %2472 = vmatprep.subr.mxu0 0.0
    %2473 = vmatpush1.xpose.msra.mxu0 0.0
    %2474 = vmatprep.subr.mxu0 0.0
    %2475 = vmatpush1.xpose.msra.mxu0 0.0
    %2476 = vmatprep.subr.mxu0 0.0
    %2477 = vmatpush1.xpose.msra.mxu0 0.0
    %2478 = vmatprep.subr.mxu0 0.0
    %2479 = vmatpush1.xpose.msra.mxu0 0.0
    %2480 = vmatprep.subr.mxu0 0.0
    %2481 = vmatpush1.xpose.msra.mxu0 0.0
    %2482 = vmatprep.subr.mxu0 0.0
    %2483 = vmatpush1.xpose.msra.mxu0 0.0
    %2484 = vmatprep.subr.mxu0 0.0
    %2485 = vmatpush1.xpose.msra.mxu0 0.0
    %2486 = vmatprep.subr.mxu0 0.0
    %2487 = vmatpush1.xpose.msra.mxu0 0.0
    %2488 = vmatprep.subr.mxu0 0.0
    %2489 = vmatpush1.xpose.msra.mxu0 0.0
    %2490 = vmatprep.subr.mxu0 0.0
    %2491 = vmatpush1.xpose.msra.mxu0 0.0
    %2492 = vmatprep.subr.mxu0 0.0
    %2493 = vmatpush1.xpose.msra.mxu0 %v2462
    %2494 = vmatprep.subr.mxu0 0.0
    %2495 = vmatpush1.xpose.msra.mxu0 %v2460
    %2496 = vmatprep.subr.mxu0 0.0
    %2497 = vmatpush2.xpose.msra.mxu0 0.0
    %2498 = vmatprep.subr.mxu0 0.0
    %2499 = vmatpush2.xpose.msra.mxu0 0.0
    %2500 = vmatprep.subr.mxu0 0.0
    %2501 = vmatpush2.xpose.msra.mxu0 0.0
    %2502 = vmatprep.subr.mxu0 0.0
    %2503 = vmatpush2.xpose.msra.mxu0 0.0
    %2504 = vmatprep.subr.mxu0 0.0
    %2505 = vmatpush2.xpose.msra.mxu0 0.0
    %2506 = vmatprep.subr.mxu0 0.0
    %2507 = vmatpush2.xpose.msra.mxu0 0.0
    %2508 = vmatprep.subr.mxu0 0.0
    %2509 = vmatpush2.xpose.msra.mxu0 0.0
    %2510 = vmatprep.subr.mxu0 0.0
    %2511 = vmatpush2.xpose.msra.mxu0 0.0
    %2512 = vmatprep.subr.mxu0 0.0
    %2513 = vmatpush2.xpose.msra.mxu0 0.0
    %2514 = vmatprep.subr.mxu0 0.0
    %2515 = vmatpush2.xpose.msra.mxu0 0.0
    %2516 = vmatprep.subr.mxu0 0.0
    %2517 = vmatpush2.xpose.msra.mxu0 0.0
    %2518 = vmatprep.subr.mxu0 0.0
    %2519 = vmatpush2.xpose.msra.mxu0 0.0
    %2520 = vmatprep.subr.mxu0 0.0
    %2521 = vmatpush2.xpose.msra.mxu0 0.0
    %2522 = vmatprep.subr.mxu0 0.0
    %2523 = vmatpush2.xpose.msra.mxu0 0.0
    %2524 = vmatprep.subr.mxu0 0.0
    %2525 = vmatpush2.xpose.msra.mxu0 0.0
    %2526 = vmatprep.subr.mxu0 0.0
    %2527 = vmatpush2.xpose.msra.mxu0 0.0
    %2528 = vmatprep.mubr.f32.mxu0 0.0
    %2529 = vmatmul.mubr.f32.gmra.mxu0 %v2458
    %v2530 = vpop.f32.mrf.mxu0
    %v2531 = vadd.f32 0.0, %v2530
    %v2532 = vpop.f32.mrf.mxu0
    %2533 = vdwg.mxu0
    %2534 = vrot.lane.b32.xlu0 %v2291, 120
    %v2535 = vpop.permute.xlu0 %2534
    %2536 = vrot.lane.b32.xlu0 %v2145, 120
    %v2537 = vpop.permute.xlu0 %2536
    %2538 = vrot.lane.b32.xlu0 %v2146, 120
    %v2539 = vpop.permute.xlu0 %2538
    %v2540 = vsel %vm492, %v2535, 0
    %v2542 = vsel %vm492, %v2537, 0
    %v2544 = vsel %vm492, %v2539, 0
    %2546 = vmatprep.subr.mxu0 0.0
    %2547 = vmatpush1.xpose.msra.mxu0 0.0
    %2548 = vmatprep.subr.mxu0 0.0
    %2549 = vmatpush1.xpose.msra.mxu0 0.0
    %2550 = vmatprep.subr.mxu0 0.0
    %2551 = vmatpush1.xpose.msra.mxu0 0.0
    %2552 = vmatprep.subr.mxu0 0.0
    %2553 = vmatpush1.xpose.msra.mxu0 0.0
    %2554 = vmatprep.subr.mxu0 0.0
    %2555 = vmatpush1.xpose.msra.mxu0 0.0
    %2556 = vmatprep.subr.mxu0 0.0
    %2557 = vmatpush1.xpose.msra.mxu0 0.0
    %2558 = vmatprep.subr.mxu0 0.0
    %2559 = vmatpush1.xpose.msra.mxu0 0.0
    %2560 = vmatprep.subr.mxu0 0.0
    %2561 = vmatpush1.xpose.msra.mxu0 0.0
    %2562 = vmatprep.subr.mxu0 0.0
    %2563 = vmatpush1.xpose.msra.mxu0 0.0
    %2564 = vmatprep.subr.mxu0 0.0
    %2565 = vmatpush1.xpose.msra.mxu0 0.0
    %2566 = vmatprep.subr.mxu0 0.0
    %2567 = vmatpush1.xpose.msra.mxu0 0.0
    %2568 = vmatprep.subr.mxu0 0.0
    %2569 = vmatpush1.xpose.msra.mxu0 0.0
    %2570 = vmatprep.subr.mxu0 0.0
    %2571 = vmatpush1.xpose.msra.mxu0 0.0
    %2572 = vmatprep.subr.mxu0 0.0
    %2573 = vmatpush1.xpose.msra.mxu0 0.0
    %2574 = vmatprep.subr.mxu0 0.0
    %2575 = vmatpush1.xpose.msra.mxu0 %v2544
    %2576 = vmatprep.subr.mxu0 0.0
    %2577 = vmatpush1.xpose.msra.mxu0 %v2542
    %2578 = vmatprep.subr.mxu0 0.0
    %2579 = vmatpush2.xpose.msra.mxu0 0.0
    %2580 = vmatprep.subr.mxu0 0.0
    %2581 = vmatpush2.xpose.msra.mxu0 0.0
    %2582 = vmatprep.subr.mxu0 0.0
    %2583 = vmatpush2.xpose.msra.mxu0 0.0
    %2584 = vmatprep.subr.mxu0 0.0
    %2585 = vmatpush2.xpose.msra.mxu0 0.0
    %2586 = vmatprep.subr.mxu0 0.0
    %2587 = vmatpush2.xpose.msra.mxu0 0.0
    %2588 = vmatprep.subr.mxu0 0.0
    %2589 = vmatpush2.xpose.msra.mxu0 0.0
    %2590 = vmatprep.subr.mxu0 0.0
    %2591 = vmatpush2.xpose.msra.mxu0 0.0
    %2592 = vmatprep.subr.mxu0 0.0
    %2593 = vmatpush2.xpose.msra.mxu0 0.0
    %2594 = vmatprep.subr.mxu0 0.0
    %2595 = vmatpush2.xpose.msra.mxu0 0.0
    %2596 = vmatprep.subr.mxu0 0.0
    %2597 = vmatpush2.xpose.msra.mxu0 0.0
    %2598 = vmatprep.subr.mxu0 0.0
    %2599 = vmatpush2.xpose.msra.mxu0 0.0
    %2600 = vmatprep.subr.mxu0 0.0
    %2601 = vmatpush2.xpose.msra.mxu0 0.0
    %2602 = vmatprep.subr.mxu0 0.0
    %2603 = vmatpush2.xpose.msra.mxu0 0.0
    %2604 = vmatprep.subr.mxu0 0.0
    %2605 = vmatpush2.xpose.msra.mxu0 0.0
    %2606 = vmatprep.subr.mxu0 0.0
    %2607 = vmatpush2.xpose.msra.mxu0 0.0
    %2608 = vmatprep.subr.mxu0 0.0
    %2609 = vmatpush2.xpose.msra.mxu0 0.0
    %2610 = vmatprep.mubr.f32.mxu0 0.0
    %2611 = vmatmul.mubr.f32.gmra.mxu0 %v2540
    %v2612 = vpop.f32.mrf.mxu0
    %v2613 = vadd.f32 0.0, %v2612
    %v2614 = vpop.f32.mrf.mxu0
    %2615 = vdwg.mxu0
    %2616 = vrot.lane.b32.xlu0 %v2286, 112
    %v2617 = vpop.permute.xlu0 %2616
    %2618 = vrot.lane.b32.xlu0 %v2143, 112
    %v2619 = vpop.permute.xlu0 %2618
    %2620 = vrot.lane.b32.xlu0 %v2144, 112
    %v2621 = vpop.permute.xlu0 %2620
    %v2622 = vsel %vm492, %v2617, 0
    %v2624 = vsel %vm492, %v2619, 0
    %v2626 = vsel %vm492, %v2621, 0
    %2628 = vmatprep.subr.mxu0 0.0
    %2629 = vmatpush1.xpose.msra.mxu0 0.0
    %2630 = vmatprep.subr.mxu0 0.0
    %2631 = vmatpush1.xpose.msra.mxu0 0.0
    %2632 = vmatprep.subr.mxu0 0.0
    %2633 = vmatpush1.xpose.msra.mxu0 0.0
    %2634 = vmatprep.subr.mxu0 0.0
    %2635 = vmatpush1.xpose.msra.mxu0 0.0
    %2636 = vmatprep.subr.mxu0 0.0
    %2637 = vmatpush1.xpose.msra.mxu0 0.0
    %2638 = vmatprep.subr.mxu0 0.0
    %2639 = vmatpush1.xpose.msra.mxu0 0.0
    %2640 = vmatprep.subr.mxu0 0.0
    %2641 = vmatpush1.xpose.msra.mxu0 0.0
    %2642 = vmatprep.subr.mxu0 0.0
    %2643 = vmatpush1.xpose.msra.mxu0 0.0
    %2644 = vmatprep.subr.mxu0 0.0
    %2645 = vmatpush1.xpose.msra.mxu0 0.0
    %2646 = vmatprep.subr.mxu0 0.0
    %2647 = vmatpush1.xpose.msra.mxu0 0.0
    %2648 = vmatprep.subr.mxu0 0.0
    %2649 = vmatpush1.xpose.msra.mxu0 0.0
    %2650 = vmatprep.subr.mxu0 0.0
    %2651 = vmatpush1.xpose.msra.mxu0 0.0
    %2652 = vmatprep.subr.mxu0 0.0
    %2653 = vmatpush1.xpose.msra.mxu0 0.0
    %2654 = vmatprep.subr.mxu0 0.0
    %2655 = vmatpush1.xpose.msra.mxu0 0.0
    %2656 = vmatprep.subr.mxu0 0.0
    %2657 = vmatpush1.xpose.msra.mxu0 %v2626
    %2658 = vmatprep.subr.mxu0 0.0
    %2659 = vmatpush1.xpose.msra.mxu0 %v2624
    %2660 = vmatprep.subr.mxu0 0.0
    %2661 = vmatpush2.xpose.msra.mxu0 0.0
    %2662 = vmatprep.subr.mxu0 0.0
    %2663 = vmatpush2.xpose.msra.mxu0 0.0
    %2664 = vmatprep.subr.mxu0 0.0
    %2665 = vmatpush2.xpose.msra.mxu0 0.0
    %2666 = vmatprep.subr.mxu0 0.0
    %2667 = vmatpush2.xpose.msra.mxu0 0.0
    %2668 = vmatprep.subr.mxu0 0.0
    %2669 = vmatpush2.xpose.msra.mxu0 0.0
    %2670 = vmatprep.subr.mxu0 0.0
    %2671 = vmatpush2.xpose.msra.mxu0 0.0
    %2672 = vmatprep.subr.mxu0 0.0
    %2673 = vmatpush2.xpose.msra.mxu0 0.0
    %2674 = vmatprep.subr.mxu0 0.0
    %2675 = vmatpush2.xpose.msra.mxu0 0.0
    %2676 = vmatprep.subr.mxu0 0.0
    %2677 = vmatpush2.xpose.msra.mxu0 0.0
    %2678 = vmatprep.subr.mxu0 0.0
    %2679 = vmatpush2.xpose.msra.mxu0 0.0
    %2680 = vmatprep.subr.mxu0 0.0
    %2681 = vmatpush2.xpose.msra.mxu0 0.0
    %2682 = vmatprep.subr.mxu0 0.0
    %2683 = vmatpush2.xpose.msra.mxu0 0.0
    %2684 = vmatprep.subr.mxu0 0.0
    %2685 = vmatpush2.xpose.msra.mxu0 0.0
    %2686 = vmatprep.subr.mxu0 0.0
    %2687 = vmatpush2.xpose.msra.mxu0 0.0
    %2688 = vmatprep.subr.mxu0 0.0
    %2689 = vmatpush2.xpose.msra.mxu0 0.0
    %2690 = vmatprep.subr.mxu0 0.0
    %2691 = vmatpush2.xpose.msra.mxu0 0.0
    %2692 = vmatprep.mubr.f32.mxu0 0.0
    %2693 = vmatmul.mubr.f32.gmra.mxu0 %v2622
    %v2694 = vpop.f32.mrf.mxu0
    %v2695 = vadd.f32 0.0, %v2694
    %v2696 = vpop.f32.mrf.mxu0
    %2697 = vdwg.mxu0
    %2698 = vrot.lane.b32.xlu0 %v2291, 112
    %v2699 = vpop.permute.xlu0 %2698
    %2700 = vrot.lane.b32.xlu0 %v2145, 112
    %v2701 = vpop.permute.xlu0 %2700
    %2702 = vrot.lane.b32.xlu0 %v2146, 112
    %v2703 = vpop.permute.xlu0 %2702
    %v2704 = vsel %vm492, %v2699, 0
    %v2706 = vsel %vm492, %v2701, 0
    %v2708 = vsel %vm492, %v2703, 0
    %2710 = vmatprep.subr.mxu0 0.0
    %2711 = vmatpush1.xpose.msra.mxu0 0.0
    %2712 = vmatprep.subr.mxu0 0.0
    %2713 = vmatpush1.xpose.msra.mxu0 0.0
    %2714 = vmatprep.subr.mxu0 0.0
    %2715 = vmatpush1.xpose.msra.mxu0 0.0
    %2716 = vmatprep.subr.mxu0 0.0
    %2717 = vmatpush1.xpose.msra.mxu0 0.0
    %2718 = vmatprep.subr.mxu0 0.0
    %2719 = vmatpush1.xpose.msra.mxu0 0.0
    %2720 = vmatprep.subr.mxu0 0.0
    %2721 = vmatpush1.xpose.msra.mxu0 0.0
    %2722 = vmatprep.subr.mxu0 0.0
    %2723 = vmatpush1.xpose.msra.mxu0 0.0
    %2724 = vmatprep.subr.mxu0 0.0
    %2725 = vmatpush1.xpose.msra.mxu0 0.0
    %2726 = vmatprep.subr.mxu0 0.0
    %2727 = vmatpush1.xpose.msra.mxu0 0.0
    %2728 = vmatprep.subr.mxu0 0.0
    %2729 = vmatpush1.xpose.msra.mxu0 0.0
    %2730 = vmatprep.subr.mxu0 0.0
    %2731 = vmatpush1.xpose.msra.mxu0 0.0
    %2732 = vmatprep.subr.mxu0 0.0
    %2733 = vmatpush1.xpose.msra.mxu0 0.0
    %2734 = vmatprep.subr.mxu0 0.0
    %2735 = vmatpush1.xpose.msra.mxu0 0.0
    %2736 = vmatprep.subr.mxu0 0.0
    %2737 = vmatpush1.xpose.msra.mxu0 0.0
    %2738 = vmatprep.subr.mxu0 0.0
    %2739 = vmatpush1.xpose.msra.mxu0 %v2708
    %2740 = vmatprep.subr.mxu0 0.0
    %2741 = vmatpush1.xpose.msra.mxu0 %v2706
    %2742 = vmatprep.subr.mxu0 0.0
    %2743 = vmatpush2.xpose.msra.mxu0 0.0
    %2744 = vmatprep.subr.mxu0 0.0
    %2745 = vmatpush2.xpose.msra.mxu0 0.0
    %2746 = vmatprep.subr.mxu0 0.0
    %2747 = vmatpush2.xpose.msra.mxu0 0.0
    %2748 = vmatprep.subr.mxu0 0.0
    %2749 = vmatpush2.xpose.msra.mxu0 0.0
    %2750 = vmatprep.subr.mxu0 0.0
    %2751 = vmatpush2.xpose.msra.mxu0 0.0
    %2752 = vmatprep.subr.mxu0 0.0
    %2753 = vmatpush2.xpose.msra.mxu0 0.0
    %2754 = vmatprep.subr.mxu0 0.0
    %2755 = vmatpush2.xpose.msra.mxu0 0.0
    %2756 = vmatprep.subr.mxu0 0.0
    %2757 = vmatpush2.xpose.msra.mxu0 0.0
    %2758 = vmatprep.subr.mxu0 0.0
    %2759 = vmatpush2.xpose.msra.mxu0 0.0
    %2760 = vmatprep.subr.mxu0 0.0
    %2761 = vmatpush2.xpose.msra.mxu0 0.0
    %2762 = vmatprep.subr.mxu0 0.0
    %2763 = vmatpush2.xpose.msra.mxu0 0.0
    %2764 = vmatprep.subr.mxu0 0.0
    %2765 = vmatpush2.xpose.msra.mxu0 0.0
    %2766 = vmatprep.subr.mxu0 0.0
    %2767 = vmatpush2.xpose.msra.mxu0 0.0
    %2768 = vmatprep.subr.mxu0 0.0
    %2769 = vmatpush2.xpose.msra.mxu0 0.0
    %2770 = vmatprep.subr.mxu0 0.0
    %2771 = vmatpush2.xpose.msra.mxu0 0.0
    %2772 = vmatprep.subr.mxu0 0.0
    %2773 = vmatpush2.xpose.msra.mxu0 0.0
    %2774 = vmatprep.mubr.f32.mxu0 0.0
    %2775 = vmatmul.mubr.f32.gmra.mxu0 %v2704
    %v2776 = vpop.f32.mrf.mxu0
    %v2777 = vadd.f32 0.0, %v2776
    %v2778 = vpop.f32.mrf.mxu0
    %2779 = vdwg.mxu0
    %2780 = vrot.lane.b32.xlu0 %v2286, 104
    %v2781 = vpop.permute.xlu0 %2780
    %2782 = vrot.lane.b32.xlu0 %v2143, 104
    %v2783 = vpop.permute.xlu0 %2782
    %2784 = vrot.lane.b32.xlu0 %v2144, 104
    %v2785 = vpop.permute.xlu0 %2784
    %v2786 = vsel %vm492, %v2781, 0
    %v2788 = vsel %vm492, %v2783, 0
    %v2790 = vsel %vm492, %v2785, 0
    %2792 = vmatprep.subr.mxu0 0.0
    %2793 = vmatpush1.xpose.msra.mxu0 0.0
    %2794 = vmatprep.subr.mxu0 0.0
    %2795 = vmatpush1.xpose.msra.mxu0 0.0
    %2796 = vmatprep.subr.mxu0 0.0
    %2797 = vmatpush1.xpose.msra.mxu0 0.0
    %2798 = vmatprep.subr.mxu0 0.0
    %2799 = vmatpush1.xpose.msra.mxu0 0.0
    %2800 = vmatprep.subr.mxu0 0.0
    %2801 = vmatpush1.xpose.msra.mxu0 0.0
    %2802 = vmatprep.subr.mxu0 0.0
    %2803 = vmatpush1.xpose.msra.mxu0 0.0
    %2804 = vmatprep.subr.mxu0 0.0
    %2805 = vmatpush1.xpose.msra.mxu0 0.0
    %2806 = vmatprep.subr.mxu0 0.0
    %2807 = vmatpush1.xpose.msra.mxu0 0.0
    %2808 = vmatprep.subr.mxu0 0.0
    %2809 = vmatpush1.xpose.msra.mxu0 0.0
    %2810 = vmatprep.subr.mxu0 0.0
    %2811 = vmatpush1.xpose.msra.mxu0 0.0
    %2812 = vmatprep.subr.mxu0 0.0
    %2813 = vmatpush1.xpose.msra.mxu0 0.0
    %2814 = vmatprep.subr.mxu0 0.0
    %2815 = vmatpush1.xpose.msra.mxu0 0.0
    %2816 = vmatprep.subr.mxu0 0.0
    %2817 = vmatpush1.xpose.msra.mxu0 0.0
    %2818 = vmatprep.subr.mxu0 0.0
    %2819 = vmatpush1.xpose.msra.mxu0 0.0
    %2820 = vmatprep.subr.mxu0 0.0
    %2821 = vmatpush1.xpose.msra.mxu0 %v2790
    %2822 = vmatprep.subr.mxu0 0.0
    %2823 = vmatpush1.xpose.msra.mxu0 %v2788
    %2824 = vmatprep.subr.mxu0 0.0
    %2825 = vmatpush2.xpose.msra.mxu0 0.0
    %2826 = vmatprep.subr.mxu0 0.0
    %2827 = vmatpush2.xpose.msra.mxu0 0.0
    %2828 = vmatprep.subr.mxu0 0.0
    %2829 = vmatpush2.xpose.msra.mxu0 0.0
    %2830 = vmatprep.subr.mxu0 0.0
    %2831 = vmatpush2.xpose.msra.mxu0 0.0
    %2832 = vmatprep.subr.mxu0 0.0
    %2833 = vmatpush2.xpose.msra.mxu0 0.0
    %2834 = vmatprep.subr.mxu0 0.0
    %2835 = vmatpush2.xpose.msra.mxu0 0.0
    %2836 = vmatprep.subr.mxu0 0.0
    %2837 = vmatpush2.xpose.msra.mxu0 0.0
    %2838 = vmatprep.subr.mxu0 0.0
    %2839 = vmatpush2.xpose.msra.mxu0 0.0
    %2840 = vmatprep.subr.mxu0 0.0
    %2841 = vmatpush2.xpose.msra.mxu0 0.0
    %2842 = vmatprep.subr.mxu0 0.0
    %2843 = vmatpush2.xpose.msra.mxu0 0.0
    %2844 = vmatprep.subr.mxu0 0.0
    %2845 = vmatpush2.xpose.msra.mxu0 0.0
    %2846 = vmatprep.subr.mxu0 0.0
    %2847 = vmatpush2.xpose.msra.mxu0 0.0
    %2848 = vmatprep.subr.mxu0 0.0
    %2849 = vmatpush2.xpose.msra.mxu0 0.0
    %2850 = vmatprep.subr.mxu0 0.0
    %2851 = vmatpush2.xpose.msra.mxu0 0.0
    %2852 = vmatprep.subr.mxu0 0.0
    %2853 = vmatpush2.xpose.msra.mxu0 0.0
    %2854 = vmatprep.subr.mxu0 0.0
    %2855 = vmatpush2.xpose.msra.mxu0 0.0
    %2856 = vmatprep.mubr.f32.mxu0 0.0
    %2857 = vmatmul.mubr.f32.gmra.mxu0 %v2786
    %v2858 = vpop.f32.mrf.mxu0
    %v2859 = vadd.f32 0.0, %v2858
    %v2860 = vpop.f32.mrf.mxu0
    %2861 = vdwg.mxu0
    %2862 = vrot.lane.b32.xlu0 %v2291, 104
    %v2863 = vpop.permute.xlu0 %2862
    %2864 = vrot.lane.b32.xlu0 %v2145, 104
    %v2865 = vpop.permute.xlu0 %2864
    %2866 = vrot.lane.b32.xlu0 %v2146, 104
    %v2867 = vpop.permute.xlu0 %2866
    %v2868 = vsel %vm492, %v2863, 0
    %v2870 = vsel %vm492, %v2865, 0
    %v2872 = vsel %vm492, %v2867, 0
    %2874 = vmatprep.subr.mxu0 0.0
    %2875 = vmatpush1.xpose.msra.mxu0 0.0
    %2876 = vmatprep.subr.mxu0 0.0
    %2877 = vmatpush1.xpose.msra.mxu0 0.0
    %2878 = vmatprep.subr.mxu0 0.0
    %2879 = vmatpush1.xpose.msra.mxu0 0.0
    %2880 = vmatprep.subr.mxu0 0.0
    %2881 = vmatpush1.xpose.msra.mxu0 0.0
    %2882 = vmatprep.subr.mxu0 0.0
    %2883 = vmatpush1.xpose.msra.mxu0 0.0
    %2884 = vmatprep.subr.mxu0 0.0
    %2885 = vmatpush1.xpose.msra.mxu0 0.0
    %2886 = vmatprep.subr.mxu0 0.0
    %2887 = vmatpush1.xpose.msra.mxu0 0.0
    %2888 = vmatprep.subr.mxu0 0.0
    %2889 = vmatpush1.xpose.msra.mxu0 0.0
    %2890 = vmatprep.subr.mxu0 0.0
    %2891 = vmatpush1.xpose.msra.mxu0 0.0
    %2892 = vmatprep.subr.mxu0 0.0
    %2893 = vmatpush1.xpose.msra.mxu0 0.0
    %2894 = vmatprep.subr.mxu0 0.0
    %2895 = vmatpush1.xpose.msra.mxu0 0.0
    %2896 = vmatprep.subr.mxu0 0.0
    %2897 = vmatpush1.xpose.msra.mxu0 0.0
    %2898 = vmatprep.subr.mxu0 0.0
    %2899 = vmatpush1.xpose.msra.mxu0 0.0
    %2900 = vmatprep.subr.mxu0 0.0
    %2901 = vmatpush1.xpose.msra.mxu0 0.0
    %2902 = vmatprep.subr.mxu0 0.0
    %2903 = vmatpush1.xpose.msra.mxu0 %v2872
    %2904 = vmatprep.subr.mxu0 0.0
    %2905 = vmatpush1.xpose.msra.mxu0 %v2870
    %2906 = vmatprep.subr.mxu0 0.0
    %2907 = vmatpush2.xpose.msra.mxu0 0.0
    %2908 = vmatprep.subr.mxu0 0.0
    %2909 = vmatpush2.xpose.msra.mxu0 0.0
    %2910 = vmatprep.subr.mxu0 0.0
    %2911 = vmatpush2.xpose.msra.mxu0 0.0
    %2912 = vmatprep.subr.mxu0 0.0
    %2913 = vmatpush2.xpose.msra.mxu0 0.0
    %2914 = vmatprep.subr.mxu0 0.0
    %2915 = vmatpush2.xpose.msra.mxu0 0.0
    %2916 = vmatprep.subr.mxu0 0.0
    %2917 = vmatpush2.xpose.msra.mxu0 0.0
    %2918 = vmatprep.subr.mxu0 0.0
    %2919 = vmatpush2.xpose.msra.mxu0 0.0
    %2920 = vmatprep.subr.mxu0 0.0
    %2921 = vmatpush2.xpose.msra.mxu0 0.0
    %2922 = vmatprep.subr.mxu0 0.0
    %2923 = vmatpush2.xpose.msra.mxu0 0.0
    %2924 = vmatprep.subr.mxu0 0.0
    %2925 = vmatpush2.xpose.msra.mxu0 0.0
    %2926 = vmatprep.subr.mxu0 0.0
    %2927 = vmatpush2.xpose.msra.mxu0 0.0
    %2928 = vmatprep.subr.mxu0 0.0
    %2929 = vmatpush2.xpose.msra.mxu0 0.0
    %2930 = vmatprep.subr.mxu0 0.0
    %2931 = vmatpush2.xpose.msra.mxu0 0.0
    %2932 = vmatprep.subr.mxu0 0.0
    %2933 = vmatpush2.xpose.msra.mxu0 0.0
    %2934 = vmatprep.subr.mxu0 0.0
    %2935 = vmatpush2.xpose.msra.mxu0 0.0
    %2936 = vmatprep.subr.mxu0 0.0
    %2937 = vmatpush2.xpose.msra.mxu0 0.0
    %2938 = vmatprep.mubr.f32.mxu0 0.0
    %2939 = vmatmul.mubr.f32.gmra.mxu0 %v2868
    %v2940 = vpop.f32.mrf.mxu0
    %v2941 = vadd.f32 0.0, %v2940
    %v2942 = vpop.f32.mrf.mxu0
    %2943 = vdwg.mxu0
    %v2944 = vadd.f32 %v2370, %v312
    %v2945 = vadd.f32 %v2531, %v312
    %v2946 = vadd.f32 %v2695, %v312
    %v2947 = vadd.f32 %v2859, %v312
    %v2948 = vadd.f32 %v2449, %v316
    %v2949 = vadd.f32 %v2613, %v316
    %v2950 = vadd.f32 %v2777, %v316
    %v2951 = vadd.f32 %v2941, %v316
    %v2952 = vsel %vm1151, %v2944, -inf
    %2953 = vmax.xlane.f32.xlu0 %v2952
    %v2954 = vpop.xlane.xlu0 %2953
    %v2955 = vsel %vm1151, %v2945, -inf
    %2956 = vmax.xlane.f32.xlu0 %v2955
    %v2957 = vpop.xlane.xlu0 %2956
    %v2958 = vsel %vm1151, %v2946, -inf
    %2959 = vmax.xlane.f32.xlu0 %v2958
    %v2960 = vpop.xlane.xlu0 %2959
    %v2961 = vsel %vm1151, %v2947, -inf
    %2962 = vmax.xlane.f32.xlu0 %v2961
    %v2963 = vpop.xlane.xlu0 %2962
    %v2964 = vsel %vm1151, %v2948, -inf
    %2965 = vmax.xlane.f32.xlu0 %v2964
    %v2966 = vpop.xlane.xlu0 %2965
    %v2967 = vsel %vm1151, %v2949, -inf
    %2968 = vmax.xlane.f32.xlu0 %v2967
    %v2969 = vpop.xlane.xlu0 %2968
    %v2970 = vsel %vm1151, %v2950, -inf
    %2971 = vmax.xlane.f32.xlu0 %v2970
    %v2972 = vpop.xlane.xlu0 %2971
    %v2973 = vsel %vm1151, %v2951, -inf
    %2974 = vmax.xlane.f32.xlu0 %v2973
    %v2975 = vpop.xlane.xlu0 %2974
    %v2976 = vsub.f32 %v2944, %v2954
    %v2977 = vsub.f32 %v2945, %v2957
    %v2978 = vsub.f32 %v2946, %v2960
    %v2979 = vsub.f32 %v2947, %v2963
    %v2980 = vsub.f32 %v2948, %v2966
    %v2981 = vsub.f32 %v2949, %v2969
    %v2982 = vsub.f32 %v2950, %v2972
    %v2983 = vsub.f32 %v2951, %v2975
    %v2984 = vmul.f32 %v2976, 1.442695
    %v2985 = vpow.pop %v2984
    %v2986 = vmul.f32 %v2977, 1.442695
    %v2987 = vpow.pop %v2986
    %v2988 = vmul.f32 %v2978, 1.442695
    %v2989 = vpow.pop %v2988
    %v2990 = vmul.f32 %v2979, 1.442695
    %v2991 = vpow.pop %v2990
    %v2992 = vmul.f32 %v2980, 1.442695
    %v2993 = vpow.pop %v2992
    %v2994 = vmul.f32 %v2981, 1.442695
    %v2995 = vpow.pop %v2994
    %v2996 = vmul.f32 %v2982, 1.442695
    %v2997 = vpow.pop %v2996
    %v2998 = vmul.f32 %v2983, 1.442695
    %v2999 = vpow.pop %v2998
    %v3000 = vsel %vm1151, %v2985, 0.0
    %3001 = vadd.xlane.f32.xlu0 %v3000
    %v3002 = vpop.xlane.xlu0 %3001
    %v3003 = vsel %vm1151, %v2987, 0.0
    %3004 = vadd.xlane.f32.xlu0 %v3003
    %v3005 = vpop.xlane.xlu0 %3004
    %v3006 = vsel %vm1151, %v2989, 0.0
    %3007 = vadd.xlane.f32.xlu0 %v3006
    %v3008 = vpop.xlane.xlu0 %3007
    %v3009 = vsel %vm1151, %v2991, 0.0
    %3010 = vadd.xlane.f32.xlu0 %v3009
    %v3011 = vpop.xlane.xlu0 %3010
    %v3012 = vsel %vm1151, %v2993, 0.0
    %3013 = vadd.xlane.f32.xlu0 %v3012
    %v3014 = vpop.xlane.xlu0 %3013
    %v3015 = vsel %vm1151, %v2995, 0.0
    %3016 = vadd.xlane.f32.xlu0 %v3015
    %v3017 = vpop.xlane.xlu0 %3016
    %v3018 = vsel %vm1151, %v2997, 0.0
    %3019 = vadd.xlane.f32.xlu0 %v3018
    %v3020 = vpop.xlane.xlu0 %3019
    %v3021 = vsel %vm1151, %v2999, 0.0
    %3022 = vadd.xlane.f32.xlu0 %v3021
    %v3023 = vpop.xlane.xlu0 %3022
    %v3024 = vrcp.pop %v3002
    %v3025 = vrcp.pop %v3005
    %v3026 = vrcp.pop %v3008
    %v3027 = vrcp.pop %v3011
    %v3028 = vrcp.pop %v3014
    %v3029 = vrcp.pop %v3017
    %v3030 = vrcp.pop %v3020
    %v3031 = vrcp.pop %v3023
    %v3032 = vmul.f32 %v2985, %v3024
    %v3033 = vmul.f32 %v2987, %v3025
    %v3034 = vmul.f32 %v2989, %v3026
    %v3035 = vmul.f32 %v2991, %v3027
    %v3036 = vmul.f32 %v2993, %v3028
    %v3037 = vmul.f32 %v2995, %v3029
    %v3038 = vmul.f32 %v2997, %v3030
    %v3039 = vmul.f32 %v2999, %v3031
    %v3041 = vsel %vm1151, %v3032, 0
    %3043 = vmatprep.subr.mxu0 0.0
    %3044 = vmatpush1.msra.mxu0 0.0
    %3045 = vmatprep.subr.mxu0 0.0
    %3046 = vmatpush1.msra.mxu0 0.0
    %3047 = vmatprep.subr.mxu0 0.0
    %3048 = vmatpush1.msra.mxu0 0.0
    %3049 = vmatprep.subr.mxu0 0.0
    %3050 = vmatpush1.msra.mxu0 0.0
    %3051 = vmatprep.subr.mxu0 0.0
    %3052 = vmatpush1.msra.mxu0 0.0
    %3053 = vmatprep.subr.mxu0 0.0
    %3054 = vmatpush1.msra.mxu0 0.0
    %3055 = vmatprep.subr.mxu0 0.0
    %3056 = vmatpush1.msra.mxu0 0.0
    %3057 = vmatprep.subr.mxu0 0.0
    %3058 = vmatpush1.msra.mxu0 0.0
    %3059 = vmatprep.subr.mxu0 0.0
    %3060 = vmatpush1.msra.mxu0 0.0
    %3061 = vmatprep.subr.mxu0 0.0
    %3062 = vmatpush1.msra.mxu0 0.0
    %3063 = vmatprep.subr.mxu0 0.0
    %3064 = vmatpush1.msra.mxu0 0.0
    %3065 = vmatprep.subr.mxu0 0.0
    %3066 = vmatpush1.msra.mxu0 0.0
    %3067 = vmatprep.subr.mxu0 0.0
    %3068 = vmatpush1.msra.mxu0 0.0
    %3069 = vmatprep.subr.mxu0 0.0
    %3070 = vmatpush1.msra.mxu0 0.0
    %3071 = vmatprep.subr.mxu0 0.0
    %3072 = vmatpush1.msra.mxu0 %v285
    %3073 = vmatprep.subr.mxu0 0.0
    %3074 = vmatpush1.msra.mxu0 %v279
    %3075 = vmatprep.subr.mxu0 0.0
    %3076 = vmatpush2.msra.mxu0 0.0
    %3077 = vmatprep.subr.mxu0 0.0
    %3078 = vmatpush2.msra.mxu0 0.0
    %3079 = vmatprep.subr.mxu0 0.0
    %3080 = vmatpush2.msra.mxu0 0.0
    %3081 = vmatprep.subr.mxu0 0.0
    %3082 = vmatpush2.msra.mxu0 0.0
    %3083 = vmatprep.subr.mxu0 0.0
    %3084 = vmatpush2.msra.mxu0 0.0
    %3085 = vmatprep.subr.mxu0 0.0
    %3086 = vmatpush2.msra.mxu0 0.0
    %3087 = vmatprep.subr.mxu0 0.0
    %3088 = vmatpush2.msra.mxu0 0.0
    %3089 = vmatprep.subr.mxu0 0.0
    %3090 = vmatpush2.msra.mxu0 0.0
    %3091 = vmatprep.subr.mxu0 0.0
    %3092 = vmatpush2.msra.mxu0 0.0
    %3093 = vmatprep.subr.mxu0 0.0
    %3094 = vmatpush2.msra.mxu0 0.0
    %3095 = vmatprep.subr.mxu0 0.0
    %3096 = vmatpush2.msra.mxu0 0.0
    %3097 = vmatprep.subr.mxu0 0.0
    %3098 = vmatpush2.msra.mxu0 0.0
    %3099 = vmatprep.subr.mxu0 0.0
    %3100 = vmatpush2.msra.mxu0 0.0
    %3101 = vmatprep.subr.mxu0 0.0
    %3102 = vmatpush2.msra.mxu0 0.0
    %3103 = vmatprep.subr.mxu0 0.0
    %3104 = vmatpush2.msra.mxu0 0.0
    %3105 = vmatprep.subr.mxu0 0.0
    %3106 = vmatpush2.msra.mxu0 0.0
    %3107 = vmatprep.mubr.f32.mxu0 0.0
    %3108 = vmatmul.mubr.f32.gmra.mxu0 %v3041
    %v3109 = vpop.f32.mrf.mxu0
    %v3110 = vadd.f32 0.0, %v3109
    %v3111 = vpop.f32.mrf.mxu0
    %3112 = vdwg.mxu0
    %v3114 = vsel %vm1151, %v3036, 0
    %3116 = vmatprep.subr.mxu0 0.0
    %3117 = vmatpush1.msra.mxu0 0.0
    %3118 = vmatprep.subr.mxu0 0.0
    %3119 = vmatpush1.msra.mxu0 0.0
    %3120 = vmatprep.subr.mxu0 0.0
    %3121 = vmatpush1.msra.mxu0 0.0
    %3122 = vmatprep.subr.mxu0 0.0
    %3123 = vmatpush1.msra.mxu0 0.0
    %3124 = vmatprep.subr.mxu0 0.0
    %3125 = vmatpush1.msra.mxu0 0.0
    %3126 = vmatprep.subr.mxu0 0.0
    %3127 = vmatpush1.msra.mxu0 0.0
    %3128 = vmatprep.subr.mxu0 0.0
    %3129 = vmatpush1.msra.mxu0 0.0
    %3130 = vmatprep.subr.mxu0 0.0
    %3131 = vmatpush1.msra.mxu0 0.0
    %3132 = vmatprep.subr.mxu0 0.0
    %3133 = vmatpush1.msra.mxu0 0.0
    %3134 = vmatprep.subr.mxu0 0.0
    %3135 = vmatpush1.msra.mxu0 0.0
    %3136 = vmatprep.subr.mxu0 0.0
    %3137 = vmatpush1.msra.mxu0 0.0
    %3138 = vmatprep.subr.mxu0 0.0
    %3139 = vmatpush1.msra.mxu0 0.0
    %3140 = vmatprep.subr.mxu0 0.0
    %3141 = vmatpush1.msra.mxu0 0.0
    %3142 = vmatprep.subr.mxu0 0.0
    %3143 = vmatpush1.msra.mxu0 0.0
    %3144 = vmatprep.subr.mxu0 0.0
    %3145 = vmatpush1.msra.mxu0 %v297
    %3146 = vmatprep.subr.mxu0 0.0
    %3147 = vmatpush1.msra.mxu0 %v291
    %3148 = vmatprep.subr.mxu0 0.0
    %3149 = vmatpush2.msra.mxu0 0.0
    %3150 = vmatprep.subr.mxu0 0.0
    %3151 = vmatpush2.msra.mxu0 0.0
    %3152 = vmatprep.subr.mxu0 0.0
    %3153 = vmatpush2.msra.mxu0 0.0
    %3154 = vmatprep.subr.mxu0 0.0
    %3155 = vmatpush2.msra.mxu0 0.0
    %3156 = vmatprep.subr.mxu0 0.0
    %3157 = vmatpush2.msra.mxu0 0.0
    %3158 = vmatprep.subr.mxu0 0.0
    %3159 = vmatpush2.msra.mxu0 0.0
    %3160 = vmatprep.subr.mxu0 0.0
    %3161 = vmatpush2.msra.mxu0 0.0
    %3162 = vmatprep.subr.mxu0 0.0
    %3163 = vmatpush2.msra.mxu0 0.0
    %3164 = vmatprep.subr.mxu0 0.0
    %3165 = vmatpush2.msra.mxu0 0.0
    %3166 = vmatprep.subr.mxu0 0.0
    %3167 = vmatpush2.msra.mxu0 0.0
    %3168 = vmatprep.subr.mxu0 0.0
    %3169 = vmatpush2.msra.mxu0 0.0
    %3170 = vmatprep.subr.mxu0 0.0
    %3171 = vmatpush2.msra.mxu0 0.0
    %3172 = vmatprep.subr.mxu0 0.0
    %3173 = vmatpush2.msra.mxu0 0.0
    %3174 = vmatprep.subr.mxu0 0.0
    %3175 = vmatpush2.msra.mxu0 0.0
    %3176 = vmatprep.subr.mxu0 0.0
    %3177 = vmatpush2.msra.mxu0 0.0
    %3178 = vmatprep.subr.mxu0 0.0
    %3179 = vmatpush2.msra.mxu0 0.0
    %3180 = vmatprep.mubr.f32.mxu0 0.0
    %3181 = vmatmul.mubr.f32.gmra.mxu0 %v3114
    %v3182 = vpop.f32.mrf.mxu0
    %v3183 = vadd.f32 0.0, %v3182
    %v3184 = vpop.f32.mrf.mxu0
    %3185 = vdwg.mxu0
    %3188 = vrot.lane.b32.xlu0 %v279, 96
    %v3189 = vpop.permute.xlu0 %3188
    %3190 = vrot.lane.b32.xlu0 %v285, 96
    %v3191 = vpop.permute.xlu0 %3190
    %v3195 = vsel %vm1151, %v3033, 0
    %3197 = vmatprep.subr.mxu0 0.0
    %3198 = vmatpush1.msra.mxu0 0.0
    %3199 = vmatprep.subr.mxu0 0.0
    %3200 = vmatpush1.msra.mxu0 0.0
    %3201 = vmatprep.subr.mxu0 0.0
    %3202 = vmatpush1.msra.mxu0 0.0
    %3203 = vmatprep.subr.mxu0 0.0
    %3204 = vmatpush1.msra.mxu0 0.0
    %3205 = vmatprep.subr.mxu0 0.0
    %3206 = vmatpush1.msra.mxu0 0.0
    %3207 = vmatprep.subr.mxu0 0.0
    %3208 = vmatpush1.msra.mxu0 0.0
    %3209 = vmatprep.subr.mxu0 0.0
    %3210 = vmatpush1.msra.mxu0 0.0
    %3211 = vmatprep.subr.mxu0 0.0
    %3212 = vmatpush1.msra.mxu0 0.0
    %3213 = vmatprep.subr.mxu0 0.0
    %3214 = vmatpush1.msra.mxu0 0.0
    %3215 = vmatprep.subr.mxu0 0.0
    %3216 = vmatpush1.msra.mxu0 0.0
    %3217 = vmatprep.subr.mxu0 0.0
    %3218 = vmatpush1.msra.mxu0 0.0
    %3219 = vmatprep.subr.mxu0 0.0
    %3220 = vmatpush1.msra.mxu0 0.0
    %3221 = vmatprep.subr.mxu0 0.0
    %3222 = vmatpush1.msra.mxu0 0.0
    %3223 = vmatprep.subr.mxu0 0.0
    %3224 = vmatpush1.msra.mxu0 0.0
    %3225 = vmatprep.subr.mxu0 0.0
    %3226 = vmatpush1.msra.mxu0 %v3191
    %3227 = vmatprep.subr.mxu0 0.0
    %3228 = vmatpush1.msra.mxu0 %v3189
    %3229 = vmatprep.subr.mxu0 0.0
    %3230 = vmatpush2.msra.mxu0 0.0
    %3231 = vmatprep.subr.mxu0 0.0
    %3232 = vmatpush2.msra.mxu0 0.0
    %3233 = vmatprep.subr.mxu0 0.0
    %3234 = vmatpush2.msra.mxu0 0.0
    %3235 = vmatprep.subr.mxu0 0.0
    %3236 = vmatpush2.msra.mxu0 0.0
    %3237 = vmatprep.subr.mxu0 0.0
    %3238 = vmatpush2.msra.mxu0 0.0
    %3239 = vmatprep.subr.mxu0 0.0
    %3240 = vmatpush2.msra.mxu0 0.0
    %3241 = vmatprep.subr.mxu0 0.0
    %3242 = vmatpush2.msra.mxu0 0.0
    %3243 = vmatprep.subr.mxu0 0.0
    %3244 = vmatpush2.msra.mxu0 0.0
    %3245 = vmatprep.subr.mxu0 0.0
    %3246 = vmatpush2.msra.mxu0 0.0
    %3247 = vmatprep.subr.mxu0 0.0
    %3248 = vmatpush2.msra.mxu0 0.0
    %3249 = vmatprep.subr.mxu0 0.0
    %3250 = vmatpush2.msra.mxu0 0.0
    %3251 = vmatprep.subr.mxu0 0.0
    %3252 = vmatpush2.msra.mxu0 0.0
    %3253 = vmatprep.subr.mxu0 0.0
    %3254 = vmatpush2.msra.mxu0 0.0
    %3255 = vmatprep.subr.mxu0 0.0
    %3256 = vmatpush2.msra.mxu0 0.0
    %3257 = vmatprep.subr.mxu0 0.0
    %3258 = vmatpush2.msra.mxu0 0.0
    %3259 = vmatprep.subr.mxu0 0.0
    %3260 = vmatpush2.msra.mxu0 0.0
    %3261 = vmatprep.mubr.f32.mxu0 0.0
    %3262 = vmatmul.mubr.f32.gmra.mxu0 %v3195
    %v3263 = vpop.f32.mrf.mxu0
    %v3264 = vadd.f32 0.0, %v3263
    %v3265 = vpop.f32.mrf.mxu0
    %3266 = vdwg.mxu0
    %3269 = vrot.lane.b32.xlu0 %v291, 96
    %v3270 = vpop.permute.xlu0 %3269
    %3271 = vrot.lane.b32.xlu0 %v297, 96
    %v3272 = vpop.permute.xlu0 %3271
    %v3276 = vsel %vm1151, %v3037, 0
    %3278 = vmatprep.subr.mxu0 0.0
    %3279 = vmatpush1.msra.mxu0 0.0
    %3280 = vmatprep.subr.mxu0 0.0
    %3281 = vmatpush1.msra.mxu0 0.0
    %3282 = vmatprep.subr.mxu0 0.0
    %3283 = vmatpush1.msra.mxu0 0.0
    %3284 = vmatprep.subr.mxu0 0.0
    %3285 = vmatpush1.msra.mxu0 0.0
    %3286 = vmatprep.subr.mxu0 0.0
    %3287 = vmatpush1.msra.mxu0 0.0
    %3288 = vmatprep.subr.mxu0 0.0
    %3289 = vmatpush1.msra.mxu0 0.0
    %3290 = vmatprep.subr.mxu0 0.0
    %3291 = vmatpush1.msra.mxu0 0.0
    %3292 = vmatprep.subr.mxu0 0.0
    %3293 = vmatpush1.msra.mxu0 0.0
    %3294 = vmatprep.subr.mxu0 0.0
    %3295 = vmatpush1.msra.mxu0 0.0
    %3296 = vmatprep.subr.mxu0 0.0
    %3297 = vmatpush1.msra.mxu0 0.0
    %3298 = vmatprep.subr.mxu0 0.0
    %3299 = vmatpush1.msra.mxu0 0.0
    %3300 = vmatprep.subr.mxu0 0.0
    %3301 = vmatpush1.msra.mxu0 0.0
    %3302 = vmatprep.subr.mxu0 0.0
    %3303 = vmatpush1.msra.mxu0 0.0
    %3304 = vmatprep.subr.mxu0 0.0
    %3305 = vmatpush1.msra.mxu0 0.0
    %3306 = vmatprep.subr.mxu0 0.0
    %3307 = vmatpush1.msra.mxu0 %v3272
    %3308 = vmatprep.subr.mxu0 0.0
    %3309 = vmatpush1.msra.mxu0 %v3270
    %3310 = vmatprep.subr.mxu0 0.0
    %3311 = vmatpush2.msra.mxu0 0.0
    %3312 = vmatprep.subr.mxu0 0.0
    %3313 = vmatpush2.msra.mxu0 0.0
    %3314 = vmatprep.subr.mxu0 0.0
    %3315 = vmatpush2.msra.mxu0 0.0
    %3316 = vmatprep.subr.mxu0 0.0
    %3317 = vmatpush2.msra.mxu0 0.0
    %3318 = vmatprep.subr.mxu0 0.0
    %3319 = vmatpush2.msra.mxu0 0.0
    %3320 = vmatprep.subr.mxu0 0.0
    %3321 = vmatpush2.msra.mxu0 0.0
    %3322 = vmatprep.subr.mxu0 0.0
    %3323 = vmatpush2.msra.mxu0 0.0
    %3324 = vmatprep.subr.mxu0 0.0
    %3325 = vmatpush2.msra.mxu0 0.0
    %3326 = vmatprep.subr.mxu0 0.0
    %3327 = vmatpush2.msra.mxu0 0.0
    %3328 = vmatprep.subr.mxu0 0.0
    %3329 = vmatpush2.msra.mxu0 0.0
    %3330 = vmatprep.subr.mxu0 0.0
    %3331 = vmatpush2.msra.mxu0 0.0
    %3332 = vmatprep.subr.mxu0 0.0
    %3333 = vmatpush2.msra.mxu0 0.0
    %3334 = vmatprep.subr.mxu0 0.0
    %3335 = vmatpush2.msra.mxu0 0.0
    %3336 = vmatprep.subr.mxu0 0.0
    %3337 = vmatpush2.msra.mxu0 0.0
    %3338 = vmatprep.subr.mxu0 0.0
    %3339 = vmatpush2.msra.mxu0 0.0
    %3340 = vmatprep.subr.mxu0 0.0
    %3341 = vmatpush2.msra.mxu0 0.0
    %3342 = vmatprep.mubr.f32.mxu0 0.0
    %3343 = vmatmul.mubr.f32.gmra.mxu0 %v3276
    %v3344 = vpop.f32.mrf.mxu0
    %v3345 = vadd.f32 0.0, %v3344
    %v3346 = vpop.f32.mrf.mxu0
    %3347 = vdwg.mxu0
    %v3348 = vadd.f32 %v3110, %v3264
    %v3349 = vadd.f32 %v3183, %v3345
    %3350 = vrot.lane.b32.xlu0 %v279, 64
    %v3351 = vpop.permute.xlu0 %3350
    %3352 = vrot.lane.b32.xlu0 %v285, 64
    %v3353 = vpop.permute.xlu0 %3352
    %v3357 = vsel %vm1151, %v3034, 0
    %3359 = vmatprep.subr.mxu0 0.0
    %3360 = vmatpush1.msra.mxu0 0.0
    %3361 = vmatprep.subr.mxu0 0.0
    %3362 = vmatpush1.msra.mxu0 0.0
    %3363 = vmatprep.subr.mxu0 0.0
    %3364 = vmatpush1.msra.mxu0 0.0
    %3365 = vmatprep.subr.mxu0 0.0
    %3366 = vmatpush1.msra.mxu0 0.0
    %3367 = vmatprep.subr.mxu0 0.0
    %3368 = vmatpush1.msra.mxu0 0.0
    %3369 = vmatprep.subr.mxu0 0.0
    %3370 = vmatpush1.msra.mxu0 0.0
    %3371 = vmatprep.subr.mxu0 0.0
    %3372 = vmatpush1.msra.mxu0 0.0
    %3373 = vmatprep.subr.mxu0 0.0
    %3374 = vmatpush1.msra.mxu0 0.0
    %3375 = vmatprep.subr.mxu0 0.0
    %3376 = vmatpush1.msra.mxu0 0.0
    %3377 = vmatprep.subr.mxu0 0.0
    %3378 = vmatpush1.msra.mxu0 0.0
    %3379 = vmatprep.subr.mxu0 0.0
    %3380 = vmatpush1.msra.mxu0 0.0
    %3381 = vmatprep.subr.mxu0 0.0
    %3382 = vmatpush1.msra.mxu0 0.0
    %3383 = vmatprep.subr.mxu0 0.0
    %3384 = vmatpush1.msra.mxu0 0.0
    %3385 = vmatprep.subr.mxu0 0.0
    %3386 = vmatpush1.msra.mxu0 0.0
    %3387 = vmatprep.subr.mxu0 0.0
    %3388 = vmatpush1.msra.mxu0 %v3353
    %3389 = vmatprep.subr.mxu0 0.0
    %3390 = vmatpush1.msra.mxu0 %v3351
    %3391 = vmatprep.subr.mxu0 0.0
    %3392 = vmatpush2.msra.mxu0 0.0
    %3393 = vmatprep.subr.mxu0 0.0
    %3394 = vmatpush2.msra.mxu0 0.0
    %3395 = vmatprep.subr.mxu0 0.0
    %3396 = vmatpush2.msra.mxu0 0.0
    %3397 = vmatprep.subr.mxu0 0.0
    %3398 = vmatpush2.msra.mxu0 0.0
    %3399 = vmatprep.subr.mxu0 0.0
    %3400 = vmatpush2.msra.mxu0 0.0
    %3401 = vmatprep.subr.mxu0 0.0
    %3402 = vmatpush2.msra.mxu0 0.0
    %3403 = vmatprep.subr.mxu0 0.0
    %3404 = vmatpush2.msra.mxu0 0.0
    %3405 = vmatprep.subr.mxu0 0.0
    %3406 = vmatpush2.msra.mxu0 0.0
    %3407 = vmatprep.subr.mxu0 0.0
    %3408 = vmatpush2.msra.mxu0 0.0
    %3409 = vmatprep.subr.mxu0 0.0
    %3410 = vmatpush2.msra.mxu0 0.0
    %3411 = vmatprep.subr.mxu0 0.0
    %3412 = vmatpush2.msra.mxu0 0.0
    %3413 = vmatprep.subr.mxu0 0.0
    %3414 = vmatpush2.msra.mxu0 0.0
    %3415 = vmatprep.subr.mxu0 0.0
    %3416 = vmatpush2.msra.mxu0 0.0
    %3417 = vmatprep.subr.mxu0 0.0
    %3418 = vmatpush2.msra.mxu0 0.0
    %3419 = vmatprep.subr.mxu0 0.0
    %3420 = vmatpush2.msra.mxu0 0.0
    %3421 = vmatprep.subr.mxu0 0.0
    %3422 = vmatpush2.msra.mxu0 0.0
    %3423 = vmatprep.mubr.f32.mxu0 0.0
    %3424 = vmatmul.mubr.f32.gmra.mxu0 %v3357
    %v3425 = vpop.f32.mrf.mxu0
    %v3426 = vadd.f32 0.0, %v3425
    %v3427 = vpop.f32.mrf.mxu0
    %3428 = vdwg.mxu0
    %3429 = vrot.lane.b32.xlu0 %v291, 64
    %v3430 = vpop.permute.xlu0 %3429
    %3431 = vrot.lane.b32.xlu0 %v297, 64
    %v3432 = vpop.permute.xlu0 %3431
    %v3436 = vsel %vm1151, %v3038, 0
    %3438 = vmatprep.subr.mxu0 0.0
    %3439 = vmatpush1.msra.mxu0 0.0
    %3440 = vmatprep.subr.mxu0 0.0
    %3441 = vmatpush1.msra.mxu0 0.0
    %3442 = vmatprep.subr.mxu0 0.0
    %3443 = vmatpush1.msra.mxu0 0.0
    %3444 = vmatprep.subr.mxu0 0.0
    %3445 = vmatpush1.msra.mxu0 0.0
    %3446 = vmatprep.subr.mxu0 0.0
    %3447 = vmatpush1.msra.mxu0 0.0
    %3448 = vmatprep.subr.mxu0 0.0
    %3449 = vmatpush1.msra.mxu0 0.0
    %3450 = vmatprep.subr.mxu0 0.0
    %3451 = vmatpush1.msra.mxu0 0.0
    %3452 = vmatprep.subr.mxu0 0.0
    %3453 = vmatpush1.msra.mxu0 0.0
    %3454 = vmatprep.subr.mxu0 0.0
    %3455 = vmatpush1.msra.mxu0 0.0
    %3456 = vmatprep.subr.mxu0 0.0
    %3457 = vmatpush1.msra.mxu0 0.0
    %3458 = vmatprep.subr.mxu0 0.0
    %3459 = vmatpush1.msra.mxu0 0.0
    %3460 = vmatprep.subr.mxu0 0.0
    %3461 = vmatpush1.msra.mxu0 0.0
    %3462 = vmatprep.subr.mxu0 0.0
    %3463 = vmatpush1.msra.mxu0 0.0
    %3464 = vmatprep.subr.mxu0 0.0
    %3465 = vmatpush1.msra.mxu0 0.0
    %3466 = vmatprep.subr.mxu0 0.0
    %3467 = vmatpush1.msra.mxu0 %v3432
    %3468 = vmatprep.subr.mxu0 0.0
    %3469 = vmatpush1.msra.mxu0 %v3430
    %3470 = vmatprep.subr.mxu0 0.0
    %3471 = vmatpush2.msra.mxu0 0.0
    %3472 = vmatprep.subr.mxu0 0.0
    %3473 = vmatpush2.msra.mxu0 0.0
    %3474 = vmatprep.subr.mxu0 0.0
    %3475 = vmatpush2.msra.mxu0 0.0
    %3476 = vmatprep.subr.mxu0 0.0
    %3477 = vmatpush2.msra.mxu0 0.0
    %3478 = vmatprep.subr.mxu0 0.0
    %3479 = vmatpush2.msra.mxu0 0.0
    %3480 = vmatprep.subr.mxu0 0.0
    %3481 = vmatpush2.msra.mxu0 0.0
    %3482 = vmatprep.subr.mxu0 0.0
    %3483 = vmatpush2.msra.mxu0 0.0
    %3484 = vmatprep.subr.mxu0 0.0
    %3485 = vmatpush2.msra.mxu0 0.0
    %3486 = vmatprep.subr.mxu0 0.0
    %3487 = vmatpush2.msra.mxu0 0.0
    %3488 = vmatprep.subr.mxu0 0.0
    %3489 = vmatpush2.msra.mxu0 0.0
    %3490 = vmatprep.subr.mxu0 0.0
    %3491 = vmatpush2.msra.mxu0 0.0
    %3492 = vmatprep.subr.mxu0 0.0
    %3493 = vmatpush2.msra.mxu0 0.0
    %3494 = vmatprep.subr.mxu0 0.0
    %3495 = vmatpush2.msra.mxu0 0.0
    %3496 = vmatprep.subr.mxu0 0.0
    %3497 = vmatpush2.msra.mxu0 0.0
    %3498 = vmatprep.subr.mxu0 0.0
    %3499 = vmatpush2.msra.mxu0 0.0
    %3500 = vmatprep.subr.mxu0 0.0
    %3501 = vmatpush2.msra.mxu0 0.0
    %3502 = vmatprep.mubr.f32.mxu0 0.0
    %3503 = vmatmul.mubr.f32.gmra.mxu0 %v3436
    %v3504 = vpop.f32.mrf.mxu0
    %v3505 = vadd.f32 0.0, %v3504
    %v3506 = vpop.f32.mrf.mxu0
    %3507 = vdwg.mxu0
    %v3508 = vadd.f32 %v3348, %v3426
    %v3509 = vadd.f32 %v3349, %v3505
    %3510 = vrot.lane.b32.xlu0 %v279, 32
    %v3511 = vpop.permute.xlu0 %3510
    %3512 = vrot.lane.b32.xlu0 %v285, 32
    %v3513 = vpop.permute.xlu0 %3512
    %v3517 = vsel %vm1151, %v3035, 0
    %3519 = vmatprep.subr.mxu0 0.0
    %3520 = vmatpush1.msra.mxu0 0.0
    %3521 = vmatprep.subr.mxu0 0.0
    %3522 = vmatpush1.msra.mxu0 0.0
    %3523 = vmatprep.subr.mxu0 0.0
    %3524 = vmatpush1.msra.mxu0 0.0
    %3525 = vmatprep.subr.mxu0 0.0
    %3526 = vmatpush1.msra.mxu0 0.0
    %3527 = vmatprep.subr.mxu0 0.0
    %3528 = vmatpush1.msra.mxu0 0.0
    %3529 = vmatprep.subr.mxu0 0.0
    %3530 = vmatpush1.msra.mxu0 0.0
    %3531 = vmatprep.subr.mxu0 0.0
    %3532 = vmatpush1.msra.mxu0 0.0
    %3533 = vmatprep.subr.mxu0 0.0
    %3534 = vmatpush1.msra.mxu0 0.0
    %3535 = vmatprep.subr.mxu0 0.0
    %3536 = vmatpush1.msra.mxu0 0.0
    %3537 = vmatprep.subr.mxu0 0.0
    %3538 = vmatpush1.msra.mxu0 0.0
    %3539 = vmatprep.subr.mxu0 0.0
    %3540 = vmatpush1.msra.mxu0 0.0
    %3541 = vmatprep.subr.mxu0 0.0
    %3542 = vmatpush1.msra.mxu0 0.0
    %3543 = vmatprep.subr.mxu0 0.0
    %3544 = vmatpush1.msra.mxu0 0.0
    %3545 = vmatprep.subr.mxu0 0.0
    %3546 = vmatpush1.msra.mxu0 0.0
    %3547 = vmatprep.subr.mxu0 0.0
    %3548 = vmatpush1.msra.mxu0 %v3513
    %3549 = vmatprep.subr.mxu0 0.0
    %3550 = vmatpush1.msra.mxu0 %v3511
    %3551 = vmatprep.subr.mxu0 0.0
    %3552 = vmatpush2.msra.mxu0 0.0
    %3553 = vmatprep.subr.mxu0 0.0
    %3554 = vmatpush2.msra.mxu0 0.0
    %3555 = vmatprep.subr.mxu0 0.0
    %3556 = vmatpush2.msra.mxu0 0.0
    %3557 = vmatprep.subr.mxu0 0.0
    %3558 = vmatpush2.msra.mxu0 0.0
    %3559 = vmatprep.subr.mxu0 0.0
    %3560 = vmatpush2.msra.mxu0 0.0
    %3561 = vmatprep.subr.mxu0 0.0
    %3562 = vmatpush2.msra.mxu0 0.0
    %3563 = vmatprep.subr.mxu0 0.0
    %3564 = vmatpush2.msra.mxu0 0.0
    %3565 = vmatprep.subr.mxu0 0.0
    %3566 = vmatpush2.msra.mxu0 0.0
    %3567 = vmatprep.subr.mxu0 0.0
    %3568 = vmatpush2.msra.mxu0 0.0
    %3569 = vmatprep.subr.mxu0 0.0
    %3570 = vmatpush2.msra.mxu0 0.0
    %3571 = vmatprep.subr.mxu0 0.0
    %3572 = vmatpush2.msra.mxu0 0.0
    %3573 = vmatprep.subr.mxu0 0.0
    %3574 = vmatpush2.msra.mxu0 0.0
    %3575 = vmatprep.subr.mxu0 0.0
    %3576 = vmatpush2.msra.mxu0 0.0
    %3577 = vmatprep.subr.mxu0 0.0
    %3578 = vmatpush2.msra.mxu0 0.0
    %3579 = vmatprep.subr.mxu0 0.0
    %3580 = vmatpush2.msra.mxu0 0.0
    %3581 = vmatprep.subr.mxu0 0.0
    %3582 = vmatpush2.msra.mxu0 0.0
    %3583 = vmatprep.mubr.f32.mxu0 0.0
    %3584 = vmatmul.mubr.f32.gmra.mxu0 %v3517
    %v3585 = vpop.f32.mrf.mxu0
    %v3586 = vadd.f32 0.0, %v3585
    %v3587 = vpop.f32.mrf.mxu0
    %3588 = vdwg.mxu0
    %3589 = vrot.lane.b32.xlu0 %v291, 32
    %v3590 = vpop.permute.xlu0 %3589
    %3591 = vrot.lane.b32.xlu0 %v297, 32
    %v3592 = vpop.permute.xlu0 %3591
    %v3596 = vsel %vm1151, %v3039, 0
    %3598 = vmatprep.subr.mxu0 0.0
    %3599 = vmatpush1.msra.mxu0 0.0
    %3600 = vmatprep.subr.mxu0 0.0
    %3601 = vmatpush1.msra.mxu0 0.0
    %3602 = vmatprep.subr.mxu0 0.0
    %3603 = vmatpush1.msra.mxu0 0.0
    %3604 = vmatprep.subr.mxu0 0.0
    %3605 = vmatpush1.msra.mxu0 0.0
    %3606 = vmatprep.subr.mxu0 0.0
    %3607 = vmatpush1.msra.mxu0 0.0
    %3608 = vmatprep.subr.mxu0 0.0
    %3609 = vmatpush1.msra.mxu0 0.0
    %3610 = vmatprep.subr.mxu0 0.0
    %3611 = vmatpush1.msra.mxu0 0.0
    %3612 = vmatprep.subr.mxu0 0.0
    %3613 = vmatpush1.msra.mxu0 0.0
    %3614 = vmatprep.subr.mxu0 0.0
    %3615 = vmatpush1.msra.mxu0 0.0
    %3616 = vmatprep.subr.mxu0 0.0
    %3617 = vmatpush1.msra.mxu0 0.0
    %3618 = vmatprep.subr.mxu0 0.0
    %3619 = vmatpush1.msra.mxu0 0.0
    %3620 = vmatprep.subr.mxu0 0.0
    %3621 = vmatpush1.msra.mxu0 0.0
    %3622 = vmatprep.subr.mxu0 0.0
    %3623 = vmatpush1.msra.mxu0 0.0
    %3624 = vmatprep.subr.mxu0 0.0
    %3625 = vmatpush1.msra.mxu0 0.0
    %3626 = vmatprep.subr.mxu0 0.0
    %3627 = vmatpush1.msra.mxu0 %v3592
    %3628 = vmatprep.subr.mxu0 0.0
    %3629 = vmatpush1.msra.mxu0 %v3590
    %3630 = vmatprep.subr.mxu0 0.0
    %3631 = vmatpush2.msra.mxu0 0.0
    %3632 = vmatprep.subr.mxu0 0.0
    %3633 = vmatpush2.msra.mxu0 0.0
    %3634 = vmatprep.subr.mxu0 0.0
    %3635 = vmatpush2.msra.mxu0 0.0
    %3636 = vmatprep.subr.mxu0 0.0
    %3637 = vmatpush2.msra.mxu0 0.0
    %3638 = vmatprep.subr.mxu0 0.0
    %3639 = vmatpush2.msra.mxu0 0.0
    %3640 = vmatprep.subr.mxu0 0.0
    %3641 = vmatpush2.msra.mxu0 0.0
    %3642 = vmatprep.subr.mxu0 0.0
    %3643 = vmatpush2.msra.mxu0 0.0
    %3644 = vmatprep.subr.mxu0 0.0
    %3645 = vmatpush2.msra.mxu0 0.0
    %3646 = vmatprep.subr.mxu0 0.0
    %3647 = vmatpush2.msra.mxu0 0.0
    %3648 = vmatprep.subr.mxu0 0.0
    %3649 = vmatpush2.msra.mxu0 0.0
    %3650 = vmatprep.subr.mxu0 0.0
    %3651 = vmatpush2.msra.mxu0 0.0
    %3652 = vmatprep.subr.mxu0 0.0
    %3653 = vmatpush2.msra.mxu0 0.0
    %3654 = vmatprep.subr.mxu0 0.0
    %3655 = vmatpush2.msra.mxu0 0.0
    %3656 = vmatprep.subr.mxu0 0.0
    %3657 = vmatpush2.msra.mxu0 0.0
    %3658 = vmatprep.subr.mxu0 0.0
    %3659 = vmatpush2.msra.mxu0 0.0
    %3660 = vmatprep.subr.mxu0 0.0
    %3661 = vmatpush2.msra.mxu0 0.0
    %3662 = vmatprep.mubr.f32.mxu0 0.0
    %3663 = vmatmul.mubr.f32.gmra.mxu0 %v3596
    %v3664 = vpop.f32.mrf.mxu0
    %v3665 = vadd.f32 0.0, %v3664
    %v3666 = vpop.f32.mrf.mxu0
    %3667 = vdwg.mxu0
    %v3668 = vadd.f32 %v3508, %v3586
    %v3669 = vadd.f32 %v3509, %v3665
    %v3670 = vadd.f32 %v2115, %v3668
    %v3671 = vadd.f32 %v2116, %v3669
    %v3672 = vlaneseq
    %v3673 = vshrl.u32 %v3672, 7
    %v3674 = vsub.s32 4, %v3673
    %v3675 = vrot.slane %v2137, %v3674
    %v3676 = vadd.f32 %v3670, %v3675
    %v3677 = vadd.f32 %v3671, %v3675
    %v3678 = vsel %vm110, %v3676, 0.0
    %3679 = vadd.xlane.f32.xlu0 %v3678
    %v3680 = vpop.xlane.xlu0 %3679
    %v3681 = vsel %vm110, %v3677, 0.0
    %3682 = vadd.xlane.f32.xlu0 %v3681
    %v3683 = vpop.xlane.xlu0 %3682
    %v3684 = vmul.f32 %v3680, 0.03125
    %v3685 = vmul.f32 %v3683, 0.03125
    %v3686 = vmul.f32 %v3676, %v3676
    %v3687 = vmul.f32 %v3677, %v3677
    %v3688 = vsel %vm110, %v3686, 0.0
    %3689 = vadd.xlane.f32.xlu0 %v3688
    %v3690 = vpop.xlane.xlu0 %3689
    %v3691 = vsel %vm110, %v3687, 0.0
    %3692 = vadd.xlane.f32.xlu0 %v3691
    %v3693 = vpop.xlane.xlu0 %3692
    %v3694 = vmul.f32 %v3684, 32.0
    %v3695 = vmul.f32 %v3685, 32.0
    %v3696 = vmul.f32 %v3694, %v3684
    %v3697 = vmul.f32 %v3695, %v3685
    %v3698 = vsub.f32 %v3690, %v3696
    %v3699 = vsub.f32 %v3693, %v3697
    %v3700 = vmul.f32 %v3698, 0.032258064
    %v3701 = vmul.f32 %v3699, 0.032258064
    %v3702 = vmax.f32 %v3700, 0.0
    %v3703 = vmax.f32 %v3701, 0.0
    %v3704 = vrsqrt.pop %v3702
    %v3705 = vmul.f32 %v3702, %v3704
    %vm3706 = vcmp.eq.f32.partialorder %v3702, inf
    %v3707 = vsel %vm3706, %v3702, %v3705
    %vm3708 = vcmp.eq.f32.partialorder %v3702, 0.0
    %v3709 = vand.u32 %v3702, 2147483648
    %v3710 = vsel %vm3708, %v3709, %v3707
    %v3711 = vrsqrt.pop %v3703
    %v3712 = vmul.f32 %v3703, %v3711
    %vm3713 = vcmp.eq.f32.partialorder %v3703, inf
    %v3714 = vsel %vm3713, %v3703, %v3712
    %vm3715 = vcmp.eq.f32.partialorder %v3703, 0.0
    %v3716 = vand.u32 %v3703, 2147483648
    %v3717 = vsel %vm3715, %v3716, %v3714
    %v3718 = vadd.f32 %v3710, 1e-06
    %v3719 = vadd.f32 %v3717, 1e-06
    %v3720 = vrcp.pop %v3718
    %v3721 = vmul.f32 1.0, %v3720
    %v3722 = vrcp.pop %v3719
    %v3723 = vmul.f32 1.0, %v3722
    %v3724 = vsub.f32 %v3676, %v3684
    %v3725 = vsub.f32 %v3677, %v3685
    %v3726 = vlaneseq
    %v3727 = vshrl.u32 %v3726, 7
    %v3728 = vsub.s32 5, %v3727
    %v3729 = vrot.slane %v2137, %v3728
    %v3730 = vmul.f32 %v3729, %v3724
    %v3731 = vmul.f32 %v3729, %v3725
    %v3732 = vmul.f32 %v3730, %v3721
    %v3733 = vmul.f32 %v3731, %v3723
    %v3734 = vlaneseq
    %v3735 = vshrl.u32 %v3734, 7
    %v3736 = vsub.s32 6, %v3735
    %v3737 = vrot.slane %v2137, %v3736
    %v3738 = vadd.f32 %v3732, %v3737
    %v3739 = vadd.f32 %v3733, %v3737
    %v3740 = vlaneseq
    %v3741 = vshrl.u32 %v3740, 7
    %v3742 = vsub.s32 0, %v3741
    %v3743 = vrot.slane %v2138, %v3742
    %v3745 = vsel %vm110, %v3738, 0
    %v3748 = vsel %vm110, %v3739, 0
    %3750 = vmatprep.subr.mxu0 0.0
    %3751 = vmatpush1.msra.mxu0 0.0
    %3752 = vmatprep.subr.mxu0 0.0
    %3753 = vmatpush1.msra.mxu0 0.0
    %3754 = vmatprep.subr.mxu0 0.0
    %3755 = vmatpush1.msra.mxu0 0.0
    %3756 = vmatprep.subr.mxu0 0.0
    %3757 = vmatpush1.msra.mxu0 0.0
    %3758 = vmatprep.subr.mxu0 0.0
    %3759 = vmatpush1.msra.mxu0 0.0
    %3760 = vmatprep.subr.mxu0 0.0
    %3761 = vmatpush1.msra.mxu0 0.0
    %3762 = vmatprep.subr.mxu0 0.0
    %3763 = vmatpush1.msra.mxu0 0.0
    %3764 = vmatprep.subr.mxu0 0.0
    %3765 = vmatpush1.msra.mxu0 0.0
    %3766 = vmatprep.subr.mxu0 0.0
    %3767 = vmatpush1.msra.mxu0 0.0
    %3768 = vmatprep.subr.mxu0 0.0
    %3769 = vmatpush1.msra.mxu0 0.0
    %3770 = vmatprep.subr.mxu0 0.0
    %3771 = vmatpush1.msra.mxu0 0.0
    %3772 = vmatprep.subr.mxu0 0.0
    %3773 = vmatpush1.msra.mxu0 0.0
    %3774 = vmatprep.subr.mxu0 0.0
    %3775 = vmatpush1.msra.mxu0 %v2126
    %3776 = vmatprep.subr.mxu0 0.0
    %3777 = vmatpush1.msra.mxu0 %v2125
    %3778 = vmatprep.subr.mxu0 0.0
    %3779 = vmatpush1.msra.mxu0 %v2124
    %3780 = vmatprep.subr.mxu0 0.0
    %3781 = vmatpush1.msra.mxu0 %v2123
    %3782 = vmatprep.subr.mxu0 0.0
    %3783 = vmatpush2.msra.mxu0 0.0
    %3784 = vmatprep.subr.mxu0 0.0
    %3785 = vmatpush2.msra.mxu0 0.0
    %3786 = vmatprep.subr.mxu0 0.0
    %3787 = vmatpush2.msra.mxu0 0.0
    %3788 = vmatprep.subr.mxu0 0.0
    %3789 = vmatpush2.msra.mxu0 0.0
    %3790 = vmatprep.subr.mxu0 0.0
    %3791 = vmatpush2.msra.mxu0 0.0
    %3792 = vmatprep.subr.mxu0 0.0
    %3793 = vmatpush2.msra.mxu0 0.0
    %3794 = vmatprep.subr.mxu0 0.0
    %3795 = vmatpush2.msra.mxu0 0.0
    %3796 = vmatprep.subr.mxu0 0.0
    %3797 = vmatpush2.msra.mxu0 0.0
    %3798 = vmatprep.subr.mxu0 0.0
    %3799 = vmatpush2.msra.mxu0 0.0
    %3800 = vmatprep.subr.mxu0 0.0
    %3801 = vmatpush2.msra.mxu0 0.0
    %3802 = vmatprep.subr.mxu0 0.0
    %3803 = vmatpush2.msra.mxu0 0.0
    %3804 = vmatprep.subr.mxu0 0.0
    %3805 = vmatpush2.msra.mxu0 0.0
    %3806 = vmatprep.subr.mxu0 0.0
    %3807 = vmatpush2.msra.mxu0 0.0
    %3808 = vmatprep.subr.mxu0 0.0
    %3809 = vmatpush2.msra.mxu0 0.0
    %3810 = vmatprep.subr.mxu0 0.0
    %3811 = vmatpush2.msra.mxu0 0.0
    %3812 = vmatprep.subr.mxu0 0.0
    %3813 = vmatpush2.msra.mxu0 0.0
    %3814 = vmatprep.mubr.f32.mxu0 0.0
    %3815 = vmatmul.mubr.f32.gmra.mxu0 %v3745
    %v3816 = vpop.f32.mrf.mxu0
    %v3817 = vadd.f32 %v3743, %v3816
    %v3818 = vpop.f32.mrf.mxu0
    %3819 = vmatprep.mubr.f32.mxu0 0.0
    %3820 = vmatmul.mubr.f32.gmra.mxu0 %v3748
    %v3821 = vpop.f32.mrf.mxu0
    %v3822 = vadd.f32 %v3743, %v3821
    %v3823 = vpop.f32.mrf.mxu0
    %3824 = vdwg.mxu0
    %v3825 = vmax.f32 %v3817, 0.0
    %v3826 = vmax.f32 %v3822, 0.0
    %v3828 = vsel %vm2027, %v3825, 0
    %v3831 = vsel %vm2027, %v3826, 0
    %3833 = vmatprep.subr.mxu0 0.0
    %3834 = vmatpush1.msra.mxu0 0.0
    %3835 = vmatprep.subr.mxu0 0.0
    %3836 = vmatpush1.msra.mxu0 0.0
    %3837 = vmatprep.subr.mxu0 0.0
    %3838 = vmatpush1.msra.mxu0 0.0
    %3839 = vmatprep.subr.mxu0 0.0
    %3840 = vmatpush1.msra.mxu0 0.0
    %3841 = vmatprep.subr.mxu0 0.0
    %3842 = vmatpush1.msra.mxu0 0.0
    %3843 = vmatprep.subr.mxu0 0.0
    %3844 = vmatpush1.msra.mxu0 0.0
    %3845 = vmatprep.subr.mxu0 0.0
    %3846 = vmatpush1.msra.mxu0 0.0
    %3847 = vmatprep.subr.mxu0 0.0
    %3848 = vmatpush1.msra.mxu0 0.0
    %3849 = vmatprep.subr.mxu0 0.0
    %3850 = vmatpush1.msra.mxu0 %v2135
    %3851 = vmatprep.subr.mxu0 0.0
    %3852 = vmatpush1.msra.mxu0 %v2134
    %3853 = vmatprep.subr.mxu0 0.0
    %3854 = vmatpush1.msra.mxu0 %v2133
    %3855 = vmatprep.subr.mxu0 0.0
    %3856 = vmatpush1.msra.mxu0 %v2132
    %3857 = vmatprep.subr.mxu0 0.0
    %3858 = vmatpush1.msra.mxu0 %v2131
    %3859 = vmatprep.subr.mxu0 0.0
    %3860 = vmatpush1.msra.mxu0 %v2130
    %3861 = vmatprep.subr.mxu0 0.0
    %3862 = vmatpush1.msra.mxu0 %v2129
    %3863 = vmatprep.subr.mxu0 0.0
    %3864 = vmatpush1.msra.mxu0 %v2128
    %3865 = vmatprep.subr.mxu0 0.0
    %3866 = vmatpush2.msra.mxu0 0.0
    %3867 = vmatprep.subr.mxu0 0.0
    %3868 = vmatpush2.msra.mxu0 0.0
    %3869 = vmatprep.subr.mxu0 0.0
    %3870 = vmatpush2.msra.mxu0 0.0
    %3871 = vmatprep.subr.mxu0 0.0
    %3872 = vmatpush2.msra.mxu0 0.0
    %3873 = vmatprep.subr.mxu0 0.0
    %3874 = vmatpush2.msra.mxu0 0.0
    %3875 = vmatprep.subr.mxu0 0.0
    %3876 = vmatpush2.msra.mxu0 0.0
    %3877 = vmatprep.subr.mxu0 0.0
    %3878 = vmatpush2.msra.mxu0 0.0
    %3879 = vmatprep.subr.mxu0 0.0
    %3880 = vmatpush2.msra.mxu0 0.0
    %3881 = vmatprep.subr.mxu0 0.0
    %3882 = vmatpush2.msra.mxu0 0.0
    %3883 = vmatprep.subr.mxu0 0.0
    %3884 = vmatpush2.msra.mxu0 0.0
    %3885 = vmatprep.subr.mxu0 0.0
    %3886 = vmatpush2.msra.mxu0 0.0
    %3887 = vmatprep.subr.mxu0 0.0
    %3888 = vmatpush2.msra.mxu0 0.0
    %3889 = vmatprep.subr.mxu0 0.0
    %3890 = vmatpush2.msra.mxu0 0.0
    %3891 = vmatprep.subr.mxu0 0.0
    %3892 = vmatpush2.msra.mxu0 0.0
    %3893 = vmatprep.subr.mxu0 0.0
    %3894 = vmatpush2.msra.mxu0 0.0
    %3895 = vmatprep.subr.mxu0 0.0
    %3896 = vmatpush2.msra.mxu0 0.0
    %3897 = vmatprep.mubr.f32.mxu0 0.0
    %3898 = vmatmul.mubr.f32.gmra.mxu0 %v3828
    %v3899 = vpop.f32.mrf.mxu0
    %v3900 = vadd.f32 0.0, %v3899
    %v3901 = vpop.f32.mrf.mxu0
    %3902 = vmatprep.mubr.f32.mxu0 0.0
    %3903 = vmatmul.mubr.f32.gmra.mxu0 %v3831
    %v3904 = vpop.f32.mrf.mxu0
    %v3905 = vadd.f32 0.0, %v3904
    %v3906 = vpop.f32.mrf.mxu0
    %3907 = vdwg.mxu0
    %v3908 = vadd.f32 %v3676, %v3900
    %v3909 = vadd.f32 %v3677, %v3905
    %v3910 = vlaneseq
    %v3911 = vshrl.u32 %v3910, 7
    %v3912 = vsub.s32 7, %v3911
    %v3913 = vrot.slane %v2137, %v3912
    %v3914 = vadd.f32 %v3908, %v3913
    %v3915 = vadd.f32 %v3909, %v3913
    %v3916 = vld [vmem:[%s8] sm:$0x1]
    %v3917 = vld [vmem:[%s8 + $0x1] sm:$0x1]
    %v3918 = vsel %vm110, %v3914, 0.0
    %3919 = vadd.xlane.f32.xlu0 %v3918
    %v3920 = vpop.xlane.xlu0 %3919
    %v3921 = vsel %vm110, %v3915, 0.0
    %3922 = vadd.xlane.f32.xlu0 %v3921
    %v3923 = vpop.xlane.xlu0 %3922
    %v3924 = vmul.f32 %v3920, 0.03125
    %v3925 = vmul.f32 %v3923, 0.03125
    %v3926 = vmul.f32 %v3914, %v3914
    %v3927 = vmul.f32 %v3915, %v3915
    %v3928 = vsel %vm110, %v3926, 0.0
    %3929 = vadd.xlane.f32.xlu0 %v3928
    %v3930 = vpop.xlane.xlu0 %3929
    %v3931 = vsel %vm110, %v3927, 0.0
    %3932 = vadd.xlane.f32.xlu0 %v3931
    %v3933 = vpop.xlane.xlu0 %3932
    %v3934 = vmul.f32 %v3924, 32.0
    %v3935 = vmul.f32 %v3925, 32.0
    %v3936 = vmul.f32 %v3934, %v3924
    %v3937 = vmul.f32 %v3935, %v3925
    %v3938 = vsub.f32 %v3930, %v3936
    %v3939 = vsub.f32 %v3933, %v3937
    %v3940 = vmul.f32 %v3938, 0.032258064
    %v3941 = vmul.f32 %v3939, 0.032258064
    %v3942 = vmax.f32 %v3940, 0.0
    %v3943 = vmax.f32 %v3941, 0.0
    %v3944 = vrsqrt.pop %v3942
    %v3945 = vmul.f32 %v3942, %v3944
    %vm3946 = vcmp.eq.f32.partialorder %v3942, inf
    %v3947 = vsel %vm3946, %v3942, %v3945
    %vm3948 = vcmp.eq.f32.partialorder %v3942, 0.0
    %v3949 = vand.u32 %v3942, 2147483648
    %v3950 = vsel %vm3948, %v3949, %v3947
    %v3951 = vrsqrt.pop %v3943
    %v3952 = vmul.f32 %v3943, %v3951
    %vm3953 = vcmp.eq.f32.partialorder %v3943, inf
    %v3954 = vsel %vm3953, %v3943, %v3952
    %vm3955 = vcmp.eq.f32.partialorder %v3943, 0.0
    %v3956 = vand.u32 %v3943, 2147483648
    %v3957 = vsel %vm3955, %v3956, %v3954
    %v3958 = vadd.f32 %v3950, 1e-06
    %v3959 = vadd.f32 %v3957, 1e-06
    %v3960 = vrcp.pop %v3958
    %v3961 = vmul.f32 1.0, %v3960
    %v3962 = vrcp.pop %v3959
    %v3963 = vmul.f32 1.0, %v3962
    %v3964 = vsub.f32 %v3914, %v3924
    %v3965 = vsub.f32 %v3915, %v3925
    %v3966 = vlaneseq
    %v3967 = vshrl.u32 %v3966, 7
    %v3968 = vsub.s32 0, %v3967
    %v3969 = vrot.slane %v3916, %v3968
    %v3970 = vmul.f32 %v3969, %v3964
    %v3971 = vmul.f32 %v3969, %v3965
    %v3972 = vmul.f32 %v3970, %v3961
    %v3973 = vmul.f32 %v3971, %v3963
    %v3974 = vlaneseq
    %v3975 = vshrl.u32 %v3974, 7
    %v3976 = vsub.s32 0, %v3975
    %v3977 = vrot.slane %v3917, %v3976
    %v3978 = vadd.f32 %v3972, %v3977
    %v3979 = vadd.f32 %v3973, %v3977
    %3980 = vst.msk [vmem:[#allocation10] sm:$0xff] %vm110, %v3978
    %3981 = vst.msk [vmem:[#allocation10 + $0x8] sm:$0xff] %vm110, %v3979
    // Predicated region
    $region54: #{tpu_custom_call.1} parent=1 // pred_check
      _
    $region55: #{tpu_custom_call.1} parent=1 // pred_check_branch
      %3983 = sbr.rel (0) target = $region57
    $region56: #{tpu_custom_call.1} parent=1 // pred_region
      %s3985 = ssub.s32 256, 256
      %3986 = vsyncadd [#allocation4], %s3985
      %s3987 = sshll.u32 [#allocation10], 4
      %s3988 = int_to_ptr.vmem [resolvable:$true] %s3987
      %3993 = dma.vmem_to_hbm [thread:$0]  %s3988, 256, %s9, [#allocation4], 128, 128, 8
    $region57: #{tpu_custom_call.1} parent=1 // pred_fallthru
      _
    // Predicated region
    $region58: #{tpu_custom_call.1} parent=1 // pred_check
      _
    $region59: #{tpu_custom_call.1} parent=1 // pred_check_branch
      %3995 = sbr.rel (0) target = $region61
    $region60: #{tpu_custom_call.1} parent=1 // pred_region
      %3996 = dma.done [#allocation4], 256
    $region61: #{tpu_custom_call.1} parent=1 // pred_fallthru
      _
    %3997 = vsyncpa [#allocation3], 1
    %3998 = vsyncpa [#allocation6], 1
    %3999 = vsyncpa [#allocation9], 1
    %4000 = vsyncpa [#allocation4], 1

</llo_original>
